<compile_context>
chip_gen: v7x
topology: tpu7x:2x2x1
jax: 0.10.0
libtpu: 0.0.40
codegen_flags: <defaults>
</compile_context>

<pallas_src>
import math
import functools

import jax
import jax.numpy as jnp
from jax import lax
from jax.experimental import pallas as pl
from jax.experimental.pallas import tpu as pltpu


def _layernorm(x, gamma, beta, eps=1e-5):
    # PyTorch nn.LayerNorm: biased variance, eps inside sqrt.
    mu = jnp.mean(x, axis=-1, keepdims=True)
    var = jnp.mean((x - mu) ** 2, axis=-1, keepdims=True)
    return (x - mu) * lax.rsqrt(var + eps) * gamma + beta


def _encoder_layer_kernel(
    xq_ref, xkv_ref, mask_ref,
    wq_ref, wkv_ref, wo_ref, bo_ref,
    g1_ref, be1_ref,
    w1_ref, b1_ref, w2_ref, b2_ref,
    g2_ref, be2_ref,
    out_ref,
    *, num_heads: int, k_tile: int, ff_tile: int, compute_dtype, approx_recip: bool,
):
    tq, D = xq_ref.shape            # query-row tile for this grid step
    L = xkv_ref.shape[0]            # full sequence (keys/values)
    H = num_heads
    hd = D // H
    d_ff = w1_ref.shape[1]
    n_k = L // k_tile
    n_f = d_ff // ff_tile
    cdt = compute_dtype

    x_q = xq_ref[...].astype(jnp.float32)       # (tq, D), also the residual
    xq_c = x_q.astype(cdt)

    # --- Q projection (1/sqrt(hd) softmax scale is folded into wq in prepare_params) ---
    q = jnp.dot(xq_c, wq_ref[...], preferred_element_type=jnp.float32)   # (tq, D) f32
    q_h = jnp.swapaxes(q.reshape(tq, H, hd), 0, 1).astype(cdt)           # (H, tq, hd)

    # --- Flash-style attention over key chunks (online softmax; no (H,L,L) tensor) ---
    def kv_step(kt, carry):
        m, l, acc = carry
        if isinstance(kt, int):                       # single-chunk / unrolled: static slices
            ks = kt * k_tile
        else:
            ks = pl.multiple_of(kt * k_tile, k_tile)
        xk = xkv_ref[pl.ds(ks, k_tile), :].astype(cdt)                       # (tk, D)
        kv = jnp.dot(xk, wkv_ref[...], preferred_element_type=jnp.float32)   # (tk, 2D) f32
        k_h = jnp.swapaxes(kv[:, :D].reshape(k_tile, H, hd), 0, 1).astype(cdt)
        v_h = jnp.swapaxes(kv[:, D:].reshape(k_tile, H, hd), 0, 1).astype(cdt)

        # Key-padding mask -> additive bias shared by all heads / query rows
        # (equivalent to masked_fill(-10000): exp underflows to 0 either way).
        mk = mask_ref[:, pl.ds(ks, k_tile)].astype(jnp.float32)              # (1, tk)
        bias = jnp.where(mk == 0.0, -10000.0, 0.0)

        s = jnp.einsum("hqd,hkd->hqk", q_h, k_h,
                       preferred_element_type=jnp.float32) + bias            # (H, tq, tk) f32
        m_new = jnp.maximum(m, jnp.max(s, axis=-1, keepdims=True))
        alpha = jnp.exp(m - m_new)
        p = jnp.exp(s - m_new)
        l_new = alpha * l + jnp.sum(p, axis=-1, keepdims=True)
        acc_new = alpha * acc + jnp.einsum("hqk,hkd->hqd", p.astype(cdt), v_h,
                                           preferred_element_type=jnp.float32)
        return m_new, l_new, acc_new

    init = (jnp.full((H, tq, 1), -jnp.inf, jnp.float32),
            jnp.zeros((H, tq, 1), jnp.float32),
            jnp.zeros((H, tq, hd), jnp.float32))
    if n_k == 1:
        _, l, acc = kv_step(0, init)
    else:
        _, l, acc = lax.fori_loop(0, n_k, kv_step, init)

    # TODO(synk): attention-weight / residual dropout (train mode) would need pltpu.prng_*;
    # identity in eval mode, matching the PyTorch module run in eval().
    o_h = acc * pl.reciprocal(l, approx=approx_recip)                        # (H, tq, hd) f32
    attn = jnp.swapaxes(o_h, 0, 1).reshape(tq, D)                            # (tq, D)
    attn = jnp.dot(attn.astype(cdt), wo_ref[...],
                   preferred_element_type=jnp.float32) + bo_ref[...]

    # --- Residual + LayerNorm 1 (f32 elementwise) ---
    x1 = _layernorm(x_q + attn, g1_ref[...], be1_ref[...])                   # (tq, D) f32
    x1_c = x1.astype(cdt)

    # --- FFN tiled over d_ff: never materializes the full (tq, d_ff) activation ---
    def ff_step(c, acc_ffn):
        if isinstance(c, int):
            fs = c * ff_tile
        else:
            fs = pl.multiple_of(c * ff_tile, ff_tile)
        h = jnp.dot(x1_c, w1_ref[:, pl.ds(fs, ff_tile)],
                    preferred_element_type=jnp.float32) + b1_ref[:, pl.ds(fs, ff_tile)]
        h = jnp.maximum(h, 0.0)
        return acc_ffn + jnp.dot(h.astype(cdt), w2_ref[pl.ds(fs, ff_tile), :],
                                 preferred_element_type=jnp.float32)

    if n_f == 1:
        ffn = ff_step(0, jnp.zeros((tq, D), jnp.float32))
    else:
        ffn = lax.fori_loop(0, n_f, ff_step, jnp.zeros((tq, D), jnp.float32))
    ffn = ffn + b2_ref[...]

    # --- Residual + LayerNorm 2 ---
    x2 = _layernorm(x1 + ffn, g2_ref[...], be2_ref[...])
    out_ref[...] = x2.astype(out_ref.dtype)


def prepare_params(params, *, num_heads, compute_dtype=jnp.bfloat16):
    """One-time weight prep (hoisted out of the per-call path): fold the 1/sqrt(hd) softmax
    scale into wq, fuse K/V projection weights, cast matmul weights to the MXU dtype."""
    D = params["wq"].shape[0]
    hd = D // num_heads
    scale = 1.0 / math.sqrt(hd)
    f32 = jnp.float32
    return dict(
        wq=(params["wq"] * scale).astype(compute_dtype),
        wkv=jnp.concatenate([params["wk"], params["wv"]], axis=1).astype(compute_dtype),
        wo=params["wo"].astype(compute_dtype),
        bo=params["bo"].astype(f32),
        gamma1=params["gamma1"].astype(f32), beta1=params["beta1"].astype(f32),
        w1=params["w1"].astype(compute_dtype), b1=params["b1"].astype(f32),
        w2=params["w2"].astype(compute_dtype), b2=params["b2"].astype(f32),
        gamma2=params["gamma2"].astype(f32), beta2=params["beta2"].astype(f32),
    )


def _pick_tile(total, preferred, align):
    """Largest tile <= preferred that divides `total` and is a multiple of `align`
    (single tile == total when total <= preferred)."""
    if total <= preferred:
        return total
    t = (preferred // align) * align
    while t > 0 and total % t != 0:
        t -= align
    if t <= 0:
        raise ValueError(f"cannot tile extent {total} with alignment {align}")
    return t


def _pick_vmem_limit():
    """Per-chip VMEM ceiling: ~cap-16MiB (≈48 MiB on v7x, ≈112 MiB on v5e/v6e); compiler
    default (None) if the hardware query is unavailable."""
    try:
        cap = int(pltpu.get_tpu_info().vmem_capacity_bytes)
        return int(max(32 << 20, min(cap - (16 << 20), 112 << 20)))
    except Exception:
        return None


def encoder_layer(x, src_mask, prep, *, num_heads, compute_dtype=jnp.bfloat16,
                  out_dtype=None, q_tile=256, k_tile=512, ff_tile=512):
    """x: (B, L, D) f32; src_mask: (B, 1, L) (1 visible, 0 masked); prep from prepare_params()."""
    B, L, D = x.shape
    d_ff = prep["w1"].shape[1]
    # Pass out_dtype=jnp.bfloat16 to halve output writeback if the next layer accepts it.
    out_dtype = x.dtype if out_dtype is None else out_dtype

    tq = _pick_tile(L, q_tile, 8)        # query-row tile (grid axis, "parallel")
    tk = _pick_tile(L, k_tile, 128)      # key chunk (in-kernel flash loop)
    cf = _pick_tile(d_ff, ff_tile, 128)  # d_ff chunk (in-kernel FFN loop)

    approx = jnp.dtype(compute_dtype) == jnp.dtype(jnp.bfloat16)
    kernel = functools.partial(
        _encoder_layer_kernel,
        num_heads=num_heads, k_tile=tk, ff_tile=cf,
        compute_dtype=compute_dtype, approx_recip=bool(approx),
    )

    def call(single_buffer_weights):
        def wspec(shape):
            idx = lambda b, qi: (0,) * len(shape)
            if single_buffer_weights:
                # Constant-index resident weights: single-buffer (halves weight VMEM).
                return pl.BlockSpec(shape, idx, pipeline_mode=pl.Buffered(1))
            return pl.BlockSpec(shape, idx)

        in_specs = [
            pl.BlockSpec((pl.Squeezed(), tq, D), lambda b, qi: (b, qi, 0)),  # x: query rows
            pl.BlockSpec((pl.Squeezed(), L, D), lambda b, qi: (b, 0, 0)),    # x: full seq (K/V)
            pl.BlockSpec((pl.Squeezed(), 1, L), lambda b, qi: (b, 0, 0)),    # key-padding mask
            wspec((D, D)),        # wq (scale folded in)
            wspec((D, 2 * D)),    # wkv (fused K/V)
            wspec((D, D)),        # wo
            wspec((1, D)),        # bo
            wspec((1, D)),        # gamma1
            wspec((1, D)),        # beta1
            wspec((D, d_ff)),     # w1
            wspec((1, d_ff)),     # b1
            wspec((d_ff, D)),     # w2
            wspec((1, D)),        # b2
            wspec((1, D)),        # gamma2
            wspec((1, D)),        # beta2
        ]
        out_spec = pl.BlockSpec((pl.Squeezed(), tq, D), lambda b, qi: (b, qi, 0))

        return pl.pallas_call(
            kernel,
            out_shape=jax.ShapeDtypeStruct((B, L, D), out_dtype),
            grid_spec=pltpu.PrefetchScalarGridSpec(
                num_scalar_prefetch=0,
                grid=(B, L // tq),
                in_specs=in_specs,
                out_specs=out_spec,
            ),
            compiler_params=pltpu.CompilerParams(
                dimension_semantics=("parallel", "parallel"),   # batch x row tiles -> megacore
                vmem_limit_bytes=_pick_vmem_limit(),
            ),
        )(
            x, x, src_mask,
            prep["wq"], prep["wkv"], prep["wo"], prep["bo"],
            prep["gamma1"], prep["beta1"],
            prep["w1"], prep["b1"], prep["w2"], prep["b2"],
            prep["gamma2"], prep["beta2"],
        )

    try:
        return call(True)
    except Exception:
        # pl.Buffered(1) unsupported on this JAX version -> fall back to default buffering.
        return call(False)


def encoder_layer_ref(x, src_mask, params, *, num_heads):
    """Pure-JAX f32 reference (eval mode), mirroring the PyTorch module."""
    B, L, D = x.shape
    hd = D // num_heads
    q = (x @ params["wq"]).reshape(B, L, num_heads, hd).transpose(0, 2, 1, 3)
    k = (x @ params["wk"]).reshape(B, L, num_heads, hd).transpose(0, 2, 1, 3)
    v = (x @ params["wv"]).reshape(B, L, num_heads, hd).transpose(0, 2, 1, 3)
    s = jnp.einsum("bhqd,bhkd->bhqk", q, k) / math.sqrt(hd)
    m = src_mask[:, None, :, :]  # (B,1,1,L)
    s = jnp.where(m == 0.0, -10000.0, s)
    p = jax.nn.softmax(s, axis=-1)
    a = jnp.einsum("bhqk,bhkd->bhqd", p, v).transpose(0, 2, 1, 3).reshape(B, L, D)
    a = a @ params["wo"] + params["bo"]

    def ln(y, g, b, eps=1e-5):
        mu = jnp.mean(y, axis=-1, keepdims=True)
        var = jnp.mean((y - mu) ** 2, axis=-1, keepdims=True)
        return (y - mu) / jnp.sqrt(var + eps) * g + b

    x1 = ln(x + a, params["gamma1"], params["beta1"])
    h = jnp.maximum(x1 @ params["w1"] + params["b1"], 0.0)
    f = h @ params["w2"] + params["b2"]
    return ln(x1 + f, params["gamma2"], params["beta2"])


if __name__ == "__main__":
    B, L, D, H, DFF = 2, 8, 32, 4, 64

    key = jax.random.PRNGKey(0)
    ks = jax.random.split(key, 10)

    def init(k, shape, fan_in):
        bound = 1.0 / math.sqrt(fan_in)
        return jax.random.uniform(k, shape, jnp.float32, -bound, bound)

    params = {
        # Linear weights stored (in, out) == PyTorch weight.T
        "wq": init(ks[0], (D, D), D),
        "wk": init(ks[1], (D, D), D),
        "wv": init(ks[2], (D, D), D),
        "wo": init(ks[3], (D, D), D),
        "bo": init(ks[4], (1, D), D),
        "w1": init(ks[5], (D, DFF), D),
        "b1": init(ks[6], (1, DFF), D),
        "w2": init(ks[7], (DFF, D), DFF),
        "b2": init(ks[8], (1, D), DFF),
        "gamma1": jnp.ones((1, D), jnp.float32),
        "beta1": jnp.zeros((1, D), jnp.float32),
        "gamma2": jnp.ones((1, D), jnp.float32),
        "beta2": jnp.zeros((1, D), jnp.float32),
    }

    x = jax.random.normal(ks[9], (B, L, D), jnp.float32)
    # Padding mask: last two positions of batch element 1 are masked out.
    mask = jnp.ones((B, 1, L), jnp.float32)
    mask = mask.at[1, 0, L - 2:].set(0.0)

    ref = encoder_layer_ref(x, mask, params, num_heads=H)

    # f32 matmul path.
    prep_f32 = prepare_params(params, num_heads=H, compute_dtype=jnp.float32)
    out_f32 = jax.block_until_ready(
        encoder_layer(x, mask, prep_f32, num_heads=H, compute_dtype=jnp.float32))
    assert out_f32.shape == (B, L, D)
    err_f32 = float(jnp.max(jnp.abs(out_f32 - ref)))
    assert err_f32 < 2e-2, f"f32 path mismatch vs reference (max abs err {err_f32})"

    # bf16 matmul path (MXU-native rate): bf16-appropriate tolerance.
    prep_bf16 = prepare_params(params, num_heads=H, compute_dtype=jnp.bfloat16)
    out_bf16 = jax.block_until_ready(
        encoder_layer(x, mask, prep_bf16, num_heads=H, compute_dtype=jnp.bfloat16))
    assert out_bf16.shape == (B, L, D)
    err_bf16 = float(jnp.max(jnp.abs(out_bf16.astype(jnp.float32) - ref)))
    assert err_bf16 < 1e-1, f"bf16 path mismatch vs reference (max abs err {err_bf16})"

    print("KERNEL_OK")
</pallas_src>

<mosaic_0001>
module attributes {stable_mosaic.version = 11 : i64} {
  func.func @_encoder_layer_kernel(%arg0: i32, %arg1: i32, %arg2: memref<1x8x32xf32, #tpu.memory_space<vmem>>, %arg3: memref<1x8x32xf32, #tpu.memory_space<vmem>>, %arg4: memref<1x1x8xf32, #tpu.memory_space<vmem>>, %arg5: memref<32x32xf32, #tpu.memory_space<vmem>>, %arg6: memref<32x64xf32, #tpu.memory_space<vmem>>, %arg7: memref<32x32xf32, #tpu.memory_space<vmem>>, %arg8: memref<1x32xf32, #tpu.memory_space<vmem>>, %arg9: memref<1x32xf32, #tpu.memory_space<vmem>>, %arg10: memref<1x32xf32, #tpu.memory_space<vmem>>, %arg11: memref<32x64xf32, #tpu.memory_space<vmem>>, %arg12: memref<1x64xf32, #tpu.memory_space<vmem>>, %arg13: memref<64x32xf32, #tpu.memory_space<vmem>>, %arg14: memref<1x32xf32, #tpu.memory_space<vmem>>, %arg15: memref<1x32xf32, #tpu.memory_space<vmem>>, %arg16: memref<1x32xf32, #tpu.memory_space<vmem>>, %arg17: memref<1x8x32xf32, #tpu.memory_space<vmem>>) attributes {dimension_semantics = [#tpu.dimension_semantics<parallel>, #tpu.dimension_semantics<parallel>], iteration_bounds = array<i64: 2, 1>, scalar_prefetch = 0 : i64, scratch_operands = 0 : i64, tpu.core_type = #tpu.core_type<tc>, window_params = [{transform_indices = @transform_0, window_bounds = array<i64: 1, 8, 32>}, {transform_indices = @transform_1, window_bounds = array<i64: 1, 8, 32>}, {transform_indices = @transform_2, window_bounds = array<i64: 1, 1, 8>}, {pipeline_mode = #tpu.pipeline_mode<synchronous>, transform_indices = @transform_3, window_bounds = array<i64: 32, 32>}, {pipeline_mode = #tpu.pipeline_mode<synchronous>, transform_indices = @transform_4, window_bounds = array<i64: 32, 64>}, {pipeline_mode = #tpu.pipeline_mode<synchronous>, transform_indices = @transform_5, window_bounds = array<i64: 32, 32>}, {pipeline_mode = #tpu.pipeline_mode<synchronous>, transform_indices = @transform_6, window_bounds = array<i64: 1, 32>}, {pipeline_mode = #tpu.pipeline_mode<synchronous>, transform_indices = @transform_7, window_bounds = array<i64: 1, 32>}, {pipeline_mode = #tpu.pipeline_mode<synchronous>, transform_indices = @transform_8, window_bounds = array<i64: 1, 32>}, {pipeline_mode = #tpu.pipeline_mode<synchronous>, transform_indices = @transform_9, window_bounds = array<i64: 32, 64>}, {pipeline_mode = #tpu.pipeline_mode<synchronous>, transform_indices = @transform_10, window_bounds = array<i64: 1, 64>}, {pipeline_mode = #tpu.pipeline_mode<synchronous>, transform_indices = @transform_11, window_bounds = array<i64: 64, 32>}, {pipeline_mode = #tpu.pipeline_mode<synchronous>, transform_indices = @transform_12, window_bounds = array<i64: 1, 32>}, {pipeline_mode = #tpu.pipeline_mode<synchronous>, transform_indices = @transform_13, window_bounds = array<i64: 1, 32>}, {pipeline_mode = #tpu.pipeline_mode<synchronous>, transform_indices = @transform_14, window_bounds = array<i64: 1, 32>}, {transform_indices = @transform_15, window_bounds = array<i64: 1, 8, 32>}]} {
    %c0 = arith.constant 0 : index
    %c0_0 = arith.constant 0 : index
    %c0_1 = arith.constant 0 : index
    %0 = vector.load %arg2[%c0, %c0_0, %c0_1] : memref<1x8x32xf32, #tpu.memory_space<vmem>>, vector<1x8x32xf32>
    %1 = vector.shape_cast %0 : vector<1x8x32xf32> to vector<8x32xf32>
    %c0_2 = arith.constant 0 : index
    %c0_3 = arith.constant 0 : index
    %2 = vector.load %arg5[%c0_2, %c0_3] : memref<32x32xf32, #tpu.memory_space<vmem>>, vector<32x32xf32>
    %cst = arith.constant dense<0.000000e+00> : vector<8x32xf32>
    %3 = tpu.matmul %1, %2, %cst {dimension_numbers = #tpu.dot_dimension_numbers<[1], [0], [0], [1], [0, 0, 1, 1], [], []>} : vector<8x32xf32>, vector<32x32xf32>, vector<8x32xf32> -> vector<8x32xf32>
    %4 = vector.shape_cast %3 : vector<8x32xf32> to vector<8x4x8xf32>
    %5 = tpu.transpose %4, [1, 0, 2] : vector<8x4x8xf32> -> vector<4x8x8xf32>
    %cst_4 = arith.constant 0xFF800000 : f32
    %6 = vector.broadcast %cst_4 : f32 to vector<4x8x1xf32>
    %cst_5 = arith.constant 0.000000e+00 : f32
    %7 = vector.broadcast %cst_5 : f32 to vector<4x8x1xf32>
    %cst_6 = arith.constant 0.000000e+00 : f32
    %8 = vector.broadcast %cst_6 : f32 to vector<4x8x8xf32>
    %c0_7 = arith.constant 0 : index
    %c0_8 = arith.constant 0 : index
    %c0_9 = arith.constant 0 : index
    %9 = vector.load %arg3[%c0_7, %c0_8, %c0_9] : memref<1x8x32xf32, #tpu.memory_space<vmem>>, vector<1x8x32xf32>
    %10 = vector.shape_cast %9 : vector<1x8x32xf32> to vector<8x32xf32>
    %c0_10 = arith.constant 0 : index
    %c0_11 = arith.constant 0 : index
    %11 = vector.load %arg6[%c0_10, %c0_11] : memref<32x64xf32, #tpu.memory_space<vmem>>, vector<32x64xf32>
    %cst_12 = arith.constant dense<0.000000e+00> : vector<8x64xf32>
    %12 = tpu.matmul %10, %11, %cst_12 {dimension_numbers = #tpu.dot_dimension_numbers<[1], [0], [0], [1], [0, 0, 1, 1], [], []>} : vector<8x32xf32>, vector<32x64xf32>, vector<8x64xf32> -> vector<8x64xf32>
    %13 = vector.extract_strided_slice %12 {offsets = [0, 0], sizes = [8, 32], strides = [1, 1]} : vector<8x64xf32> to vector<8x32xf32>
    %14 = vector.shape_cast %13 : vector<8x32xf32> to vector<8x4x8xf32>
    %15 = tpu.transpose %14, [1, 0, 2] : vector<8x4x8xf32> -> vector<4x8x8xf32>
    %16 = vector.extract_strided_slice %12 {offsets = [0, 32], sizes = [8, 32], strides = [1, 1]} : vector<8x64xf32> to vector<8x32xf32>
    %17 = vector.shape_cast %16 : vector<8x32xf32> to vector<8x4x8xf32>
    %18 = tpu.transpose %17, [1, 0, 2] : vector<8x4x8xf32> -> vector<4x8x8xf32>
    %c0_13 = arith.constant 0 : index
    %c0_14 = arith.constant 0 : index
    %c0_15 = arith.constant 0 : index
    %19 = vector.load %arg4[%c0_13, %c0_14, %c0_15] : memref<1x1x8xf32, #tpu.memory_space<vmem>>, vector<1x1x8xf32>
    %20 = vector.shape_cast %19 : vector<1x1x8xf32> to vector<1x8xf32>
    %cst_16 = arith.constant 0.000000e+00 : f32
    %21 = vector.broadcast %cst_16 : f32 to vector<1x8xf32>
    %22 = arith.cmpf oeq, %20, %21 : vector<1x8xf32>
    %cst_17 = arith.constant -1.000000e+04 : f32
    %cst_18 = arith.constant 0.000000e+00 : f32
    %23 = vector.broadcast %cst_17 : f32 to vector<1x8xf32>
    %24 = vector.broadcast %cst_18 : f32 to vector<1x8xf32>
    %25 = arith.select %22, %23, %24 : vector<1x8xi1>, vector<1x8xf32>
    "tpu.trace_start"() <{level = 10 : i32, message = "hqd,hkd->hqk"}> : () -> ()
    %cst_19 = arith.constant dense<0.000000e+00> : vector<4x8x8xf32>
    %26 = tpu.matmul %5, %15, %cst_19 {dimension_numbers = #tpu.dot_dimension_numbers<[2], [2], [1], [1], [0, 0, 0, 1, 1, 1], [0], [0]>} : vector<4x8x8xf32>, vector<4x8x8xf32>, vector<4x8x8xf32> -> vector<4x8x8xf32>
    "tpu.trace_stop"() : () -> ()
    %27 = vector.shape_cast %25 : vector<1x8xf32> to vector<1x1x8xf32>
    %28 = vector.broadcast %27 : vector<1x1x8xf32> to vector<4x8x8xf32>
    %29 = arith.addf %26, %28 : vector<4x8x8xf32>
    %cst_20 = arith.constant dense<0xFF800000> : vector<4x8xf32>
    %30 = vector.multi_reduction <maximumf>, %29, %cst_20 [2] : vector<4x8x8xf32> to vector<4x8xf32>
    %31 = vector.shape_cast %30 : vector<4x8xf32> to vector<4x8x1xf32>
    %32 = arith.maximumf %6, %31 : vector<4x8x1xf32>
    %33 = arith.subf %6, %32 : vector<4x8x1xf32>
    %34 = math.exp %33 : vector<4x8x1xf32>
    %35 = vector.broadcast %32 : vector<4x8x1xf32> to vector<4x8x8xf32>
    %36 = arith.subf %29, %35 : vector<4x8x8xf32>
    %37 = math.exp %36 : vector<4x8x8xf32>
    %38 = arith.mulf %34, %7 : vector<4x8x1xf32>
    %cst_21 = arith.constant dense<0.000000e+00> : vector<4x8xf32>
    %39 = vector.multi_reduction <add>, %37, %cst_21 [2] : vector<4x8x8xf32> to vector<4x8xf32>
    %40 = vector.shape_cast %39 : vector<4x8xf32> to vector<4x8x1xf32>
    %41 = arith.addf %38, %40 : vector<4x8x1xf32>
    %42 = vector.broadcast %34 : vector<4x8x1xf32> to vector<4x8x8xf32>
    %43 = arith.mulf %42, %8 : vector<4x8x8xf32>
    "tpu.trace_start"() <{level = 10 : i32, message = "hqk,hkd->hqd"}> : () -> ()
    %cst_22 = arith.constant dense<0.000000e+00> : vector<4x8x8xf32>
    %44 = tpu.matmul %37, %18, %cst_22 {dimension_numbers = #tpu.dot_dimension_numbers<[2], [1], [1], [2], [0, 0, 0, 1, 1, 2], [0], [0]>} : vector<4x8x8xf32>, vector<4x8x8xf32>, vector<4x8x8xf32> -> vector<4x8x8xf32>
    "tpu.trace_stop"() : () -> ()
    %45 = arith.addf %43, %44 : vector<4x8x8xf32>
    %46 = tpu.reciprocal %41 : vector<4x8x1xf32> -> vector<4x8x1xf32>
    %47 = vector.broadcast %46 : vector<4x8x1xf32> to vector<4x8x8xf32>
    %48 = arith.mulf %45, %47 : vector<4x8x8xf32>
    %49 = tpu.transpose %48, [1, 0, 2] : vector<4x8x8xf32> -> vector<8x4x8xf32>
    %50 = vector.shape_cast %49 : vector<8x4x8xf32> to vector<8x32xf32>
    %c0_23 = arith.constant 0 : index
    %c0_24 = arith.constant 0 : index
    %51 = vector.load %arg7[%c0_23, %c0_24] : memref<32x32xf32, #tpu.memory_space<vmem>>, vector<32x32xf32>
    %cst_25 = arith.constant dense<0.000000e+00> : vector<8x32xf32>
    %52 = tpu.matmul %50, %51, %cst_25 {dimension_numbers = #tpu.dot_dimension_numbers<[1], [0], [0], [1], [0, 0, 1, 1], [], []>} : vector<8x32xf32>, vector<32x32xf32>, vector<8x32xf32> -> vector<8x32xf32>
    %c0_26 = arith.constant 0 : index
    %c0_27 = arith.constant 0 : index
    %53 = vector.load %arg8[%c0_26, %c0_27] : memref<1x32xf32, #tpu.memory_space<vmem>>, vector<1x32xf32>
    %54 = vector.broadcast %53 : vector<1x32xf32> to vector<8x32xf32>
    %55 = arith.addf %52, %54 : vector<8x32xf32>
    %56 = arith.addf %1, %55 : vector<8x32xf32>
    %c0_28 = arith.constant 0 : index
    %c0_29 = arith.constant 0 : index
    %57 = vector.load %arg9[%c0_28, %c0_29] : memref<1x32xf32, #tpu.memory_space<vmem>>, vector<1x32xf32>
    %c0_30 = arith.constant 0 : index
    %c0_31 = arith.constant 0 : index
    %58 = vector.load %arg10[%c0_30, %c0_31] : memref<1x32xf32, #tpu.memory_space<vmem>>, vector<1x32xf32>
    %cst_32 = arith.constant dense<0.000000e+00> : vector<8xf32>
    %59 = vector.multi_reduction <add>, %56, %cst_32 [1] : vector<8x32xf32> to vector<8xf32>
    %60 = vector.shape_cast %59 : vector<8xf32> to vector<8x1xf32>
    %cst_33 = arith.constant 3.200000e+01 : f32
    %61 = vector.broadcast %cst_33 : f32 to vector<8x1xf32>
    %62 = arith.divf %60, %61 : vector<8x1xf32>
    %63 = vector.broadcast %62 : vector<8x1xf32> to vector<8x32xf32>
    %64 = arith.subf %56, %63 : vector<8x32xf32>
    %65 = arith.mulf %64, %64 : vector<8x32xf32>
    %cst_34 = arith.constant dense<0.000000e+00> : vector<8xf32>
    %66 = vector.multi_reduction <add>, %65, %cst_34 [1] : vector<8x32xf32> to vector<8xf32>
    %67 = vector.shape_cast %66 : vector<8xf32> to vector<8x1xf32>
    %cst_35 = arith.constant 3.200000e+01 : f32
    %68 = vector.broadcast %cst_35 : f32 to vector<8x1xf32>
    %69 = arith.divf %67, %68 : vector<8x1xf32>
    %70 = vector.broadcast %62 : vector<8x1xf32> to vector<8x32xf32>
    %71 = arith.subf %56, %70 : vector<8x32xf32>
    %cst_36 = arith.constant 9.99999974E-6 : f32
    %72 = vector.broadcast %cst_36 : f32 to vector<8x1xf32>
    %73 = arith.addf %69, %72 : vector<8x1xf32>
    %74 = math.rsqrt %73 : vector<8x1xf32>
    %75 = vector.broadcast %74 : vector<8x1xf32> to vector<8x32xf32>
    %76 = arith.mulf %71, %75 : vector<8x32xf32>
    %77 = vector.broadcast %57 : vector<1x32xf32> to vector<8x32xf32>
    %78 = arith.mulf %76, %77 : vector<8x32xf32>
    %79 = vector.broadcast %58 : vector<1x32xf32> to vector<8x32xf32>
    %80 = arith.addf %78, %79 : vector<8x32xf32>
    %cst_37 = arith.constant 0.000000e+00 : f32
    %81 = vector.broadcast %cst_37 : f32 to vector<8x32xf32>
    %c0_38 = arith.constant 0 : index
    %c0_39 = arith.constant 0 : index
    %82 = vector.load %arg11[%c0_38, %c0_39] : memref<32x64xf32, #tpu.memory_space<vmem>>, vector<32x64xf32>
    %cst_40 = arith.constant dense<0.000000e+00> : vector<8x64xf32>
    %83 = tpu.matmul %80, %82, %cst_40 {dimension_numbers = #tpu.dot_dimension_numbers<[1], [0], [0], [1], [0, 0, 1, 1], [], []>} : vector<8x32xf32>, vector<32x64xf32>, vector<8x64xf32> -> vector<8x64xf32>
    %c0_41 = arith.constant 0 : index
    %c0_42 = arith.constant 0 : index
    %84 = vector.load %arg12[%c0_41, %c0_42] : memref<1x64xf32, #tpu.memory_space<vmem>>, vector<1x64xf32>
    %85 = vector.broadcast %84 : vector<1x64xf32> to vector<8x64xf32>
    %86 = arith.addf %83, %85 : vector<8x64xf32>
    %cst_43 = arith.constant 0.000000e+00 : f32
    %87 = vector.broadcast %cst_43 : f32 to vector<8x64xf32>
    %88 = arith.maximumf %86, %87 : vector<8x64xf32>
    %c0_44 = arith.constant 0 : index
    %c0_45 = arith.constant 0 : index
    %89 = vector.load %arg13[%c0_44, %c0_45] : memref<64x32xf32, #tpu.memory_space<vmem>>, vector<64x32xf32>
    %cst_46 = arith.constant dense<0.000000e+00> : vector<8x32xf32>
    %90 = tpu.matmul %88, %89, %cst_46 {dimension_numbers = #tpu.dot_dimension_numbers<[1], [0], [0], [1], [0, 0, 1, 1], [], []>} : vector<8x64xf32>, vector<64x32xf32>, vector<8x32xf32> -> vector<8x32xf32>
    %91 = arith.addf %81, %90 : vector<8x32xf32>
    %c0_47 = arith.constant 0 : index
    %c0_48 = arith.constant 0 : index
    %92 = vector.load %arg14[%c0_47, %c0_48] : memref<1x32xf32, #tpu.memory_space<vmem>>, vector<1x32xf32>
    %93 = vector.broadcast %92 : vector<1x32xf32> to vector<8x32xf32>
    %94 = arith.addf %91, %93 : vector<8x32xf32>
    %95 = arith.addf %80, %94 : vector<8x32xf32>
    %c0_49 = arith.constant 0 : index
    %c0_50 = arith.constant 0 : index
    %96 = vector.load %arg15[%c0_49, %c0_50] : memref<1x32xf32, #tpu.memory_space<vmem>>, vector<1x32xf32>
    %c0_51 = arith.constant 0 : index
    %c0_52 = arith.constant 0 : index
    %97 = vector.load %arg16[%c0_51, %c0_52] : memref<1x32xf32, #tpu.memory_space<vmem>>, vector<1x32xf32>
    %cst_53 = arith.constant dense<0.000000e+00> : vector<8xf32>
    %98 = vector.multi_reduction <add>, %95, %cst_53 [1] : vector<8x32xf32> to vector<8xf32>
    %99 = vector.shape_cast %98 : vector<8xf32> to vector<8x1xf32>
    %cst_54 = arith.constant 3.200000e+01 : f32
    %100 = vector.broadcast %cst_54 : f32 to vector<8x1xf32>
    %101 = arith.divf %99, %100 : vector<8x1xf32>
    %102 = vector.broadcast %101 : vector<8x1xf32> to vector<8x32xf32>
    %103 = arith.subf %95, %102 : vector<8x32xf32>
    %104 = arith.mulf %103, %103 : vector<8x32xf32>
    %cst_55 = arith.constant dense<0.000000e+00> : vector<8xf32>
    %105 = vector.multi_reduction <add>, %104, %cst_55 [1] : vector<8x32xf32> to vector<8xf32>
    %106 = vector.shape_cast %105 : vector<8xf32> to vector<8x1xf32>
    %cst_56 = arith.constant 3.200000e+01 : f32
    %107 = vector.broadcast %cst_56 : f32 to vector<8x1xf32>
    %108 = arith.divf %106, %107 : vector<8x1xf32>
    %109 = vector.broadcast %101 : vector<8x1xf32> to vector<8x32xf32>
    %110 = arith.subf %95, %109 : vector<8x32xf32>
    %cst_57 = arith.constant 9.99999974E-6 : f32
    %111 = vector.broadcast %cst_57 : f32 to vector<8x1xf32>
    %112 = arith.addf %108, %111 : vector<8x1xf32>
    %113 = math.rsqrt %112 : vector<8x1xf32>
    %114 = vector.broadcast %113 : vector<8x1xf32> to vector<8x32xf32>
    %115 = arith.mulf %110, %114 : vector<8x32xf32>
    %116 = vector.broadcast %96 : vector<1x32xf32> to vector<8x32xf32>
    %117 = arith.mulf %115, %116 : vector<8x32xf32>
    %118 = vector.broadcast %97 : vector<1x32xf32> to vector<8x32xf32>
    %119 = arith.addf %117, %118 : vector<8x32xf32>
    %c0_58 = arith.constant 0 : index
    %c0_59 = arith.constant 0 : index
    %c0_60 = arith.constant 0 : index
    %120 = vector.load %arg17[%c0_58, %c0_59, %c0_60] : memref<1x8x32xf32, #tpu.memory_space<vmem>>, vector<1x8x32xf32>
    %121 = vector.shape_cast %120 : vector<1x8x32xf32> to vector<8x32xf32>
    %122 = vector.shape_cast %119 : vector<8x32xf32> to vector<1x8x32xf32>
    tpu.vector_store %arg17[%c0_58, %c0_59, %c0_60], %122 {strides = array<i32>} : memref<1x8x32xf32, #tpu.memory_space<vmem>>, vector<1x8x32xf32>,
    return
  }
  func.func @transform_0(%arg0: i32, %arg1: i32) -> (i32, i32, i32) {
    %c0_i32 = arith.constant 0 : i32
    %c0_i32_0 = arith.constant 0 : i32
    return %arg0, %arg1, %c0_i32 : i32, i32, i32
  }
  func.func @transform_1(%arg0: i32, %arg1: i32) -> (i32, i32, i32) {
    %c0_i32 = arith.constant 0 : i32
    %c0_i32_0 = arith.constant 0 : i32
    %c0_i32_1 = arith.constant 0 : i32
    return %arg0, %c0_i32, %c0_i32_0 : i32, i32, i32
  }
  func.func @transform_2(%arg0: i32, %arg1: i32) -> (i32, i32, i32) {
    %c0_i32 = arith.constant 0 : i32
    %c0_i32_0 = arith.constant 0 : i32
    %c0_i32_1 = arith.constant 0 : i32
    return %arg0, %c0_i32, %c0_i32_0 : i32, i32, i32
  }
  func.func @transform_3(%arg0: i32, %arg1: i32) -> (i32, i32) {
    %c0_i32 = arith.constant 0 : i32
    %c0_i32_0 = arith.constant 0 : i32
    %c0_i32_1 = arith.constant 0 : i32
    return %c0_i32, %c0_i32_0 : i32, i32
  }
  func.func @transform_4(%arg0: i32, %arg1: i32) -> (i32, i32) {
    %c0_i32 = arith.constant 0 : i32
    %c0_i32_0 = arith.constant 0 : i32
    %c0_i32_1 = arith.constant 0 : i32
    return %c0_i32, %c0_i32_0 : i32, i32
  }
  func.func @transform_5(%arg0: i32, %arg1: i32) -> (i32, i32) {
    %c0_i32 = arith.constant 0 : i32
    %c0_i32_0 = arith.constant 0 : i32
    %c0_i32_1 = arith.constant 0 : i32
    return %c0_i32, %c0_i32_0 : i32, i32
  }
  func.func @transform_6(%arg0: i32, %arg1: i32) -> (i32, i32) {
    %c0_i32 = arith.constant 0 : i32
    %c0_i32_0 = arith.constant 0 : i32
    %c0_i32_1 = arith.constant 0 : i32
    return %c0_i32, %c0_i32_0 : i32, i32
  }
  func.func @transform_7(%arg0: i32, %arg1: i32) -> (i32, i32) {
    %c0_i32 = arith.constant 0 : i32
    %c0_i32_0 = arith.constant 0 : i32
    %c0_i32_1 = arith.constant 0 : i32
    return %c0_i32, %c0_i32_0 : i32, i32
  }
  func.func @transform_8(%arg0: i32, %arg1: i32) -> (i32, i32) {
    %c0_i32 = arith.constant 0 : i32
    %c0_i32_0 = arith.constant 0 : i32
    %c0_i32_1 = arith.constant 0 : i32
    return %c0_i32, %c0_i32_0 : i32, i32
  }
  func.func @transform_9(%arg0: i32, %arg1: i32) -> (i32, i32) {
    %c0_i32 = arith.constant 0 : i32
    %c0_i32_0 = arith.constant 0 : i32
    %c0_i32_1 = arith.constant 0 : i32
    return %c0_i32, %c0_i32_0 : i32, i32
  }
  func.func @transform_10(%arg0: i32, %arg1: i32) -> (i32, i32) {
    %c0_i32 = arith.constant 0 : i32
    %c0_i32_0 = arith.constant 0 : i32
    %c0_i32_1 = arith.constant 0 : i32
    return %c0_i32, %c0_i32_0 : i32, i32
  }
  func.func @transform_11(%arg0: i32, %arg1: i32) -> (i32, i32) {
    %c0_i32 = arith.constant 0 : i32
    %c0_i32_0 = arith.constant 0 : i32
    %c0_i32_1 = arith.constant 0 : i32
    return %c0_i32, %c0_i32_0 : i32, i32
  }
  func.func @transform_12(%arg0: i32, %arg1: i32) -> (i32, i32) {
    %c0_i32 = arith.constant 0 : i32
    %c0_i32_0 = arith.constant 0 : i32
    %c0_i32_1 = arith.constant 0 : i32
    return %c0_i32, %c0_i32_0 : i32, i32
  }
  func.func @transform_13(%arg0: i32, %arg1: i32) -> (i32, i32) {
    %c0_i32 = arith.constant 0 : i32
    %c0_i32_0 = arith.constant 0 : i32
    %c0_i32_1 = arith.constant 0 : i32
    return %c0_i32, %c0_i32_0 : i32, i32
  }
  func.func @transform_14(%arg0: i32, %arg1: i32) -> (i32, i32) {
    %c0_i32 = arith.constant 0 : i32
    %c0_i32_0 = arith.constant 0 : i32
    %c0_i32_1 = arith.constant 0 : i32
    return %c0_i32, %c0_i32_0 : i32, i32
  }
  func.func @transform_15(%arg0: i32, %arg1: i32) -> (i32, i32, i32) {
    %c0_i32 = arith.constant 0 : i32
    %c0_i32_0 = arith.constant 0 : i32
    return %arg0, %arg1, %c0_i32 : i32, i32, i32
  }
}

module attributes {stable_mosaic.version = 11 : i64} {
  func.func @_encoder_layer_kernel(%arg0: i32, %arg1: i32, %arg2: memref<1x8x32xf32, #tpu.memory_space<vmem>>, %arg3: memref<1x8x32xf32, #tpu.memory_space<vmem>>, %arg4: memref<1x1x8xf32, #tpu.memory_space<vmem>>, %arg5: memref<32x32xf32, #tpu.memory_space<vmem>>, %arg6: memref<32x64xf32, #tpu.memory_space<vmem>>, %arg7: memref<32x32xf32, #tpu.memory_space<vmem>>, %arg8: memref<1x32xf32, #tpu.memory_space<vmem>>, %arg9: memref<1x32xf32, #tpu.memory_space<vmem>>, %arg10: memref<1x32xf32, #tpu.memory_space<vmem>>, %arg11: memref<32x64xf32, #tpu.memory_space<vmem>>, %arg12: memref<1x64xf32, #tpu.memory_space<vmem>>, %arg13: memref<64x32xf32, #tpu.memory_space<vmem>>, %arg14: memref<1x32xf32, #tpu.memory_space<vmem>>, %arg15: memref<1x32xf32, #tpu.memory_space<vmem>>, %arg16: memref<1x32xf32, #tpu.memory_space<vmem>>, %arg17: memref<1x8x32xf32, #tpu.memory_space<vmem>>) attributes {dimension_semantics = [#tpu.dimension_semantics<parallel>, #tpu.dimension_semantics<parallel>], iteration_bounds = array<i64: 2, 1>, scalar_prefetch = 0 : i64, scratch_operands = 0 : i64, tpu.core_type = #tpu.core_type<tc>, window_params = [{transform_indices = @transform_0, window_bounds = array<i64: 1, 8, 32>}, {transform_indices = @transform_1, window_bounds = array<i64: 1, 8, 32>}, {transform_indices = @transform_2, window_bounds = array<i64: 1, 1, 8>}, {pipeline_mode = #tpu.pipeline_mode<synchronous>, transform_indices = @transform_3, window_bounds = array<i64: 32, 32>}, {pipeline_mode = #tpu.pipeline_mode<synchronous>, transform_indices = @transform_4, window_bounds = array<i64: 32, 64>}, {pipeline_mode = #tpu.pipeline_mode<synchronous>, transform_indices = @transform_5, window_bounds = array<i64: 32, 32>}, {pipeline_mode = #tpu.pipeline_mode<synchronous>, transform_indices = @transform_6, window_bounds = array<i64: 1, 32>}, {pipeline_mode = #tpu.pipeline_mode<synchronous>, transform_indices = @transform_7, window_bounds = array<i64: 1, 32>}, {pipeline_mode = #tpu.pipeline_mode<synchronous>, transform_indices = @transform_8, window_bounds = array<i64: 1, 32>}, {pipeline_mode = #tpu.pipeline_mode<synchronous>, transform_indices = @transform_9, window_bounds = array<i64: 32, 64>}, {pipeline_mode = #tpu.pipeline_mode<synchronous>, transform_indices = @transform_10, window_bounds = array<i64: 1, 64>}, {pipeline_mode = #tpu.pipeline_mode<synchronous>, transform_indices = @transform_11, window_bounds = array<i64: 64, 32>}, {pipeline_mode = #tpu.pipeline_mode<synchronous>, transform_indices = @transform_12, window_bounds = array<i64: 1, 32>}, {pipeline_mode = #tpu.pipeline_mode<synchronous>, transform_indices = @transform_13, window_bounds = array<i64: 1, 32>}, {pipeline_mode = #tpu.pipeline_mode<synchronous>, transform_indices = @transform_14, window_bounds = array<i64: 1, 32>}, {transform_indices = @transform_15, window_bounds = array<i64: 1, 8, 32>}]} {
    %c0 = arith.constant 0 : index
    %c0_0 = arith.constant 0 : index
    %c0_1 = arith.constant 0 : index
    %0 = vector.load %arg2[%c0, %c0_0, %c0_1] : memref<1x8x32xf32, #tpu.memory_space<vmem>>, vector<1x8x32xf32>
    %1 = vector.shape_cast %0 : vector<1x8x32xf32> to vector<8x32xf32>
    %c0_2 = arith.constant 0 : index
    %c0_3 = arith.constant 0 : index
    %2 = vector.load %arg5[%c0_2, %c0_3] : memref<32x32xf32, #tpu.memory_space<vmem>>, vector<32x32xf32>
    %cst = arith.constant dense<0.000000e+00> : vector<8x32xf32>
    %3 = tpu.matmul %1, %2, %cst {dimension_numbers = #tpu.dot_dimension_numbers<[1], [0], [0], [1], [0, 0, 1, 1], [], []>} : vector<8x32xf32>, vector<32x32xf32>, vector<8x32xf32> -> vector<8x32xf32>
    %4 = vector.shape_cast %3 : vector<8x32xf32> to vector<8x4x8xf32>
    %5 = tpu.transpose %4, [1, 0, 2] : vector<8x4x8xf32> -> vector<4x8x8xf32>
    %cst_4 = arith.constant 0xFF800000 : f32
    %6 = vector.broadcast %cst_4 : f32 to vector<4x8x1xf32>
    %cst_5 = arith.constant 0.000000e+00 : f32
    %7 = vector.broadcast %cst_5 : f32 to vector<4x8x1xf32>
    %cst_6 = arith.constant 0.000000e+00 : f32
    %8 = vector.broadcast %cst_6 : f32 to vector<4x8x8xf32>
    %c0_7 = arith.constant 0 : index
    %c0_8 = arith.constant 0 : index
    %c0_9 = arith.constant 0 : index
    %9 = vector.load %arg3[%c0_7, %c0_8, %c0_9] : memref<1x8x32xf32, #tpu.memory_space<vmem>>, vector<1x8x32xf32>
    %10 = vector.shape_cast %9 : vector<1x8x32xf32> to vector<8x32xf32>
    %c0_10 = arith.constant 0 : index
    %c0_11 = arith.constant 0 : index
    %11 = vector.load %arg6[%c0_10, %c0_11] : memref<32x64xf32, #tpu.memory_space<vmem>>, vector<32x64xf32>
    %cst_12 = arith.constant dense<0.000000e+00> : vector<8x64xf32>
    %12 = tpu.matmul %10, %11, %cst_12 {dimension_numbers = #tpu.dot_dimension_numbers<[1], [0], [0], [1], [0, 0, 1, 1], [], []>} : vector<8x32xf32>, vector<32x64xf32>, vector<8x64xf32> -> vector<8x64xf32>
    %13 = vector.extract_strided_slice %12 {offsets = [0, 0], sizes = [8, 32], strides = [1, 1]} : vector<8x64xf32> to vector<8x32xf32>
    %14 = vector.shape_cast %13 : vector<8x32xf32> to vector<8x4x8xf32>
    %15 = tpu.transpose %14, [1, 0, 2] : vector<8x4x8xf32> -> vector<4x8x8xf32>
    %16 = vector.extract_strided_slice %12 {offsets = [0, 32], sizes = [8, 32], strides = [1, 1]} : vector<8x64xf32> to vector<8x32xf32>
    %17 = vector.shape_cast %16 : vector<8x32xf32> to vector<8x4x8xf32>
    %18 = tpu.transpose %17, [1, 0, 2] : vector<8x4x8xf32> -> vector<4x8x8xf32>
    %c0_13 = arith.constant 0 : index
    %c0_14 = arith.constant 0 : index
    %c0_15 = arith.constant 0 : index
    %19 = vector.load %arg4[%c0_13, %c0_14, %c0_15] : memref<1x1x8xf32, #tpu.memory_space<vmem>>, vector<1x1x8xf32>
    %20 = vector.shape_cast %19 : vector<1x1x8xf32> to vector<1x8xf32>
    %cst_16 = arith.constant 0.000000e+00 : f32
    %21 = vector.broadcast %cst_16 : f32 to vector<1x8xf32>
    %22 = arith.cmpf oeq, %20, %21 : vector<1x8xf32>
    %cst_17 = arith.constant -1.000000e+04 : f32
    %cst_18 = arith.constant 0.000000e+00 : f32
    %23 = vector.broadcast %cst_17 : f32 to vector<1x8xf32>
    %24 = vector.broadcast %cst_18 : f32 to vector<1x8xf32>
    %25 = arith.select %22, %23, %24 : vector<1x8xi1>, vector<1x8xf32>
    "tpu.trace_start"() <{level = 10 : i32, message = "hqd,hkd->hqk"}> : () -> ()
    %cst_19 = arith.constant dense<0.000000e+00> : vector<4x8x8xf32>
    %26 = tpu.matmul %5, %15, %cst_19 {dimension_numbers = #tpu.dot_dimension_numbers<[2], [2], [1], [1], [0, 0, 0, 1, 1, 1], [0], [0]>} : vector<4x8x8xf32>, vector<4x8x8xf32>, vector<4x8x8xf32> -> vector<4x8x8xf32>
    "tpu.trace_stop"() : () -> ()
    %27 = vector.shape_cast %25 : vector<1x8xf32> to vector<1x1x8xf32>
    %28 = vector.broadcast %27 : vector<1x1x8xf32> to vector<4x8x8xf32>
    %29 = arith.addf %26, %28 : vector<4x8x8xf32>
    %cst_20 = arith.constant dense<0xFF800000> : vector<4x8xf32>
    %30 = vector.multi_reduction <maximumf>, %29, %cst_20 [2] : vector<4x8x8xf32> to vector<4x8xf32>
    %31 = vector.shape_cast %30 : vector<4x8xf32> to vector<4x8x1xf32>
    %32 = arith.maximumf %6, %31 : vector<4x8x1xf32>
    %33 = arith.subf %6, %32 : vector<4x8x1xf32>
    %34 = math.exp %33 : vector<4x8x1xf32>
    %35 = vector.broadcast %32 : vector<4x8x1xf32> to vector<4x8x8xf32>
    %36 = arith.subf %29, %35 : vector<4x8x8xf32>
    %37 = math.exp %36 : vector<4x8x8xf32>
    %38 = arith.mulf %34, %7 : vector<4x8x1xf32>
    %cst_21 = arith.constant dense<0.000000e+00> : vector<4x8xf32>
    %39 = vector.multi_reduction <add>, %37, %cst_21 [2] : vector<4x8x8xf32> to vector<4x8xf32>
    %40 = vector.shape_cast %39 : vector<4x8xf32> to vector<4x8x1xf32>
    %41 = arith.addf %38, %40 : vector<4x8x1xf32>
    %42 = vector.broadcast %34 : vector<4x8x1xf32> to vector<4x8x8xf32>
    %43 = arith.mulf %42, %8 : vector<4x8x8xf32>
    "tpu.trace_start"() <{level = 10 : i32, message = "hqk,hkd->hqd"}> : () -> ()
    %cst_22 = arith.constant dense<0.000000e+00> : vector<4x8x8xf32>
    %44 = tpu.matmul %37, %18, %cst_22 {dimension_numbers = #tpu.dot_dimension_numbers<[2], [1], [1], [2], [0, 0, 0, 1, 1, 2], [0], [0]>} : vector<4x8x8xf32>, vector<4x8x8xf32>, vector<4x8x8xf32> -> vector<4x8x8xf32>
    "tpu.trace_stop"() : () -> ()
    %45 = arith.addf %43, %44 : vector<4x8x8xf32>
    %46 = tpu.reciprocal %41 : vector<4x8x1xf32> -> vector<4x8x1xf32>
    %47 = vector.broadcast %46 : vector<4x8x1xf32> to vector<4x8x8xf32>
    %48 = arith.mulf %45, %47 : vector<4x8x8xf32>
    %49 = tpu.transpose %48, [1, 0, 2] : vector<4x8x8xf32> -> vector<8x4x8xf32>
    %50 = vector.shape_cast %49 : vector<8x4x8xf32> to vector<8x32xf32>
    %c0_23 = arith.constant 0 : index
    %c0_24 = arith.constant 0 : index
    %51 = vector.load %arg7[%c0_23, %c0_24] : memref<32x32xf32, #tpu.memory_space<vmem>>, vector<32x32xf32>
    %cst_25 = arith.constant dense<0.000000e+00> : vector<8x32xf32>
    %52 = tpu.matmul %50, %51, %cst_25 {dimension_numbers = #tpu.dot_dimension_numbers<[1], [0], [0], [1], [0, 0, 1, 1], [], []>} : vector<8x32xf32>, vector<32x32xf32>, vector<8x32xf32> -> vector<8x32xf32>
    %c0_26 = arith.constant 0 : index
    %c0_27 = arith.constant 0 : index
    %53 = vector.load %arg8[%c0_26, %c0_27] : memref<1x32xf32, #tpu.memory_space<vmem>>, vector<1x32xf32>
    %54 = vector.broadcast %53 : vector<1x32xf32> to vector<8x32xf32>
    %55 = arith.addf %52, %54 : vector<8x32xf32>
    %56 = arith.addf %1, %55 : vector<8x32xf32>
    %c0_28 = arith.constant 0 : index
    %c0_29 = arith.constant 0 : index
    %57 = vector.load %arg9[%c0_28, %c0_29] : memref<1x32xf32, #tpu.memory_space<vmem>>, vector<1x32xf32>
    %c0_30 = arith.constant 0 : index
    %c0_31 = arith.constant 0 : index
    %58 = vector.load %arg10[%c0_30, %c0_31] : memref<1x32xf32, #tpu.memory_space<vmem>>, vector<1x32xf32>
    %cst_32 = arith.constant dense<0.000000e+00> : vector<8xf32>
    %59 = vector.multi_reduction <add>, %56, %cst_32 [1] : vector<8x32xf32> to vector<8xf32>
    %60 = vector.shape_cast %59 : vector<8xf32> to vector<8x1xf32>
    %cst_33 = arith.constant 3.200000e+01 : f32
    %61 = vector.broadcast %cst_33 : f32 to vector<8x1xf32>
    %62 = arith.divf %60, %61 : vector<8x1xf32>
    %63 = vector.broadcast %62 : vector<8x1xf32> to vector<8x32xf32>
    %64 = arith.subf %56, %63 : vector<8x32xf32>
    %65 = arith.mulf %64, %64 : vector<8x32xf32>
    %cst_34 = arith.constant dense<0.000000e+00> : vector<8xf32>
    %66 = vector.multi_reduction <add>, %65, %cst_34 [1] : vector<8x32xf32> to vector<8xf32>
    %67 = vector.shape_cast %66 : vector<8xf32> to vector<8x1xf32>
    %cst_35 = arith.constant 3.200000e+01 : f32
    %68 = vector.broadcast %cst_35 : f32 to vector<8x1xf32>
    %69 = arith.divf %67, %68 : vector<8x1xf32>
    %70 = vector.broadcast %62 : vector<8x1xf32> to vector<8x32xf32>
    %71 = arith.subf %56, %70 : vector<8x32xf32>
    %cst_36 = arith.constant 9.99999974E-6 : f32
    %72 = vector.broadcast %cst_36 : f32 to vector<8x1xf32>
    %73 = arith.addf %69, %72 : vector<8x1xf32>
    %74 = math.rsqrt %73 : vector<8x1xf32>
    %75 = vector.broadcast %74 : vector<8x1xf32> to vector<8x32xf32>
    %76 = arith.mulf %71, %75 : vector<8x32xf32>
    %77 = vector.broadcast %57 : vector<1x32xf32> to vector<8x32xf32>
    %78 = arith.mulf %76, %77 : vector<8x32xf32>
    %79 = vector.broadcast %58 : vector<1x32xf32> to vector<8x32xf32>
    %80 = arith.addf %78, %79 : vector<8x32xf32>
    %cst_37 = arith.constant 0.000000e+00 : f32
    %81 = vector.broadcast %cst_37 : f32 to vector<8x32xf32>
    %c0_38 = arith.constant 0 : index
    %c0_39 = arith.constant 0 : index
    %82 = vector.load %arg11[%c0_38, %c0_39] : memref<32x64xf32, #tpu.memory_space<vmem>>, vector<32x64xf32>
    %cst_40 = arith.constant dense<0.000000e+00> : vector<8x64xf32>
    %83 = tpu.matmul %80, %82, %cst_40 {dimension_numbers = #tpu.dot_dimension_numbers<[1], [0], [0], [1], [0, 0, 1, 1], [], []>} : vector<8x32xf32>, vector<32x64xf32>, vector<8x64xf32> -> vector<8x64xf32>
    %c0_41 = arith.constant 0 : index
    %c0_42 = arith.constant 0 : index
    %84 = vector.load %arg12[%c0_41, %c0_42] : memref<1x64xf32, #tpu.memory_space<vmem>>, vector<1x64xf32>
    %85 = vector.broadcast %84 : vector<1x64xf32> to vector<8x64xf32>
    %86 = arith.addf %83, %85 : vector<8x64xf32>
    %cst_43 = arith.constant 0.000000e+00 : f32
    %87 = vector.broadcast %cst_43 : f32 to vector<8x64xf32>
    %88 = arith.maximumf %86, %87 : vector<8x64xf32>
    %c0_44 = arith.constant 0 : index
    %c0_45 = arith.constant 0 : index
    %89 = vector.load %arg13[%c0_44, %c0_45] : memref<64x32xf32, #tpu.memory_space<vmem>>, vector<64x32xf32>
    %cst_46 = arith.constant dense<0.000000e+00> : vector<8x32xf32>
    %90 = tpu.matmul %88, %89, %cst_46 {dimension_numbers = #tpu.dot_dimension_numbers<[1], [0], [0], [1], [0, 0, 1, 1], [], []>} : vector<8x64xf32>, vector<64x32xf32>, vector<8x32xf32> -> vector<8x32xf32>
    %91 = arith.addf %81, %90 : vector<8x32xf32>
    %c0_47 = arith.constant 0 : index
    %c0_48 = arith.constant 0 : index
    %92 = vector.load %arg14[%c0_47, %c0_48] : memref<1x32xf32, #tpu.memory_space<vmem>>, vector<1x32xf32>
    %93 = vector.broadcast %92 : vector<1x32xf32> to vector<8x32xf32>
    %94 = arith.addf %91, %93 : vector<8x32xf32>
    %95 = arith.addf %80, %94 : vector<8x32xf32>
    %c0_49 = arith.constant 0 : index
    %c0_50 = arith.constant 0 : index
    %96 = vector.load %arg15[%c0_49, %c0_50] : memref<1x32xf32, #tpu.memory_space<vmem>>, vector<1x32xf32>
    %c0_51 = arith.constant 0 : index
    %c0_52 = arith.constant 0 : index
    %97 = vector.load %arg16[%c0_51, %c0_52] : memref<1x32xf32, #tpu.memory_space<vmem>>, vector<1x32xf32>
    %cst_53 = arith.constant dense<0.000000e+00> : vector<8xf32>
    %98 = vector.multi_reduction <add>, %95, %cst_53 [1] : vector<8x32xf32> to vector<8xf32>
    %99 = vector.shape_cast %98 : vector<8xf32> to vector<8x1xf32>
    %cst_54 = arith.constant 3.200000e+01 : f32
    %100 = vector.broadcast %cst_54 : f32 to vector<8x1xf32>
    %101 = arith.divf %99, %100 : vector<8x1xf32>
    %102 = vector.broadcast %101 : vector<8x1xf32> to vector<8x32xf32>
    %103 = arith.subf %95, %102 : vector<8x32xf32>
    %104 = arith.mulf %103, %103 : vector<8x32xf32>
    %cst_55 = arith.constant dense<0.000000e+00> : vector<8xf32>
    %105 = vector.multi_reduction <add>, %104, %cst_55 [1] : vector<8x32xf32> to vector<8xf32>
    %106 = vector.shape_cast %105 : vector<8xf32> to vector<8x1xf32>
    %cst_56 = arith.constant 3.200000e+01 : f32
    %107 = vector.broadcast %cst_56 : f32 to vector<8x1xf32>
    %108 = arith.divf %106, %107 : vector<8x1xf32>
    %109 = vector.broadcast %101 : vector<8x1xf32> to vector<8x32xf32>
    %110 = arith.subf %95, %109 : vector<8x32xf32>
    %cst_57 = arith.constant 9.99999974E-6 : f32
    %111 = vector.broadcast %cst_57 : f32 to vector<8x1xf32>
    %112 = arith.addf %108, %111 : vector<8x1xf32>
    %113 = math.rsqrt %112 : vector<8x1xf32>
    %114 = vector.broadcast %113 : vector<8x1xf32> to vector<8x32xf32>
    %115 = arith.mulf %110, %114 : vector<8x32xf32>
    %116 = vector.broadcast %96 : vector<1x32xf32> to vector<8x32xf32>
    %117 = arith.mulf %115, %116 : vector<8x32xf32>
    %118 = vector.broadcast %97 : vector<1x32xf32> to vector<8x32xf32>
    %119 = arith.addf %117, %118 : vector<8x32xf32>
    %c0_58 = arith.constant 0 : index
    %c0_59 = arith.constant 0 : index
    %c0_60 = arith.constant 0 : index
    %120 = vector.load %arg17[%c0_58, %c0_59, %c0_60] : memref<1x8x32xf32, #tpu.memory_space<vmem>>, vector<1x8x32xf32>
    %121 = vector.shape_cast %120 : vector<1x8x32xf32> to vector<8x32xf32>
    %122 = vector.shape_cast %119 : vector<8x32xf32> to vector<1x8x32xf32>
    tpu.vector_store %arg17[%c0_58, %c0_59, %c0_60], %122 {strides = array<i32>} : memref<1x8x32xf32, #tpu.memory_space<vmem>>, vector<1x8x32xf32>,
    return
  }
  func.func @transform_0(%arg0: i32, %arg1: i32) -> (i32, i32, i32) {
    %c0_i32 = arith.constant 0 : i32
    %c0_i32_0 = arith.constant 0 : i32
    return %arg0, %arg1, %c0_i32 : i32, i32, i32
  }
  func.func @transform_1(%arg0: i32, %arg1: i32) -> (i32, i32, i32) {
    %c0_i32 = arith.constant 0 : i32
    %c0_i32_0 = arith.constant 0 : i32
    %c0_i32_1 = arith.constant 0 : i32
    return %arg0, %c0_i32, %c0_i32_0 : i32, i32, i32
  }
  func.func @transform_2(%arg0: i32, %arg1: i32) -> (i32, i32, i32) {
    %c0_i32 = arith.constant 0 : i32
    %c0_i32_0 = arith.constant 0 : i32
    %c0_i32_1 = arith.constant 0 : i32
    return %arg0, %c0_i32, %c0_i32_0 : i32, i32, i32
  }
  func.func @transform_3(%arg0: i32, %arg1: i32) -> (i32, i32) {
    %c0_i32 = arith.constant 0 : i32
    %c0_i32_0 = arith.constant 0 : i32
    %c0_i32_1 = arith.constant 0 : i32
    return %c0_i32, %c0_i32_0 : i32, i32
  }
  func.func @transform_4(%arg0: i32, %arg1: i32) -> (i32, i32) {
    %c0_i32 = arith.constant 0 : i32
    %c0_i32_0 = arith.constant 0 : i32
    %c0_i32_1 = arith.constant 0 : i32
    return %c0_i32, %c0_i32_0 : i32, i32
  }
  func.func @transform_5(%arg0: i32, %arg1: i32) -> (i32, i32) {
    %c0_i32 = arith.constant 0 : i32
    %c0_i32_0 = arith.constant 0 : i32
    %c0_i32_1 = arith.constant 0 : i32
    return %c0_i32, %c0_i32_0 : i32, i32
  }
  func.func @transform_6(%arg0: i32, %arg1: i32) -> (i32, i32) {
    %c0_i32 = arith.constant 0 : i32
    %c0_i32_0 = arith.constant 0 : i32
    %c0_i32_1 = arith.constant 0 : i32
    return %c0_i32, %c0_i32_0 : i32, i32
  }
  func.func @transform_7(%arg0: i32, %arg1: i32) -> (i32, i32) {
    %c0_i32 = arith.constant 0 : i32
    %c0_i32_0 = arith.constant 0 : i32
    %c0_i32_1 = arith.constant 0 : i32
    return %c0_i32, %c0_i32_0 : i32, i32
  }
  func.func @transform_8(%arg0: i32, %arg1: i32) -> (i32, i32) {
    %c0_i32 = arith.constant 0 : i32
    %c0_i32_0 = arith.constant 0 : i32
    %c0_i32_1 = arith.constant 0 : i32
    return %c0_i32, %c0_i32_0 : i32, i32
  }
  func.func @transform_9(%arg0: i32, %arg1: i32) -> (i32, i32) {
    %c0_i32 = arith.constant 0 : i32
    %c0_i32_0 = arith.constant 0 : i32
    %c0_i32_1 = arith.constant 0 : i32
    return %c0_i32, %c0_i32_0 : i32, i32
  }
  func.func @transform_10(%arg0: i32, %arg1: i32) -> (i32, i32) {
    %c0_i32 = arith.constant 0 : i32
    %c0_i32_0 = arith.constant 0 : i32
    %c0_i32_1 = arith.constant 0 : i32
    return %c0_i32, %c0_i32_0 : i32, i32
  }
  func.func @transform_11(%arg0: i32, %arg1: i32) -> (i32, i32) {
    %c0_i32 = arith.constant 0 : i32
    %c0_i32_0 = arith.constant 0 : i32
    %c0_i32_1 = arith.constant 0 : i32
    return %c0_i32, %c0_i32_0 : i32, i32
  }
  func.func @transform_12(%arg0: i32, %arg1: i32) -> (i32, i32) {
    %c0_i32 = arith.constant 0 : i32
    %c0_i32_0 = arith.constant 0 : i32
    %c0_i32_1 = arith.constant 0 : i32
    return %c0_i32, %c0_i32_0 : i32, i32
  }
  func.func @transform_13(%arg0: i32, %arg1: i32) -> (i32, i32) {
    %c0_i32 = arith.constant 0 : i32
    %c0_i32_0 = arith.constant 0 : i32
    %c0_i32_1 = arith.constant 0 : i32
    return %c0_i32, %c0_i32_0 : i32, i32
  }
  func.func @transform_14(%arg0: i32, %arg1: i32) -> (i32, i32) {
    %c0_i32 = arith.constant 0 : i32
    %c0_i32_0 = arith.constant 0 : i32
    %c0_i32_1 = arith.constant 0 : i32
    return %c0_i32, %c0_i32_0 : i32, i32
  }
  func.func @transform_15(%arg0: i32, %arg1: i32) -> (i32, i32, i32) {
    %c0_i32 = arith.constant 0 : i32
    %c0_i32_0 = arith.constant 0 : i32
    return %arg0, %arg1, %c0_i32 : i32, i32, i32
  }
}

</mosaic_0001>

<llo_original>
// kernel: tpu_custom_call.1
$region0: #{tpu_custom_call.1}
  #allocation0 [shape = 'u32[]', space=smem, size = 0x4, offset = 0x4, fixed_abs, tag = 'smem constant byte address 0x4 - core index']
  #allocation1 [shape = 'u32[144,128]{1,0:T(1,128)}', space=vmem, size = 0x12000, scoped, tag = 'internal scratch']
  %s0 = inlined_call_operand.hbm [shape: f32[2,8,32], index: 0, kind: input, shape index: {}]
  %s1 = inlined_call_operand.hbm [shape: f32[2,8,32], index: 1, kind: input, shape index: {}]
  %s2 = inlined_call_operand.vmem [shape: f32[2,1,8], index: 2, kind: input, shape index: {}]
  %s3 = inlined_call_operand.vmem [shape: f32[32,32], index: 3, kind: input, shape index: {}]
  %s4 = inlined_call_operand.vmem [shape: f32[32,64], index: 4, kind: input, shape index: {}]
  %s5 = inlined_call_operand.vmem [shape: f32[32,32], index: 5, kind: input, shape index: {}]
  %s6 = inlined_call_operand.vmem [shape: f32[1,32], index: 6, kind: input, shape index: {}]
  %s7 = inlined_call_operand.vmem [shape: f32[1,32], index: 7, kind: input, shape index: {}]
  %s8 = inlined_call_operand.vmem [shape: f32[1,32], index: 8, kind: input, shape index: {}]
  %s9 = inlined_call_operand.hbm [shape: f32[32,64], index: 9, kind: input, shape index: {}]
  %s10 = inlined_call_operand.vmem [shape: f32[1,64], index: 10, kind: input, shape index: {}]
  %s11 = inlined_call_operand.vmem [shape: f32[64,32], index: 11, kind: input, shape index: {}]
  %s12 = inlined_call_operand.vmem [shape: f32[1,32], index: 12, kind: input, shape index: {}]
  %s13 = inlined_call_operand.vmem [shape: f32[1,32], index: 13, kind: input, shape index: {}]
  %s14 = inlined_call_operand.vmem [shape: f32[1,32], index: 14, kind: input, shape index: {}]
  %s15 = inlined_call_operand.hbm [shape: f32[2,8,32], index: 15, kind: output, shape index: {}]
  %s16 = sld [smem:[#allocation0]]
  $region105: #{tpu_custom_call.1} parent=0
    _
  %s18 = ssub.s32 1, %s16
  %s19 = scalar_select 0, %s18, %s16
  $region1: #{tpu_custom_call.1} parent=0
    #allocation2 [shape = 'u8[8192]{0}', space=vmem, size = 0x2000, scoped, tag = 'input window, operand 0']
    #allocation3 [shape = 's32[2]{0}', space=sflag, size = 0x8, scoped, tag = 'scoped memory for tpu_custom_call.1']
    #allocation4 [shape = 's32[2]{0}', space=sflag, size = 0x8, scoped, tag = 'scoped memory for tpu_custom_call.1']
    #allocation5 [shape = 'u8[8192]{0}', space=vmem, size = 0x2000, scoped, tag = 'input window, operand 1']
    #allocation6 [shape = 's32[2]{0}', space=sflag, size = 0x8, scoped, tag = 'scoped memory for tpu_custom_call.1']
    #allocation7 [shape = 'u8[16384]{0}', space=vmem, size = 0x4000, scoped, tag = 'input window, operand 9, single buffered']
    #allocation8 [shape = 'u8[8192]{0}', space=vmem, size = 0x2000, scoped, tag = 'output window, operand 0']
    %20 = vsyncpa [#allocation3], 0
    %s21 = scalar_lea.sflag [#allocation3], 1
    %22 = vsyncpa %s21, 0
    %23 = vsyncpa [#allocation6], 0
    %s24 = scalar_lea.sflag [#allocation6], 1
    %25 = vsyncpa %s24, 0
    %26 = vsyncpa [#allocation4], 0
    %s27 = scalar_lea.sflag [#allocation4], 1
    %28 = vsyncpa %s27, 0
    loop: start=0, step=1, limit=4
    $region2: #{tpu_custom_call.1} parent=1 // loop_pre_header
      _
    $region3: #{tpu_custom_call.1} parent=1 // loop_header
      %s30 = sphi 0, %s34
      %p31 = scmp.ge.s32.totalorder %s30, 4
      %s37 = sphi 0, %s49
      %s38 = sphi 0, %s45
      %s39 = sphi 0, %s37
      %s40 = sphi 0, %s38
      %s41 = sphi 0, %s39
      %s42 = sphi 0, %s40
      %s54 = sphi 0, %s56
      %s57 = sphi 0, %s54
      %s58 = sphi 0, %s57
      %s74 = sphi 0, %s58
      %s80 = sphi 0, %s82
      %s83 = sphi 0, %s80
      %s84 = sphi 0, %s83
      %s100 = sphi 0, %s84
      %s106 = sphi 0, %s108
      %s109 = sphi 0, %s106
      %s110 = sphi 0, %s109
      %s126 = sphi 0, %s110
      %s130 = sphi 0, %s130
      %s132 = sphi 0, %s130
      %s133 = sphi 0, %s132
      %s147 = sphi 0, %s133
      %s151 = sphi 0, %s151
      %s153 = sphi 0, %s151
      %s154 = sphi 0, %s153
      %s168 = sphi 0, %s154
      %s172 = sphi 0, %s172
      %s174 = sphi 0, %s172
      %s175 = sphi 0, %s174
      %s189 = sphi 0, %s175
      %s193 = sphi 0, %s193
      %s195 = sphi 0, %s193
      %s196 = sphi 0, %s195
      %s210 = sphi 0, %s196
      %s214 = sphi 0, %s214
      %s216 = sphi 0, %s214
      %s217 = sphi 0, %s216
      %s231 = sphi 0, %s217
      %s235 = sphi 0, %s235
      %s237 = sphi 0, %s235
      %s238 = sphi 0, %s237
      %s252 = sphi 0, %s238
      %s256 = sphi 0, %s256
      %s258 = sphi 0, %s256
      %s259 = sphi 0, %s258
      %s273 = sphi 0, %s259
      %s277 = sphi 0, %s277
      %s279 = sphi 0, %s277
      %s280 = sphi 0, %s279
      %s294 = sphi 0, %s280
      %s298 = sphi 0, %s298
      %s300 = sphi 0, %s298
      %s301 = sphi 0, %s300
      %s315 = sphi 0, %s301
      %s319 = sphi 0, %s319
      %s321 = sphi 0, %s319
      %s322 = sphi 0, %s321
      %s336 = sphi 0, %s322
      %s340 = sphi 0, %s340
      %s342 = sphi 0, %s340
      %s343 = sphi 0, %s342
      %s357 = sphi 0, %s343
      %s361 = sphi 0, %s361
      %s363 = sphi 0, %s361
      %s364 = sphi 0, %s363
      %s378 = sphi 0, %s364
      %s386 = sphi 0, %s388
      %s389 = sphi 0, %s386
      %s390 = sphi 0, %s389
      %s406 = sphi 0, %s390
    $region4: #{tpu_custom_call.1} parent=1 // loop_header_branch
      %33 = sbr.rel (%p31) target = $region8
    $region5: #{tpu_custom_call.1} parent=1 // loop_body
      %s35 = ssub.s32 %s30, 1
      %s36 = ssub.s32 %s30, 2
      %s43 = sadd.s32 1, %s38
      %p44 = scmp.ge.s32.totalorder %s43, 1
      %s45 = scalar_select %p44, 0, %s43
      %s46 = sadd.s32 1, %s37
      %s47 = scalar_select %p44, %s46, %s37
      %p48 = scmp.ge.s32.totalorder %s47, 2
      %s49 = scalar_select %p48, 0, %s47
      %s50 = ssub.s32 %s37, %s49
      %s51 = ssub.s32 %s38, %s45
      %s52 = sor.u32 %s50, %s51
      %p53 = scmp.eq.s32.totalorder %s52, 0
      %s55 = sadd.s32 %s54, 1
      %s56 = scalar_select %p53, %s54, %s55
      %p59 = pneg %p53
      %p60 = scmp.eq.s32.totalorder %s30, 1
      %p61 = por %p59, %p60
      %p62 = scmp.ne.s32.totalorder %s54, %s57
      %p63 = scmp.eq.s32.totalorder %s30, 0
      %p64 = por %p62, %p63
      %p65 = scmp.ne.s32.totalorder %s54, %s57
      %p66 = scmp.eq.s32.totalorder %s35, 1
      %p67 = por %p65, %p66
      %p68 = scmp.ne.s32.totalorder %s57, %s58
      %p69 = scmp.eq.s32.totalorder %s35, 0
      %p70 = por %p68, %p69
      %p71 = scmp.ne.s32.totalorder %s57, %s58
      %p72 = scmp.eq.s32.totalorder %s36, 1
      %p73 = por %p71, %p72
      %p75 = scmp.ne.s32.totalorder %s58, %s74
      %p76 = scmp.eq.s32.totalorder %s36, 0
      %p77 = por %p75, %p76
      %s78 = ssub.s32 %s37, %s49
      %p79 = scmp.eq.s32.totalorder %s78, 0
      %s81 = sadd.s32 %s80, 1
      %s82 = scalar_select %p79, %s80, %s81
      %p85 = pneg %p79
      %p86 = scmp.eq.s32.totalorder %s30, 1
      %p87 = por %p85, %p86
      %p88 = scmp.ne.s32.totalorder %s80, %s83
      %p89 = scmp.eq.s32.totalorder %s30, 0
      %p90 = por %p88, %p89
      %p91 = scmp.ne.s32.totalorder %s80, %s83
      %p92 = scmp.eq.s32.totalorder %s35, 1
      %p93 = por %p91, %p92
      %p94 = scmp.ne.s32.totalorder %s83, %s84
      %p95 = scmp.eq.s32.totalorder %s35, 0
      %p96 = por %p94, %p95
      %p97 = scmp.ne.s32.totalorder %s83, %s84
      %p98 = scmp.eq.s32.totalorder %s36, 1
      %p99 = por %p97, %p98
      %p101 = scmp.ne.s32.totalorder %s84, %s100
      %p102 = scmp.eq.s32.totalorder %s36, 0
      %p103 = por %p101, %p102
      %s104 = ssub.s32 %s37, %s49
      %p105 = scmp.eq.s32.totalorder %s104, 0
      %s107 = sadd.s32 %s106, 1
      %s108 = scalar_select %p105, %s106, %s107
      %p111 = pneg %p105
      %p112 = scmp.eq.s32.totalorder %s30, 1
      %p113 = por %p111, %p112
      %p114 = scmp.ne.s32.totalorder %s106, %s109
      %p115 = scmp.eq.s32.totalorder %s30, 0
      %p116 = por %p114, %p115
      %p117 = scmp.ne.s32.totalorder %s106, %s109
      %p118 = scmp.eq.s32.totalorder %s35, 1
      %p119 = por %p117, %p118
      %p120 = scmp.ne.s32.totalorder %s109, %s110
      %p121 = scmp.eq.s32.totalorder %s35, 0
      %p122 = por %p120, %p121
      %p123 = scmp.ne.s32.totalorder %s109, %s110
      %p124 = scmp.eq.s32.totalorder %s36, 1
      %p125 = por %p123, %p124
      %p127 = scmp.ne.s32.totalorder %s110, %s126
      %p128 = scmp.eq.s32.totalorder %s36, 0
      %p129 = por %p127, %p128
      %s131 = sadd.s32 %s130, 1
      %p134 = scmp.eq.s32.totalorder %s30, 1
      %p135 = scmp.ne.s32.totalorder %s130, %s132
      %p136 = scmp.eq.s32.totalorder %s30, 0
      %p137 = por %p135, %p136
      %p138 = scmp.ne.s32.totalorder %s130, %s132
      %p139 = scmp.eq.s32.totalorder %s35, 1
      %p140 = por %p138, %p139
      %p141 = scmp.ne.s32.totalorder %s132, %s133
      %p142 = scmp.eq.s32.totalorder %s35, 0
      %p143 = por %p141, %p142
      %p144 = scmp.ne.s32.totalorder %s132, %s133
      %p145 = scmp.eq.s32.totalorder %s36, 1
      %p146 = por %p144, %p145
      %p148 = scmp.ne.s32.totalorder %s133, %s147
      %p149 = scmp.eq.s32.totalorder %s36, 0
      %p150 = por %p148, %p149
      %s152 = sadd.s32 %s151, 1
      %p155 = scmp.eq.s32.totalorder %s30, 1
      %p156 = scmp.ne.s32.totalorder %s151, %s153
      %p157 = scmp.eq.s32.totalorder %s30, 0
      %p158 = por %p156, %p157
      %p159 = scmp.ne.s32.totalorder %s151, %s153
      %p160 = scmp.eq.s32.totalorder %s35, 1
      %p161 = por %p159, %p160
      %p162 = scmp.ne.s32.totalorder %s153, %s154
      %p163 = scmp.eq.s32.totalorder %s35, 0
      %p164 = por %p162, %p163
      %p165 = scmp.ne.s32.totalorder %s153, %s154
      %p166 = scmp.eq.s32.totalorder %s36, 1
      %p167 = por %p165, %p166
      %p169 = scmp.ne.s32.totalorder %s154, %s168
      %p170 = scmp.eq.s32.totalorder %s36, 0
      %p171 = por %p169, %p170
      %s173 = sadd.s32 %s172, 1
      %p176 = scmp.eq.s32.totalorder %s30, 1
      %p177 = scmp.ne.s32.totalorder %s172, %s174
      %p178 = scmp.eq.s32.totalorder %s30, 0
      %p179 = por %p177, %p178
      %p180 = scmp.ne.s32.totalorder %s172, %s174
      %p181 = scmp.eq.s32.totalorder %s35, 1
      %p182 = por %p180, %p181
      %p183 = scmp.ne.s32.totalorder %s174, %s175
      %p184 = scmp.eq.s32.totalorder %s35, 0
      %p185 = por %p183, %p184
      %p186 = scmp.ne.s32.totalorder %s174, %s175
      %p187 = scmp.eq.s32.totalorder %s36, 1
      %p188 = por %p186, %p187
      %p190 = scmp.ne.s32.totalorder %s175, %s189
      %p191 = scmp.eq.s32.totalorder %s36, 0
      %p192 = por %p190, %p191
      %s194 = sadd.s32 %s193, 1
      %p197 = scmp.eq.s32.totalorder %s30, 1
      %p198 = scmp.ne.s32.totalorder %s193, %s195
      %p199 = scmp.eq.s32.totalorder %s30, 0
      %p200 = por %p198, %p199
      %p201 = scmp.ne.s32.totalorder %s193, %s195
      %p202 = scmp.eq.s32.totalorder %s35, 1
      %p203 = por %p201, %p202
      %p204 = scmp.ne.s32.totalorder %s195, %s196
      %p205 = scmp.eq.s32.totalorder %s35, 0
      %p206 = por %p204, %p205
      %p207 = scmp.ne.s32.totalorder %s195, %s196
      %p208 = scmp.eq.s32.totalorder %s36, 1
      %p209 = por %p207, %p208
      %p211 = scmp.ne.s32.totalorder %s196, %s210
      %p212 = scmp.eq.s32.totalorder %s36, 0
      %p213 = por %p211, %p212
      %s215 = sadd.s32 %s214, 1
      %p218 = scmp.eq.s32.totalorder %s30, 1
      %p219 = scmp.ne.s32.totalorder %s214, %s216
      %p220 = scmp.eq.s32.totalorder %s30, 0
      %p221 = por %p219, %p220
      %p222 = scmp.ne.s32.totalorder %s214, %s216
      %p223 = scmp.eq.s32.totalorder %s35, 1
      %p224 = por %p222, %p223
      %p225 = scmp.ne.s32.totalorder %s216, %s217
      %p226 = scmp.eq.s32.totalorder %s35, 0
      %p227 = por %p225, %p226
      %p228 = scmp.ne.s32.totalorder %s216, %s217
      %p229 = scmp.eq.s32.totalorder %s36, 1
      %p230 = por %p228, %p229
      %p232 = scmp.ne.s32.totalorder %s217, %s231
      %p233 = scmp.eq.s32.totalorder %s36, 0
      %p234 = por %p232, %p233
      %s236 = sadd.s32 %s235, 1
      %p239 = scmp.eq.s32.totalorder %s30, 1
      %p240 = scmp.ne.s32.totalorder %s235, %s237
      %p241 = scmp.eq.s32.totalorder %s30, 0
      %p242 = por %p240, %p241
      %p243 = scmp.ne.s32.totalorder %s235, %s237
      %p244 = scmp.eq.s32.totalorder %s35, 1
      %p245 = por %p243, %p244
      %p246 = scmp.ne.s32.totalorder %s237, %s238
      %p247 = scmp.eq.s32.totalorder %s35, 0
      %p248 = por %p246, %p247
      %p249 = scmp.ne.s32.totalorder %s237, %s238
      %p250 = scmp.eq.s32.totalorder %s36, 1
      %p251 = por %p249, %p250
      %p253 = scmp.ne.s32.totalorder %s238, %s252
      %p254 = scmp.eq.s32.totalorder %s36, 0
      %p255 = por %p253, %p254
      %s257 = sadd.s32 %s256, 1
      %p260 = scmp.eq.s32.totalorder %s30, 1
      %p261 = scmp.ne.s32.totalorder %s256, %s258
      %p262 = scmp.eq.s32.totalorder %s30, 0
      %p263 = por %p261, %p262
      %p264 = scmp.ne.s32.totalorder %s256, %s258
      %p265 = scmp.eq.s32.totalorder %s35, 1
      %p266 = por %p264, %p265
      %p267 = scmp.ne.s32.totalorder %s258, %s259
      %p268 = scmp.eq.s32.totalorder %s35, 0
      %p269 = por %p267, %p268
      %p270 = scmp.ne.s32.totalorder %s258, %s259
      %p271 = scmp.eq.s32.totalorder %s36, 1
      %p272 = por %p270, %p271
      %p274 = scmp.ne.s32.totalorder %s259, %s273
      %p275 = scmp.eq.s32.totalorder %s36, 0
      %p276 = por %p274, %p275
      %s278 = sadd.s32 %s277, 1
      %p281 = scmp.eq.s32.totalorder %s30, 1
      %p282 = scmp.ne.s32.totalorder %s277, %s279
      %p283 = scmp.eq.s32.totalorder %s30, 0
      %p284 = por %p282, %p283
      %p285 = scmp.ne.s32.totalorder %s277, %s279
      %p286 = scmp.eq.s32.totalorder %s35, 1
      %p287 = por %p285, %p286
      %p288 = scmp.ne.s32.totalorder %s279, %s280
      %p289 = scmp.eq.s32.totalorder %s35, 0
      %p290 = por %p288, %p289
      %p291 = scmp.ne.s32.totalorder %s279, %s280
      %p292 = scmp.eq.s32.totalorder %s36, 1
      %p293 = por %p291, %p292
      %p295 = scmp.ne.s32.totalorder %s280, %s294
      %p296 = scmp.eq.s32.totalorder %s36, 0
      %p297 = por %p295, %p296
      %s299 = sadd.s32 %s298, 1
      %p302 = scmp.eq.s32.totalorder %s30, 1
      %p303 = scmp.ne.s32.totalorder %s298, %s300
      %p304 = scmp.eq.s32.totalorder %s30, 0
      %p305 = por %p303, %p304
      %p306 = scmp.ne.s32.totalorder %s298, %s300
      %p307 = scmp.eq.s32.totalorder %s35, 1
      %p308 = por %p306, %p307
      %p309 = scmp.ne.s32.totalorder %s300, %s301
      %p310 = scmp.eq.s32.totalorder %s35, 0
      %p311 = por %p309, %p310
      %p312 = scmp.ne.s32.totalorder %s300, %s301
      %p313 = scmp.eq.s32.totalorder %s36, 1
      %p314 = por %p312, %p313
      %p316 = scmp.ne.s32.totalorder %s301, %s315
      %p317 = scmp.eq.s32.totalorder %s36, 0
      %p318 = por %p316, %p317
      %s320 = sadd.s32 %s319, 1
      %p323 = scmp.eq.s32.totalorder %s30, 1
      %p324 = scmp.ne.s32.totalorder %s319, %s321
      %p325 = scmp.eq.s32.totalorder %s30, 0
      %p326 = por %p324, %p325
      %p327 = scmp.ne.s32.totalorder %s319, %s321
      %p328 = scmp.eq.s32.totalorder %s35, 1
      %p329 = por %p327, %p328
      %p330 = scmp.ne.s32.totalorder %s321, %s322
      %p331 = scmp.eq.s32.totalorder %s35, 0
      %p332 = por %p330, %p331
      %p333 = scmp.ne.s32.totalorder %s321, %s322
      %p334 = scmp.eq.s32.totalorder %s36, 1
      %p335 = por %p333, %p334
      %p337 = scmp.ne.s32.totalorder %s322, %s336
      %p338 = scmp.eq.s32.totalorder %s36, 0
      %p339 = por %p337, %p338
      %s341 = sadd.s32 %s340, 1
      %p344 = scmp.eq.s32.totalorder %s30, 1
      %p345 = scmp.ne.s32.totalorder %s340, %s342
      %p346 = scmp.eq.s32.totalorder %s30, 0
      %p347 = por %p345, %p346
      %p348 = scmp.ne.s32.totalorder %s340, %s342
      %p349 = scmp.eq.s32.totalorder %s35, 1
      %p350 = por %p348, %p349
      %p351 = scmp.ne.s32.totalorder %s342, %s343
      %p352 = scmp.eq.s32.totalorder %s35, 0
      %p353 = por %p351, %p352
      %p354 = scmp.ne.s32.totalorder %s342, %s343
      %p355 = scmp.eq.s32.totalorder %s36, 1
      %p356 = por %p354, %p355
      %p358 = scmp.ne.s32.totalorder %s343, %s357
      %p359 = scmp.eq.s32.totalorder %s36, 0
      %p360 = por %p358, %p359
      %s362 = sadd.s32 %s361, 1
      %p365 = scmp.eq.s32.totalorder %s30, 1
      %p366 = scmp.ne.s32.totalorder %s361, %s363
      %p367 = scmp.eq.s32.totalorder %s30, 0
      %p368 = por %p366, %p367
      %p369 = scmp.ne.s32.totalorder %s361, %s363
      %p370 = scmp.eq.s32.totalorder %s35, 1
      %p371 = por %p369, %p370
      %p372 = scmp.ne.s32.totalorder %s363, %s364
      %p373 = scmp.eq.s32.totalorder %s35, 0
      %p374 = por %p372, %p373
      %p375 = scmp.ne.s32.totalorder %s363, %s364
      %p376 = scmp.eq.s32.totalorder %s36, 1
      %p377 = por %p375, %p376
      %p379 = scmp.ne.s32.totalorder %s364, %s378
      %p380 = scmp.eq.s32.totalorder %s36, 0
      %p381 = por %p379, %p380
      %s382 = ssub.s32 %s37, %s49
      %s383 = ssub.s32 %s38, %s45
      %s384 = sor.u32 %s382, %s383
      %p385 = scmp.eq.s32.totalorder %s384, 0
      %s387 = sadd.s32 %s386, 1
      %s388 = scalar_select %p385, %s386, %s387
      %p391 = pneg %p385
      %p392 = scmp.eq.s32.totalorder %s30, 1
      %p393 = por %p391, %p392
      %p394 = scmp.ne.s32.totalorder %s386, %s389
      %p395 = scmp.eq.s32.totalorder %s30, 0
      %p396 = por %p394, %p395
      %p397 = scmp.ne.s32.totalorder %s386, %s389
      %p398 = scmp.eq.s32.totalorder %s35, 1
      %p399 = por %p397, %p398
      %p400 = scmp.ne.s32.totalorder %s389, %s390
      %p401 = scmp.eq.s32.totalorder %s35, 0
      %p402 = por %p400, %p401
      %p403 = scmp.ne.s32.totalorder %s389, %s390
      %p404 = scmp.eq.s32.totalorder %s36, 1
      %p405 = por %p403, %p404
      %p407 = scmp.ne.s32.totalorder %s390, %s406
      %p408 = scmp.eq.s32.totalorder %s36, 0
      %p409 = por %p407, %p408
      %p410 = scmp.le.s32.totalorder 1, %s30
      %p411 = scmp.lt.s32.totalorder %s30, 3
      %p412 = pnand %p410, %p411
      %p413 = pneg %p412
      // Predicated region
      $region9: #{tpu_custom_call.1} parent=5 // pred_check
        _
      $region10: #{tpu_custom_call.1} parent=5 // pred_check_branch
        %415 = sbr.rel (%p412) target = $region12
      $region11: #{tpu_custom_call.1} parent=5 // pred_region
        %s416 = ssub.s32 %s30, 1
        // Predicated region
        $region13: #{tpu_custom_call.1} parent=11 // pred_check
          %p417 = pneg %p143
        $region14: #{tpu_custom_call.1} parent=11 // pred_check_branch
          %419 = sbr.rel (%p417) target = $region16
        $region15: #{tpu_custom_call.1} parent=11 // pred_region
          _
        $region16: #{tpu_custom_call.1} parent=11 // pred_fallthru
          _
        // Predicated region
        $region17: #{tpu_custom_call.1} parent=11 // pred_check
          %p420 = pneg %p164
        $region18: #{tpu_custom_call.1} parent=11 // pred_check_branch
          %422 = sbr.rel (%p420) target = $region20
        $region19: #{tpu_custom_call.1} parent=11 // pred_region
          _
        $region20: #{tpu_custom_call.1} parent=11 // pred_fallthru
          _
        // Predicated region
        $region21: #{tpu_custom_call.1} parent=11 // pred_check
          %p423 = pneg %p185
        $region22: #{tpu_custom_call.1} parent=11 // pred_check_branch
          %425 = sbr.rel (%p423) target = $region24
        $region23: #{tpu_custom_call.1} parent=11 // pred_region
          _
        $region24: #{tpu_custom_call.1} parent=11 // pred_fallthru
          _
        // Predicated region
        $region25: #{tpu_custom_call.1} parent=11 // pred_check
          %p426 = pneg %p206
        $region26: #{tpu_custom_call.1} parent=11 // pred_check_branch
          %428 = sbr.rel (%p426) target = $region28
        $region27: #{tpu_custom_call.1} parent=11 // pred_region
          _
        $region28: #{tpu_custom_call.1} parent=11 // pred_fallthru
          _
        // Predicated region
        $region29: #{tpu_custom_call.1} parent=11 // pred_check
          %p429 = pneg %p227
        $region30: #{tpu_custom_call.1} parent=11 // pred_check_branch
          %431 = sbr.rel (%p429) target = $region32
        $region31: #{tpu_custom_call.1} parent=11 // pred_region
          _
        $region32: #{tpu_custom_call.1} parent=11 // pred_fallthru
          _
        // Predicated region
        $region33: #{tpu_custom_call.1} parent=11 // pred_check
          %p432 = pneg %p248
        $region34: #{tpu_custom_call.1} parent=11 // pred_check_branch
          %434 = sbr.rel (%p432) target = $region36
        $region35: #{tpu_custom_call.1} parent=11 // pred_region
          _
        $region36: #{tpu_custom_call.1} parent=11 // pred_fallthru
          _
        // Predicated region
        $region37: #{tpu_custom_call.1} parent=11 // pred_check
          %p435 = pneg %p269
        $region38: #{tpu_custom_call.1} parent=11 // pred_check_branch
          %437 = sbr.rel (%p435) target = $region40
        $region39: #{tpu_custom_call.1} parent=11 // pred_region
          %s439 = ssub.s32 512, 512
          %440 = vsyncadd [#allocation6], %s439
          %s441 = sshll.u32 [#allocation7], 4
          %s442 = int_to_ptr.vmem [resolvable:$true] %s441
          %447 = dma.hbm_to_vmem [thread:$0]  %s9, 512, %s442, [#allocation6], 128, 128, 8
        $region40: #{tpu_custom_call.1} parent=11 // pred_fallthru
          _
        // Predicated region
        $region41: #{tpu_custom_call.1} parent=11 // pred_check
          %p448 = pneg %p290
        $region42: #{tpu_custom_call.1} parent=11 // pred_check_branch
          %450 = sbr.rel (%p448) target = $region44
        $region43: #{tpu_custom_call.1} parent=11 // pred_region
          _
        $region44: #{tpu_custom_call.1} parent=11 // pred_fallthru
          _
        // Predicated region
        $region45: #{tpu_custom_call.1} parent=11 // pred_check
          %p451 = pneg %p311
        $region46: #{tpu_custom_call.1} parent=11 // pred_check_branch
          %453 = sbr.rel (%p451) target = $region48
        $region47: #{tpu_custom_call.1} parent=11 // pred_region
          _
        $region48: #{tpu_custom_call.1} parent=11 // pred_fallthru
          _
        // Predicated region
        $region49: #{tpu_custom_call.1} parent=11 // pred_check
          %p454 = pneg %p332
        $region50: #{tpu_custom_call.1} parent=11 // pred_check_branch
          %456 = sbr.rel (%p454) target = $region52
        $region51: #{tpu_custom_call.1} parent=11 // pred_region
          _
        $region52: #{tpu_custom_call.1} parent=11 // pred_fallthru
          _
        // Predicated region
        $region53: #{tpu_custom_call.1} parent=11 // pred_check
          %p457 = pneg %p353
        $region54: #{tpu_custom_call.1} parent=11 // pred_check_branch
          %459 = sbr.rel (%p457) target = $region56
        $region55: #{tpu_custom_call.1} parent=11 // pred_region
          _
        $region56: #{tpu_custom_call.1} parent=11 // pred_fallthru
          _
        // Predicated region
        $region57: #{tpu_custom_call.1} parent=11 // pred_check
          %p460 = pneg %p374
        $region58: #{tpu_custom_call.1} parent=11 // pred_check_branch
          %462 = sbr.rel (%p460) target = $region60
        $region59: #{tpu_custom_call.1} parent=11 // pred_region
          _
        $region60: #{tpu_custom_call.1} parent=11 // pred_fallthru
          _
      $region12: #{tpu_custom_call.1} parent=5 // pred_fallthru
        _
      %p463 = scmp.lt.s32.totalorder %s30, 2
      // Predicated region
      $region61: #{tpu_custom_call.1} parent=5 // pred_check
        %p464 = pneg %p463
      $region62: #{tpu_custom_call.1} parent=5 // pred_check_branch
        %466 = sbr.rel (%p464) target = $region64
      $region63: #{tpu_custom_call.1} parent=5 // pred_region
        // Predicated region
        $region65: #{tpu_custom_call.1} parent=63 // pred_check
          %p467 = pneg %p64
        $region66: #{tpu_custom_call.1} parent=63 // pred_check_branch
          %469 = sbr.rel (%p467) target = $region68
        $region67: #{tpu_custom_call.1} parent=63 // pred_region
          %s470 = sand.u32 %s54, 1
          %s471 = scalar_lea.sflag [#allocation3], %s470
          %s472 = sand.u32 %s54, 1
          %s473 = smul.addr %s472, 8
          %s474 = scalar_lea.vmem [#allocation2], %s473
          %s476 = ssub.s32 128, 128
          %477 = vsyncadd %s471, %s476
          %s478 = sadd.s32 %s38, %s37
          %s479 = smul.addr %s478, 128
          %s480 = scalar_lea.hbm %s0, %s479
          %s482 = sshll.u32 %s474, 4
          %s483 = int_to_ptr.vmem [resolvable:$true] %s482
          %485 = dma.hbm_to_vmem [thread:$0]  %s480, 128, %s483, %s471
        $region68: #{tpu_custom_call.1} parent=63 // pred_fallthru
          _
        // Predicated region
        $region69: #{tpu_custom_call.1} parent=63 // pred_check
          %p486 = pneg %p90
        $region70: #{tpu_custom_call.1} parent=63 // pred_check_branch
          %488 = sbr.rel (%p486) target = $region72
        $region71: #{tpu_custom_call.1} parent=63 // pred_region
          %s489 = sand.u32 %s30, 1
          %s490 = scalar_lea.sflag [#allocation6], %s489
          %s491 = sand.u32 %s80, 1
          %s492 = smul.addr %s491, 8
          %s493 = scalar_lea.vmem [#allocation5], %s492
          %s495 = ssub.s32 128, 128
          %496 = vsyncadd %s490, %s495
          %s497 = smul.addr %s37, 128
          %s498 = scalar_lea.hbm %s1, %s497
          %s500 = sshll.u32 %s493, 4
          %s501 = int_to_ptr.vmem [resolvable:$true] %s500
          %503 = dma.hbm_to_vmem [thread:$0]  %s498, 128, %s501, %s490
        $region72: #{tpu_custom_call.1} parent=63 // pred_fallthru
          _
        // Predicated region
        $region73: #{tpu_custom_call.1} parent=63 // pred_check
          %p504 = pneg %p116
        $region74: #{tpu_custom_call.1} parent=63 // pred_check_branch
          %506 = sbr.rel (%p504) target = $region76
        $region75: #{tpu_custom_call.1} parent=63 // pred_region
          %p507 = scmp.lt.s32.totalorder %s37, 1
          %s508 = scalar_select %p507, %s37, 1
          %s509 = scalar_lea.vmem %s2, %s508
        $region76: #{tpu_custom_call.1} parent=63 // pred_fallthru
          _
      $region64: #{tpu_custom_call.1} parent=5 // pred_fallthru
        _
      %p510 = scmp.le.s32.totalorder 1, %s30
      %p511 = scmp.lt.s32.totalorder %s30, 3
      %p512 = pnand %p510, %p511
      %p513 = pneg %p512
      // Predicated region
      $region77: #{tpu_custom_call.1} parent=5 // pred_check
        _
      $region78: #{tpu_custom_call.1} parent=5 // pred_check_branch
        %515 = sbr.rel (%p512) target = $region80
      $region79: #{tpu_custom_call.1} parent=5 // pred_region
        %s516 = ssub.s32 %s30, 1
        %s517 = sand.u32 %s57, 1
        %s518 = scalar_lea.sflag [#allocation3], %s517
        %s519 = sand.u32 %s57, 1
        %s520 = smul.addr %s519, 8
        %s521 = scalar_lea.vmem [#allocation2], %s520
        // Predicated region
        $region81: #{tpu_custom_call.1} parent=79 // pred_check
          %p522 = pneg %p70
        $region82: #{tpu_custom_call.1} parent=79 // pred_check_branch
          %524 = sbr.rel (%p522) target = $region84
        $region83: #{tpu_custom_call.1} parent=79 // pred_region
          %525 = dma.done %s518, 128
        $region84: #{tpu_custom_call.1} parent=79 // pred_fallthru
          _
        %s526 = sand.u32 %s35, 1
        %s527 = scalar_lea.sflag [#allocation6], %s526
        %s528 = sand.u32 %s83, 1
        %s529 = smul.addr %s528, 8
        %s530 = scalar_lea.vmem [#allocation5], %s529
        // Predicated region
        $region85: #{tpu_custom_call.1} parent=79 // pred_check
          %p531 = pneg %p96
        $region86: #{tpu_custom_call.1} parent=79 // pred_check_branch
          %533 = sbr.rel (%p531) target = $region88
        $region87: #{tpu_custom_call.1} parent=79 // pred_region
          %534 = dma.done %s527, 128
        $region88: #{tpu_custom_call.1} parent=79 // pred_fallthru
          _
        // Predicated region
        $region89: #{tpu_custom_call.1} parent=79 // pred_check
          %p535 = pneg %p269
        $region90: #{tpu_custom_call.1} parent=79 // pred_check_branch
          %537 = sbr.rel (%p535) target = $region92
        $region91: #{tpu_custom_call.1} parent=79 // pred_region
          %538 = dma.done [#allocation6], 512
        $region92: #{tpu_custom_call.1} parent=79 // pred_fallthru
          _
        %s539 = sand.u32 %s57, 1
        %s540 = scalar_lea.sflag [#allocation3], %s539
        %s541 = sand.u32 %s57, 1
        %s542 = smul.addr %s541, 8
        %s543 = scalar_lea.vmem [#allocation2], %s542
        %p544 = pneg %p70
        %p545 = pneg %p67
        %s546 = sand.u32 %s35, 1
        %s547 = scalar_lea.sflag [#allocation6], %s546
        %s548 = sand.u32 %s83, 1
        %s549 = smul.addr %s548, 8
        %s550 = scalar_lea.vmem [#allocation5], %s549
        %p551 = pneg %p96
        %p552 = pneg %p93
        %p553 = scmp.lt.s32.totalorder %s39, 1
        %s554 = scalar_select %p553, %s39, 1
        %s555 = scalar_lea.vmem %s2, %s554
        %p556 = pneg %p122
        %p557 = pneg %p119
        %p558 = pneg %p143
        %p559 = pneg %p140
        %p560 = pneg %p164
        %p561 = pneg %p161
        %p562 = pneg %p185
        %p563 = pneg %p182
        %p564 = pneg %p206
        %p565 = pneg %p203
        %p566 = pneg %p227
        %p567 = pneg %p224
        %p568 = pneg %p248
        %p569 = pneg %p245
        %p570 = pneg %p269
        %p571 = pneg %p266
        %p572 = pneg %p290
        %p573 = pneg %p287
        %p574 = pneg %p311
        %p575 = pneg %p308
        %p576 = pneg %p332
        %p577 = pneg %p329
        %p578 = pneg %p353
        %p579 = pneg %p350
        %p580 = pneg %p374
        %p581 = pneg %p371
        %p582 = pneg %p402
        %p583 = pneg %p399
        %s584 = sand.u32 %s389, 1
        %s585 = scalar_lea.sflag [#allocation4], %s584
        %s586 = sand.u32 %s389, 1
        %s587 = smul.addr %s586, 8
        %s588 = scalar_lea.vmem [#allocation8], %s587
        %p589 = scmp.lt.s32.totalorder %s39, 1
        %s590 = scalar_select %p589, %s39, 1
        %s591 = scalar_lea.vmem %s2, %s590
        %v592 = vld [vmem:[%s521] sm:$0xff]
        %v593 = vld [vmem:[%s3] sm:$0xff]
        %v594 = vld [vmem:[%s3 + $0x8] sm:$0xff]
        %v595 = vld [vmem:[%s3 + $0x10] sm:$0xff]
        %v596 = vld [vmem:[%s3 + $0x18] sm:$0xff]
        %vm597 = vcmask 261120
        %v599 = vsel %vm597, %v592, 0
        %601 = vmatprep.subr.mxu0 0.0
        %602 = vmatpush1.msra.mxu0 %v593
        %603 = vmatprep.subr.mxu0 0.0
        %604 = vmatpush1.msra.mxu0 %v594
        %605 = vmatprep.subr.mxu0 0.0
        %606 = vmatpush1.msra.mxu0 %v595
        %607 = vmatprep.subr.mxu0 0.0
        %608 = vmatpush1.msra.mxu0 %v596
        %609 = vmatprep.subr.mxu0 0.0
        %610 = vmatpush1.msra.mxu0 0.0
        %611 = vmatprep.subr.mxu0 0.0
        %612 = vmatpush1.msra.mxu0 0.0
        %613 = vmatprep.subr.mxu0 0.0
        %614 = vmatpush1.msra.mxu0 0.0
        %615 = vmatprep.subr.mxu0 0.0
        %616 = vmatpush1.msra.mxu0 0.0
        %617 = vmatprep.subr.mxu0 0.0
        %618 = vmatpush1.msra.mxu0 0.0
        %619 = vmatprep.subr.mxu0 0.0
        %620 = vmatpush1.msra.mxu0 0.0
        %621 = vmatprep.subr.mxu0 0.0
        %622 = vmatpush1.msra.mxu0 0.0
        %623 = vmatprep.subr.mxu0 0.0
        %624 = vmatpush1.msra.mxu0 0.0
        %625 = vmatprep.subr.mxu0 0.0
        %626 = vmatpush1.msra.mxu0 0.0
        %627 = vmatprep.subr.mxu0 0.0
        %628 = vmatpush1.msra.mxu0 0.0
        %629 = vmatprep.subr.mxu0 0.0
        %630 = vmatpush1.msra.mxu0 0.0
        %631 = vmatprep.subr.mxu0 0.0
        %632 = vmatpush1.msra.mxu0 0.0
        %633 = vmatprep.subr.mxu0 0.0
        %634 = vmatpush1.msra.mxu0 0.0
        %635 = vmatprep.subr.mxu0 0.0
        %636 = vmatpush1.msra.mxu0 0.0
        %637 = vmatprep.subr.mxu0 0.0
        %638 = vmatpush1.msra.mxu0 0.0
        %639 = vmatprep.subr.mxu0 0.0
        %640 = vmatpush1.msra.mxu0 0.0
        %641 = vmatprep.subr.mxu0 0.0
        %642 = vmatpush1.msra.mxu0 0.0
        %643 = vmatprep.subr.mxu0 0.0
        %644 = vmatpush1.msra.mxu0 0.0
        %645 = vmatprep.subr.mxu0 0.0
        %646 = vmatpush1.msra.mxu0 0.0
        %647 = vmatprep.subr.mxu0 0.0
        %648 = vmatpush1.msra.mxu0 0.0
        %649 = vmatprep.subr.mxu0 0.0
        %650 = vmatpush1.msra.mxu0 0.0
        %651 = vmatprep.subr.mxu0 0.0
        %652 = vmatpush1.msra.mxu0 0.0
        %653 = vmatprep.subr.mxu0 0.0
        %654 = vmatpush1.msra.mxu0 0.0
        %655 = vmatprep.subr.mxu0 0.0
        %656 = vmatpush1.msra.mxu0 0.0
        %657 = vmatprep.subr.mxu0 0.0
        %658 = vmatpush1.msra.mxu0 0.0
        %659 = vmatprep.subr.mxu0 0.0
        %660 = vmatpush1.msra.mxu0 0.0
        %661 = vmatprep.subr.mxu0 0.0
        %662 = vmatpush1.msra.mxu0 0.0
        %663 = vmatprep.subr.mxu0 0.0
        %664 = vmatpush1.msra.mxu0 0.0
        %665 = vmatprep.mubr.f32.mxu0 0.0
        %666 = vmatmul.mubr.f32.gmra.mrb[0].mxu0 %v599
        %v667 = vpop.f32.mrb[0].mxu0
        %v668 = vadd.f32 0.0, %v667
        %v669 = vpop.f32.mrb[0].mxu0
        %670 = vdwg.mxu0
        %672 = vrot.lane.b32.xlu0 %v668, 120
        %v673 = vpop.permute.xlu0 %672
        %675 = vrot.lane.b32.xlu0 %v668, 112
        %v676 = vpop.permute.xlu0 %675
        %678 = vrot.lane.b32.xlu0 %v668, 104
        %v679 = vpop.permute.xlu0 %678
        %v681 = vcombine.low %v668, %v676
        %v682 = vcombine.high %v668, %v676
        %v684 = vunpack.c.l.s4 1983009808
        %v685 = vunpack.c.0.s8 %v684
        %v686 = vlaneseq
        %v687 = vshrl.u32 %v686, 7
        %v688 = vsub.s32 %v685, %v687
        %v689 = vrot.slane %v681, %v688
        %v691 = vunpack.c.l.s4 1983009808
        %v692 = vunpack.c.0.s8 %v691
        %v693 = vlaneseq
        %v694 = vshrl.u32 %v693, 7
        %v695 = vsub.s32 %v692, %v694
        %v696 = vrot.slane %v682, %v695
        %v697 = vcombine.low %v673, %v679
        %v698 = vcombine.high %v673, %v679
        %v700 = vunpack.c.l.s4 1983009808
        %v701 = vunpack.c.0.s8 %v700
        %v702 = vlaneseq
        %v703 = vshrl.u32 %v702, 7
        %v704 = vsub.s32 %v701, %v703
        %v705 = vrot.slane %v697, %v704
        %v707 = vunpack.c.l.s4 1983009808
        %v708 = vunpack.c.0.s8 %v707
        %v709 = vlaneseq
        %v710 = vshrl.u32 %v709, 7
        %v711 = vsub.s32 %v708, %v710
        %v712 = vrot.slane %v698, %v711
        %v713 = vcombine.low %v689, %v705
        %v714 = vcombine.high %v689, %v705
        %v716 = vunpack.c.l.s4 1934713408
        %v717 = vunpack.c.0.s8 %v716
        %v718 = vlaneseq
        %v719 = vshrl.u32 %v718, 7
        %v720 = vsub.s32 %v717, %v719
        %v721 = vrot.slane %v713, %v720
        %v723 = vunpack.c.l.s4 1934713408
        %v724 = vunpack.c.0.s8 %v723
        %v725 = vlaneseq
        %v726 = vshrl.u32 %v725, 7
        %v727 = vsub.s32 %v724, %v726
        %v728 = vrot.slane %v714, %v727
        %v729 = vcombine.low %v696, %v712
        %v730 = vcombine.high %v696, %v712
        %v732 = vunpack.c.l.s4 1934713408
        %v733 = vunpack.c.0.s8 %v732
        %v734 = vlaneseq
        %v735 = vshrl.u32 %v734, 7
        %v736 = vsub.s32 %v733, %v735
        %v737 = vrot.slane %v729, %v736
        %v739 = vunpack.c.l.s4 1934713408
        %v740 = vunpack.c.0.s8 %v739
        %v741 = vlaneseq
        %v742 = vshrl.u32 %v741, 7
        %v743 = vsub.s32 %v740, %v742
        %v744 = vrot.slane %v730, %v743
        %v745 = vcombine.high %v721, 0.0
        %v746 = vcombine.high %v728, 0.0
        %v747 = vcombine.high %v737, 0.0
        %v748 = vcombine.high %v744, 0.0
        %v749 = vcombine.low %v721, %v728
        %v751 = vunpack.c.l.s4 1983009808
        %v752 = vunpack.c.0.s8 %v751
        %v753 = vlaneseq
        %v754 = vshrl.u32 %v753, 7
        %v755 = vsub.s32 %v752, %v754
        %v756 = vrot.slane %v749, %v755
        %v757 = vcombine.low %v745, %v746
        %v759 = vunpack.c.l.s4 1983009808
        %v760 = vunpack.c.0.s8 %v759
        %v761 = vlaneseq
        %v762 = vshrl.u32 %v761, 7
        %v763 = vsub.s32 %v760, %v762
        %v764 = vrot.slane %v757, %v763
        %v765 = vcombine.low %v737, %v744
        %v767 = vunpack.c.l.s4 1983009808
        %v768 = vunpack.c.0.s8 %v767
        %v769 = vlaneseq
        %v770 = vshrl.u32 %v769, 7
        %v771 = vsub.s32 %v768, %v770
        %v772 = vrot.slane %v765, %v771
        %v773 = vcombine.low %v747, %v748
        %v775 = vunpack.c.l.s4 1983009808
        %v776 = vunpack.c.0.s8 %v775
        %v777 = vlaneseq
        %v778 = vshrl.u32 %v777, 7
        %v779 = vsub.s32 %v776, %v778
        %v780 = vrot.slane %v773, %v779
        %v781 = vcombine.low %v756, %v764
        %v782 = vcombine.high %v756, %v764
        %v784 = vunpack.c.l.s4 1934713408
        %v785 = vunpack.c.0.s8 %v784
        %v786 = vlaneseq
        %v787 = vshrl.u32 %v786, 7
        %v788 = vsub.s32 %v785, %v787
        %v789 = vrot.slane %v781, %v788
        %v791 = vunpack.c.l.s4 1934713408
        %v792 = vunpack.c.0.s8 %v791
        %v793 = vlaneseq
        %v794 = vshrl.u32 %v793, 7
        %v795 = vsub.s32 %v792, %v794
        %v796 = vrot.slane %v782, %v795
        %v797 = vcombine.low %v772, %v780
        %v798 = vcombine.high %v772, %v780
        %v800 = vunpack.c.l.s4 1934713408
        %v801 = vunpack.c.0.s8 %v800
        %v802 = vlaneseq
        %v803 = vshrl.u32 %v802, 7
        %v804 = vsub.s32 %v801, %v803
        %v805 = vrot.slane %v797, %v804
        %v807 = vunpack.c.l.s4 1934713408
        %v808 = vunpack.c.0.s8 %v807
        %v809 = vlaneseq
        %v810 = vshrl.u32 %v809, 7
        %v811 = vsub.s32 %v808, %v810
        %v812 = vrot.slane %v798, %v811
        %v813 = vcombine.low %v789, %v805
        %v814 = vcombine.high %v789, %v805
        %v815 = vcombine.low %v796, %v812
        %v816 = vcombine.high %v796, %v812
        %v817 = vld [vmem:[%s530] sm:$0xff]
        %v818 = vld [vmem:[%s4] sm:$0xff]
        %v819 = vld [vmem:[%s4 + $0x8] sm:$0xff]
        %v820 = vld [vmem:[%s4 + $0x10] sm:$0xff]
        %v821 = vld [vmem:[%s4 + $0x18] sm:$0xff]
        %v823 = vsel %vm597, %v817, 0
        %825 = vmatprep.subr.mxu0 0.0
        %826 = vmatpush1.msra.mxu0 %v818
        %827 = vmatprep.subr.mxu0 0.0
        %828 = vmatpush1.msra.mxu0 %v819
        %829 = vmatprep.subr.mxu0 0.0
        %830 = vmatpush1.msra.mxu0 %v820
        %831 = vmatprep.subr.mxu0 0.0
        %832 = vmatpush1.msra.mxu0 %v821
        %833 = vmatprep.subr.mxu0 0.0
        %834 = vmatpush1.msra.mxu0 0.0
        %835 = vmatprep.subr.mxu0 0.0
        %836 = vmatpush1.msra.mxu0 0.0
        %837 = vmatprep.subr.mxu0 0.0
        %838 = vmatpush1.msra.mxu0 0.0
        %839 = vmatprep.subr.mxu0 0.0
        %840 = vmatpush1.msra.mxu0 0.0
        %841 = vmatprep.subr.mxu0 0.0
        %842 = vmatpush1.msra.mxu0 0.0
        %843 = vmatprep.subr.mxu0 0.0
        %844 = vmatpush1.msra.mxu0 0.0
        %845 = vmatprep.subr.mxu0 0.0
        %846 = vmatpush1.msra.mxu0 0.0
        %847 = vmatprep.subr.mxu0 0.0
        %848 = vmatpush1.msra.mxu0 0.0
        %849 = vmatprep.subr.mxu0 0.0
        %850 = vmatpush1.msra.mxu0 0.0
        %851 = vmatprep.subr.mxu0 0.0
        %852 = vmatpush1.msra.mxu0 0.0
        %853 = vmatprep.subr.mxu0 0.0
        %854 = vmatpush1.msra.mxu0 0.0
        %855 = vmatprep.subr.mxu0 0.0
        %856 = vmatpush1.msra.mxu0 0.0
        %857 = vmatprep.subr.mxu0 0.0
        %858 = vmatpush1.msra.mxu0 0.0
        %859 = vmatprep.subr.mxu0 0.0
        %860 = vmatpush1.msra.mxu0 0.0
        %861 = vmatprep.subr.mxu0 0.0
        %862 = vmatpush1.msra.mxu0 0.0
        %863 = vmatprep.subr.mxu0 0.0
        %864 = vmatpush1.msra.mxu0 0.0
        %865 = vmatprep.subr.mxu0 0.0
        %866 = vmatpush1.msra.mxu0 0.0
        %867 = vmatprep.subr.mxu0 0.0
        %868 = vmatpush1.msra.mxu0 0.0
        %869 = vmatprep.subr.mxu0 0.0
        %870 = vmatpush1.msra.mxu0 0.0
        %871 = vmatprep.subr.mxu0 0.0
        %872 = vmatpush1.msra.mxu0 0.0
        %873 = vmatprep.subr.mxu0 0.0
        %874 = vmatpush1.msra.mxu0 0.0
        %875 = vmatprep.subr.mxu0 0.0
        %876 = vmatpush1.msra.mxu0 0.0
        %877 = vmatprep.subr.mxu0 0.0
        %878 = vmatpush1.msra.mxu0 0.0
        %879 = vmatprep.subr.mxu0 0.0
        %880 = vmatpush1.msra.mxu0 0.0
        %881 = vmatprep.subr.mxu0 0.0
        %882 = vmatpush1.msra.mxu0 0.0
        %883 = vmatprep.subr.mxu0 0.0
        %884 = vmatpush1.msra.mxu0 0.0
        %885 = vmatprep.subr.mxu0 0.0
        %886 = vmatpush1.msra.mxu0 0.0
        %887 = vmatprep.subr.mxu0 0.0
        %888 = vmatpush1.msra.mxu0 0.0
        %889 = vmatprep.mubr.f32.mxu0 0.0
        %890 = vmatmul.mubr.f32.gmra.mrb[0].mxu0 %v823
        %v891 = vpop.f32.mrb[0].mxu0
        %v892 = vadd.f32 0.0, %v891
        %v893 = vpop.f32.mrb[0].mxu0
        %894 = vdwg.mxu0
        %896 = vrot.lane.b32.xlu0 %v892, 120
        %v897 = vpop.permute.xlu0 %896
        %899 = vrot.lane.b32.xlu0 %v892, 112
        %v900 = vpop.permute.xlu0 %899
        %902 = vrot.lane.b32.xlu0 %v892, 104
        %v903 = vpop.permute.xlu0 %902
        %v905 = vcombine.low %v892, %v900
        %v906 = vcombine.high %v892, %v900
        %v908 = vunpack.c.l.s4 1983009808
        %v909 = vunpack.c.0.s8 %v908
        %v910 = vlaneseq
        %v911 = vshrl.u32 %v910, 7
        %v912 = vsub.s32 %v909, %v911
        %v913 = vrot.slane %v905, %v912
        %v915 = vunpack.c.l.s4 1983009808
        %v916 = vunpack.c.0.s8 %v915
        %v917 = vlaneseq
        %v918 = vshrl.u32 %v917, 7
        %v919 = vsub.s32 %v916, %v918
        %v920 = vrot.slane %v906, %v919
        %v921 = vcombine.low %v897, %v903
        %v922 = vcombine.high %v897, %v903
        %v924 = vunpack.c.l.s4 1983009808
        %v925 = vunpack.c.0.s8 %v924
        %v926 = vlaneseq
        %v927 = vshrl.u32 %v926, 7
        %v928 = vsub.s32 %v925, %v927
        %v929 = vrot.slane %v921, %v928
        %v931 = vunpack.c.l.s4 1983009808
        %v932 = vunpack.c.0.s8 %v931
        %v933 = vlaneseq
        %v934 = vshrl.u32 %v933, 7
        %v935 = vsub.s32 %v932, %v934
        %v936 = vrot.slane %v922, %v935
        %v937 = vcombine.low %v913, %v929
        %v938 = vcombine.high %v913, %v929
        %v940 = vunpack.c.l.s4 1934713408
        %v941 = vunpack.c.0.s8 %v940
        %v942 = vlaneseq
        %v943 = vshrl.u32 %v942, 7
        %v944 = vsub.s32 %v941, %v943
        %v945 = vrot.slane %v937, %v944
        %v947 = vunpack.c.l.s4 1934713408
        %v948 = vunpack.c.0.s8 %v947
        %v949 = vlaneseq
        %v950 = vshrl.u32 %v949, 7
        %v951 = vsub.s32 %v948, %v950
        %v952 = vrot.slane %v938, %v951
        %v953 = vcombine.low %v920, %v936
        %v954 = vcombine.high %v920, %v936
        %v956 = vunpack.c.l.s4 1934713408
        %v957 = vunpack.c.0.s8 %v956
        %v958 = vlaneseq
        %v959 = vshrl.u32 %v958, 7
        %v960 = vsub.s32 %v957, %v959
        %v961 = vrot.slane %v953, %v960
        %v963 = vunpack.c.l.s4 1934713408
        %v964 = vunpack.c.0.s8 %v963
        %v965 = vlaneseq
        %v966 = vshrl.u32 %v965, 7
        %v967 = vsub.s32 %v964, %v966
        %v968 = vrot.slane %v954, %v967
        %v969 = vcombine.high %v945, 0.0
        %v970 = vcombine.high %v952, 0.0
        %v971 = vcombine.high %v961, 0.0
        %v972 = vcombine.high %v968, 0.0
        %v973 = vcombine.low %v945, %v952
        %v975 = vunpack.c.l.s4 1983009808
        %v976 = vunpack.c.0.s8 %v975
        %v977 = vlaneseq
        %v978 = vshrl.u32 %v977, 7
        %v979 = vsub.s32 %v976, %v978
        %v980 = vrot.slane %v973, %v979
        %v981 = vcombine.low %v969, %v970
        %v983 = vunpack.c.l.s4 1983009808
        %v984 = vunpack.c.0.s8 %v983
        %v985 = vlaneseq
        %v986 = vshrl.u32 %v985, 7
        %v987 = vsub.s32 %v984, %v986
        %v988 = vrot.slane %v981, %v987
        %v989 = vcombine.low %v961, %v968
        %v991 = vunpack.c.l.s4 1983009808
        %v992 = vunpack.c.0.s8 %v991
        %v993 = vlaneseq
        %v994 = vshrl.u32 %v993, 7
        %v995 = vsub.s32 %v992, %v994
        %v996 = vrot.slane %v989, %v995
        %v997 = vcombine.low %v971, %v972
        %v999 = vunpack.c.l.s4 1983009808
        %v1000 = vunpack.c.0.s8 %v999
        %v1001 = vlaneseq
        %v1002 = vshrl.u32 %v1001, 7
        %v1003 = vsub.s32 %v1000, %v1002
        %v1004 = vrot.slane %v997, %v1003
        %v1005 = vcombine.low %v980, %v988
        %v1006 = vcombine.high %v980, %v988
        %v1008 = vunpack.c.l.s4 1934713408
        %v1009 = vunpack.c.0.s8 %v1008
        %v1010 = vlaneseq
        %v1011 = vshrl.u32 %v1010, 7
        %v1012 = vsub.s32 %v1009, %v1011
        %v1013 = vrot.slane %v1005, %v1012
        %v1015 = vunpack.c.l.s4 1934713408
        %v1016 = vunpack.c.0.s8 %v1015
        %v1017 = vlaneseq
        %v1018 = vshrl.u32 %v1017, 7
        %v1019 = vsub.s32 %v1016, %v1018
        %v1020 = vrot.slane %v1006, %v1019
        %v1021 = vcombine.low %v996, %v1004
        %v1022 = vcombine.high %v996, %v1004
        %v1024 = vunpack.c.l.s4 1934713408
        %v1025 = vunpack.c.0.s8 %v1024
        %v1026 = vlaneseq
        %v1027 = vshrl.u32 %v1026, 7
        %v1028 = vsub.s32 %v1025, %v1027
        %v1029 = vrot.slane %v1021, %v1028
        %v1031 = vunpack.c.l.s4 1934713408
        %v1032 = vunpack.c.0.s8 %v1031
        %v1033 = vlaneseq
        %v1034 = vshrl.u32 %v1033, 7
        %v1035 = vsub.s32 %v1032, %v1034
        %v1036 = vrot.slane %v1022, %v1035
        %v1037 = vcombine.low %v1013, %v1029
        %v1038 = vcombine.high %v1013, %v1029
        %v1039 = vcombine.low %v1020, %v1036
        %v1040 = vcombine.high %v1020, %v1036
        %1041 = vrot.lane.b32.xlu0 %v892, 96
        %v1042 = vpop.permute.xlu0 %1041
        %1043 = vrot.lane.b32.xlu0 %v897, 96
        %v1044 = vpop.permute.xlu0 %1043
        %1045 = vrot.lane.b32.xlu0 %v900, 96
        %v1046 = vpop.permute.xlu0 %1045
        %1047 = vrot.lane.b32.xlu0 %v903, 96
        %v1048 = vpop.permute.xlu0 %1047
        %v1053 = vcombine.low %v1042, %v1046
        %v1054 = vcombine.high %v1042, %v1046
        %v1056 = vunpack.c.l.s4 1983009808
        %v1057 = vunpack.c.0.s8 %v1056
        %v1058 = vlaneseq
        %v1059 = vshrl.u32 %v1058, 7
        %v1060 = vsub.s32 %v1057, %v1059
        %v1061 = vrot.slane %v1053, %v1060
        %v1063 = vunpack.c.l.s4 1983009808
        %v1064 = vunpack.c.0.s8 %v1063
        %v1065 = vlaneseq
        %v1066 = vshrl.u32 %v1065, 7
        %v1067 = vsub.s32 %v1064, %v1066
        %v1068 = vrot.slane %v1054, %v1067
        %v1069 = vcombine.low %v1044, %v1048
        %v1070 = vcombine.high %v1044, %v1048
        %v1072 = vunpack.c.l.s4 1983009808
        %v1073 = vunpack.c.0.s8 %v1072
        %v1074 = vlaneseq
        %v1075 = vshrl.u32 %v1074, 7
        %v1076 = vsub.s32 %v1073, %v1075
        %v1077 = vrot.slane %v1069, %v1076
        %v1079 = vunpack.c.l.s4 1983009808
        %v1080 = vunpack.c.0.s8 %v1079
        %v1081 = vlaneseq
        %v1082 = vshrl.u32 %v1081, 7
        %v1083 = vsub.s32 %v1080, %v1082
        %v1084 = vrot.slane %v1070, %v1083
        %v1085 = vcombine.low %v1061, %v1077
        %v1086 = vcombine.high %v1061, %v1077
        %v1088 = vunpack.c.l.s4 1934713408
        %v1089 = vunpack.c.0.s8 %v1088
        %v1090 = vlaneseq
        %v1091 = vshrl.u32 %v1090, 7
        %v1092 = vsub.s32 %v1089, %v1091
        %v1093 = vrot.slane %v1085, %v1092
        %v1095 = vunpack.c.l.s4 1934713408
        %v1096 = vunpack.c.0.s8 %v1095
        %v1097 = vlaneseq
        %v1098 = vshrl.u32 %v1097, 7
        %v1099 = vsub.s32 %v1096, %v1098
        %v1100 = vrot.slane %v1086, %v1099
        %v1101 = vcombine.low %v1068, %v1084
        %v1102 = vcombine.high %v1068, %v1084
        %v1104 = vunpack.c.l.s4 1934713408
        %v1105 = vunpack.c.0.s8 %v1104
        %v1106 = vlaneseq
        %v1107 = vshrl.u32 %v1106, 7
        %v1108 = vsub.s32 %v1105, %v1107
        %v1109 = vrot.slane %v1101, %v1108
        %v1111 = vunpack.c.l.s4 1934713408
        %v1112 = vunpack.c.0.s8 %v1111
        %v1113 = vlaneseq
        %v1114 = vshrl.u32 %v1113, 7
        %v1115 = vsub.s32 %v1112, %v1114
        %v1116 = vrot.slane %v1102, %v1115
        %v1117 = vcombine.high %v1093, 0.0
        %v1118 = vcombine.high %v1100, 0.0
        %v1119 = vcombine.high %v1109, 0.0
        %v1120 = vcombine.high %v1116, 0.0
        %v1121 = vcombine.low %v1093, %v1100
        %v1123 = vunpack.c.l.s4 1983009808
        %v1124 = vunpack.c.0.s8 %v1123
        %v1125 = vlaneseq
        %v1126 = vshrl.u32 %v1125, 7
        %v1127 = vsub.s32 %v1124, %v1126
        %v1128 = vrot.slane %v1121, %v1127
        %v1129 = vcombine.low %v1117, %v1118
        %v1131 = vunpack.c.l.s4 1983009808
        %v1132 = vunpack.c.0.s8 %v1131
        %v1133 = vlaneseq
        %v1134 = vshrl.u32 %v1133, 7
        %v1135 = vsub.s32 %v1132, %v1134
        %v1136 = vrot.slane %v1129, %v1135
        %v1137 = vcombine.low %v1109, %v1116
        %v1139 = vunpack.c.l.s4 1983009808
        %v1140 = vunpack.c.0.s8 %v1139
        %v1141 = vlaneseq
        %v1142 = vshrl.u32 %v1141, 7
        %v1143 = vsub.s32 %v1140, %v1142
        %v1144 = vrot.slane %v1137, %v1143
        %v1145 = vcombine.low %v1119, %v1120
        %v1147 = vunpack.c.l.s4 1983009808
        %v1148 = vunpack.c.0.s8 %v1147
        %v1149 = vlaneseq
        %v1150 = vshrl.u32 %v1149, 7
        %v1151 = vsub.s32 %v1148, %v1150
        %v1152 = vrot.slane %v1145, %v1151
        %v1153 = vcombine.low %v1128, %v1136
        %v1154 = vcombine.high %v1128, %v1136
        %v1156 = vunpack.c.l.s4 1934713408
        %v1157 = vunpack.c.0.s8 %v1156
        %v1158 = vlaneseq
        %v1159 = vshrl.u32 %v1158, 7
        %v1160 = vsub.s32 %v1157, %v1159
        %v1161 = vrot.slane %v1153, %v1160
        %v1163 = vunpack.c.l.s4 1934713408
        %v1164 = vunpack.c.0.s8 %v1163
        %v1165 = vlaneseq
        %v1166 = vshrl.u32 %v1165, 7
        %v1167 = vsub.s32 %v1164, %v1166
        %v1168 = vrot.slane %v1154, %v1167
        %v1169 = vcombine.low %v1144, %v1152
        %v1170 = vcombine.high %v1144, %v1152
        %v1172 = vunpack.c.l.s4 1934713408
        %v1173 = vunpack.c.0.s8 %v1172
        %v1174 = vlaneseq
        %v1175 = vshrl.u32 %v1174, 7
        %v1176 = vsub.s32 %v1173, %v1175
        %v1177 = vrot.slane %v1169, %v1176
        %v1179 = vunpack.c.l.s4 1934713408
        %v1180 = vunpack.c.0.s8 %v1179
        %v1181 = vlaneseq
        %v1182 = vshrl.u32 %v1181, 7
        %v1183 = vsub.s32 %v1180, %v1182
        %v1184 = vrot.slane %v1170, %v1183
        %v1185 = vcombine.low %v1161, %v1177
        %v1186 = vcombine.high %v1161, %v1177
        %v1187 = vcombine.low %v1168, %v1184
        %v1188 = vcombine.high %v1168, %v1184
        %v1189 = vld [vmem:[%s591] sm:$0x1]
        %vm1190 = vcmp.eq.f32.partialorder %v1189, 0.0
        %v1191 = vsel %vm1190, -10000.0, 0.0
        %v1193 = vlaneseq
        %v1194 = vshrl.u32 %v1193, 7
        %v1195 = vsub.s32 0, %v1194
        %v1196 = vrot.slane %v1191, %v1195
        %vm1198 = vcmask 64512
        %v1200 = vsel %vm1198, %v813, 0
        %v1203 = vsel %vm1198, %v1037, 0
        %1205 = vmatprep.subr.mxu0 0.0
        %1206 = vmatpush1.xpose.msra.mxu0 %v1203
        %1207 = vmatprep.subr.mxu0 0.0
        %1208 = vmatpush1.xpose.msra.mxu0 0.0
        %1209 = vmatprep.subr.mxu0 0.0
        %1210 = vmatpush1.xpose.msra.mxu0 0.0
        %1211 = vmatprep.subr.mxu0 0.0
        %1212 = vmatpush1.xpose.msra.mxu0 0.0
        %1213 = vmatprep.subr.mxu0 0.0
        %1214 = vmatpush1.xpose.msra.mxu0 0.0
        %1215 = vmatprep.subr.mxu0 0.0
        %1216 = vmatpush1.xpose.msra.mxu0 0.0
        %1217 = vmatprep.subr.mxu0 0.0
        %1218 = vmatpush1.xpose.msra.mxu0 0.0
        %1219 = vmatprep.subr.mxu0 0.0
        %1220 = vmatpush1.xpose.msra.mxu0 0.0
        %1221 = vmatprep.subr.mxu0 0.0
        %1222 = vmatpush1.xpose.msra.mxu0 0.0
        %1223 = vmatprep.subr.mxu0 0.0
        %1224 = vmatpush1.xpose.msra.mxu0 0.0
        %1225 = vmatprep.subr.mxu0 0.0
        %1226 = vmatpush1.xpose.msra.mxu0 0.0
        %1227 = vmatprep.subr.mxu0 0.0
        %1228 = vmatpush1.xpose.msra.mxu0 0.0
        %1229 = vmatprep.subr.mxu0 0.0
        %1230 = vmatpush1.xpose.msra.mxu0 0.0
        %1231 = vmatprep.subr.mxu0 0.0
        %1232 = vmatpush1.xpose.msra.mxu0 0.0
        %1233 = vmatprep.subr.mxu0 0.0
        %1234 = vmatpush1.xpose.msra.mxu0 0.0
        %1235 = vmatprep.subr.mxu0 0.0
        %1236 = vmatpush1.xpose.msra.mxu0 0.0
        %1237 = vmatprep.subr.mxu0 0.0
        %1238 = vmatpush1.xpose.msra.mxu0 0.0
        %1239 = vmatprep.subr.mxu0 0.0
        %1240 = vmatpush1.xpose.msra.mxu0 0.0
        %1241 = vmatprep.subr.mxu0 0.0
        %1242 = vmatpush1.xpose.msra.mxu0 0.0
        %1243 = vmatprep.subr.mxu0 0.0
        %1244 = vmatpush1.xpose.msra.mxu0 0.0
        %1245 = vmatprep.subr.mxu0 0.0
        %1246 = vmatpush1.xpose.msra.mxu0 0.0
        %1247 = vmatprep.subr.mxu0 0.0
        %1248 = vmatpush1.xpose.msra.mxu0 0.0
        %1249 = vmatprep.subr.mxu0 0.0
        %1250 = vmatpush1.xpose.msra.mxu0 0.0
        %1251 = vmatprep.subr.mxu0 0.0
        %1252 = vmatpush1.xpose.msra.mxu0 0.0
        %1253 = vmatprep.subr.mxu0 0.0
        %1254 = vmatpush1.xpose.msra.mxu0 0.0
        %1255 = vmatprep.subr.mxu0 0.0
        %1256 = vmatpush1.xpose.msra.mxu0 0.0
        %1257 = vmatprep.subr.mxu0 0.0
        %1258 = vmatpush1.xpose.msra.mxu0 0.0
        %1259 = vmatprep.subr.mxu0 0.0
        %1260 = vmatpush1.xpose.msra.mxu0 0.0
        %1261 = vmatprep.subr.mxu0 0.0
        %1262 = vmatpush1.xpose.msra.mxu0 0.0
        %1263 = vmatprep.subr.mxu0 0.0
        %1264 = vmatpush1.xpose.msra.mxu0 0.0
        %1265 = vmatprep.subr.mxu0 0.0
        %1266 = vmatpush1.xpose.msra.mxu0 0.0
        %1267 = vmatprep.subr.mxu0 0.0
        %1268 = vmatpush1.xpose.msra.mxu0 0.0
        %1269 = vmatprep.mubr.f32.mxu0 0.0
        %1270 = vmatmul.mubr.f32.gmra.mrb[0].mxu0 %v1200
        %v1271 = vpop.f32.mrb[0].mxu0
        %v1272 = vadd.f32 %v1196, %v1271
        %v1273 = vpop.f32.mrb[0].mxu0
        %1274 = vdwg.mxu0
        %v1276 = vsel %vm1198, %v814, 0
        %v1279 = vsel %vm1198, %v1038, 0
        %1281 = vmatprep.subr.mxu0 0.0
        %1282 = vmatpush1.xpose.msra.mxu0 %v1279
        %1283 = vmatprep.subr.mxu0 0.0
        %1284 = vmatpush1.xpose.msra.mxu0 0.0
        %1285 = vmatprep.subr.mxu0 0.0
        %1286 = vmatpush1.xpose.msra.mxu0 0.0
        %1287 = vmatprep.subr.mxu0 0.0
        %1288 = vmatpush1.xpose.msra.mxu0 0.0
        %1289 = vmatprep.subr.mxu0 0.0
        %1290 = vmatpush1.xpose.msra.mxu0 0.0
        %1291 = vmatprep.subr.mxu0 0.0
        %1292 = vmatpush1.xpose.msra.mxu0 0.0
        %1293 = vmatprep.subr.mxu0 0.0
        %1294 = vmatpush1.xpose.msra.mxu0 0.0
        %1295 = vmatprep.subr.mxu0 0.0
        %1296 = vmatpush1.xpose.msra.mxu0 0.0
        %1297 = vmatprep.subr.mxu0 0.0
        %1298 = vmatpush1.xpose.msra.mxu0 0.0
        %1299 = vmatprep.subr.mxu0 0.0
        %1300 = vmatpush1.xpose.msra.mxu0 0.0
        %1301 = vmatprep.subr.mxu0 0.0
        %1302 = vmatpush1.xpose.msra.mxu0 0.0
        %1303 = vmatprep.subr.mxu0 0.0
        %1304 = vmatpush1.xpose.msra.mxu0 0.0
        %1305 = vmatprep.subr.mxu0 0.0
        %1306 = vmatpush1.xpose.msra.mxu0 0.0
        %1307 = vmatprep.subr.mxu0 0.0
        %1308 = vmatpush1.xpose.msra.mxu0 0.0
        %1309 = vmatprep.subr.mxu0 0.0
        %1310 = vmatpush1.xpose.msra.mxu0 0.0
        %1311 = vmatprep.subr.mxu0 0.0
        %1312 = vmatpush1.xpose.msra.mxu0 0.0
        %1313 = vmatprep.subr.mxu0 0.0
        %1314 = vmatpush1.xpose.msra.mxu0 0.0
        %1315 = vmatprep.subr.mxu0 0.0
        %1316 = vmatpush1.xpose.msra.mxu0 0.0
        %1317 = vmatprep.subr.mxu0 0.0
        %1318 = vmatpush1.xpose.msra.mxu0 0.0
        %1319 = vmatprep.subr.mxu0 0.0
        %1320 = vmatpush1.xpose.msra.mxu0 0.0
        %1321 = vmatprep.subr.mxu0 0.0
        %1322 = vmatpush1.xpose.msra.mxu0 0.0
        %1323 = vmatprep.subr.mxu0 0.0
        %1324 = vmatpush1.xpose.msra.mxu0 0.0
        %1325 = vmatprep.subr.mxu0 0.0
        %1326 = vmatpush1.xpose.msra.mxu0 0.0
        %1327 = vmatprep.subr.mxu0 0.0
        %1328 = vmatpush1.xpose.msra.mxu0 0.0
        %1329 = vmatprep.subr.mxu0 0.0
        %1330 = vmatpush1.xpose.msra.mxu0 0.0
        %1331 = vmatprep.subr.mxu0 0.0
        %1332 = vmatpush1.xpose.msra.mxu0 0.0
        %1333 = vmatprep.subr.mxu0 0.0
        %1334 = vmatpush1.xpose.msra.mxu0 0.0
        %1335 = vmatprep.subr.mxu0 0.0
        %1336 = vmatpush1.xpose.msra.mxu0 0.0
        %1337 = vmatprep.subr.mxu0 0.0
        %1338 = vmatpush1.xpose.msra.mxu0 0.0
        %1339 = vmatprep.subr.mxu0 0.0
        %1340 = vmatpush1.xpose.msra.mxu0 0.0
        %1341 = vmatprep.subr.mxu0 0.0
        %1342 = vmatpush1.xpose.msra.mxu0 0.0
        %1343 = vmatprep.subr.mxu0 0.0
        %1344 = vmatpush1.xpose.msra.mxu0 0.0
        %1345 = vmatprep.mubr.f32.mxu0 0.0
        %1346 = vmatmul.mubr.f32.gmra.mrb[0].mxu0 %v1276
        %v1347 = vpop.f32.mrb[0].mxu0
        %v1348 = vadd.f32 %v1196, %v1347
        %v1349 = vpop.f32.mrb[0].mxu0
        %1350 = vdwg.mxu0
        %v1352 = vsel %vm1198, %v815, 0
        %v1355 = vsel %vm1198, %v1039, 0
        %1357 = vmatprep.subr.mxu0 0.0
        %1358 = vmatpush1.xpose.msra.mxu0 %v1355
        %1359 = vmatprep.subr.mxu0 0.0
        %1360 = vmatpush1.xpose.msra.mxu0 0.0
        %1361 = vmatprep.subr.mxu0 0.0
        %1362 = vmatpush1.xpose.msra.mxu0 0.0
        %1363 = vmatprep.subr.mxu0 0.0
        %1364 = vmatpush1.xpose.msra.mxu0 0.0
        %1365 = vmatprep.subr.mxu0 0.0
        %1366 = vmatpush1.xpose.msra.mxu0 0.0
        %1367 = vmatprep.subr.mxu0 0.0
        %1368 = vmatpush1.xpose.msra.mxu0 0.0
        %1369 = vmatprep.subr.mxu0 0.0
        %1370 = vmatpush1.xpose.msra.mxu0 0.0
        %1371 = vmatprep.subr.mxu0 0.0
        %1372 = vmatpush1.xpose.msra.mxu0 0.0
        %1373 = vmatprep.subr.mxu0 0.0
        %1374 = vmatpush1.xpose.msra.mxu0 0.0
        %1375 = vmatprep.subr.mxu0 0.0
        %1376 = vmatpush1.xpose.msra.mxu0 0.0
        %1377 = vmatprep.subr.mxu0 0.0
        %1378 = vmatpush1.xpose.msra.mxu0 0.0
        %1379 = vmatprep.subr.mxu0 0.0
        %1380 = vmatpush1.xpose.msra.mxu0 0.0
        %1381 = vmatprep.subr.mxu0 0.0
        %1382 = vmatpush1.xpose.msra.mxu0 0.0
        %1383 = vmatprep.subr.mxu0 0.0
        %1384 = vmatpush1.xpose.msra.mxu0 0.0
        %1385 = vmatprep.subr.mxu0 0.0
        %1386 = vmatpush1.xpose.msra.mxu0 0.0
        %1387 = vmatprep.subr.mxu0 0.0
        %1388 = vmatpush1.xpose.msra.mxu0 0.0
        %1389 = vmatprep.subr.mxu0 0.0
        %1390 = vmatpush1.xpose.msra.mxu0 0.0
        %1391 = vmatprep.subr.mxu0 0.0
        %1392 = vmatpush1.xpose.msra.mxu0 0.0
        %1393 = vmatprep.subr.mxu0 0.0
        %1394 = vmatpush1.xpose.msra.mxu0 0.0
        %1395 = vmatprep.subr.mxu0 0.0
        %1396 = vmatpush1.xpose.msra.mxu0 0.0
        %1397 = vmatprep.subr.mxu0 0.0
        %1398 = vmatpush1.xpose.msra.mxu0 0.0
        %1399 = vmatprep.subr.mxu0 0.0
        %1400 = vmatpush1.xpose.msra.mxu0 0.0
        %1401 = vmatprep.subr.mxu0 0.0
        %1402 = vmatpush1.xpose.msra.mxu0 0.0
        %1403 = vmatprep.subr.mxu0 0.0
        %1404 = vmatpush1.xpose.msra.mxu0 0.0
        %1405 = vmatprep.subr.mxu0 0.0
        %1406 = vmatpush1.xpose.msra.mxu0 0.0
        %1407 = vmatprep.subr.mxu0 0.0
        %1408 = vmatpush1.xpose.msra.mxu0 0.0
        %1409 = vmatprep.subr.mxu0 0.0
        %1410 = vmatpush1.xpose.msra.mxu0 0.0
        %1411 = vmatprep.subr.mxu0 0.0
        %1412 = vmatpush1.xpose.msra.mxu0 0.0
        %1413 = vmatprep.subr.mxu0 0.0
        %1414 = vmatpush1.xpose.msra.mxu0 0.0
        %1415 = vmatprep.subr.mxu0 0.0
        %1416 = vmatpush1.xpose.msra.mxu0 0.0
        %1417 = vmatprep.subr.mxu0 0.0
        %1418 = vmatpush1.xpose.msra.mxu0 0.0
        %1419 = vmatprep.subr.mxu0 0.0
        %1420 = vmatpush1.xpose.msra.mxu0 0.0
        %1421 = vmatprep.mubr.f32.mxu0 0.0
        %1422 = vmatmul.mubr.f32.gmra.mrb[0].mxu0 %v1352
        %v1423 = vpop.f32.mrb[0].mxu0
        %v1424 = vadd.f32 %v1196, %v1423
        %v1425 = vpop.f32.mrb[0].mxu0
        %1426 = vdwg.mxu0
        %v1428 = vsel %vm1198, %v816, 0
        %v1431 = vsel %vm1198, %v1040, 0
        %1433 = vmatprep.subr.mxu0 0.0
        %1434 = vmatpush1.xpose.msra.mxu0 %v1431
        %1435 = vmatprep.subr.mxu0 0.0
        %1436 = vmatpush1.xpose.msra.mxu0 0.0
        %1437 = vmatprep.subr.mxu0 0.0
        %1438 = vmatpush1.xpose.msra.mxu0 0.0
        %1439 = vmatprep.subr.mxu0 0.0
        %1440 = vmatpush1.xpose.msra.mxu0 0.0
        %1441 = vmatprep.subr.mxu0 0.0
        %1442 = vmatpush1.xpose.msra.mxu0 0.0
        %1443 = vmatprep.subr.mxu0 0.0
        %1444 = vmatpush1.xpose.msra.mxu0 0.0
        %1445 = vmatprep.subr.mxu0 0.0
        %1446 = vmatpush1.xpose.msra.mxu0 0.0
        %1447 = vmatprep.subr.mxu0 0.0
        %1448 = vmatpush1.xpose.msra.mxu0 0.0
        %1449 = vmatprep.subr.mxu0 0.0
        %1450 = vmatpush1.xpose.msra.mxu0 0.0
        %1451 = vmatprep.subr.mxu0 0.0
        %1452 = vmatpush1.xpose.msra.mxu0 0.0
        %1453 = vmatprep.subr.mxu0 0.0
        %1454 = vmatpush1.xpose.msra.mxu0 0.0
        %1455 = vmatprep.subr.mxu0 0.0
        %1456 = vmatpush1.xpose.msra.mxu0 0.0
        %1457 = vmatprep.subr.mxu0 0.0
        %1458 = vmatpush1.xpose.msra.mxu0 0.0
        %1459 = vmatprep.subr.mxu0 0.0
        %1460 = vmatpush1.xpose.msra.mxu0 0.0
        %1461 = vmatprep.subr.mxu0 0.0
        %1462 = vmatpush1.xpose.msra.mxu0 0.0
        %1463 = vmatprep.subr.mxu0 0.0
        %1464 = vmatpush1.xpose.msra.mxu0 0.0
        %1465 = vmatprep.subr.mxu0 0.0
        %1466 = vmatpush1.xpose.msra.mxu0 0.0
        %1467 = vmatprep.subr.mxu0 0.0
        %1468 = vmatpush1.xpose.msra.mxu0 0.0
        %1469 = vmatprep.subr.mxu0 0.0
        %1470 = vmatpush1.xpose.msra.mxu0 0.0
        %1471 = vmatprep.subr.mxu0 0.0
        %1472 = vmatpush1.xpose.msra.mxu0 0.0
        %1473 = vmatprep.subr.mxu0 0.0
        %1474 = vmatpush1.xpose.msra.mxu0 0.0
        %1475 = vmatprep.subr.mxu0 0.0
        %1476 = vmatpush1.xpose.msra.mxu0 0.0
        %1477 = vmatprep.subr.mxu0 0.0
        %1478 = vmatpush1.xpose.msra.mxu0 0.0
        %1479 = vmatprep.subr.mxu0 0.0
        %1480 = vmatpush1.xpose.msra.mxu0 0.0
        %1481 = vmatprep.subr.mxu0 0.0
        %1482 = vmatpush1.xpose.msra.mxu0 0.0
        %1483 = vmatprep.subr.mxu0 0.0
        %1484 = vmatpush1.xpose.msra.mxu0 0.0
        %1485 = vmatprep.subr.mxu0 0.0
        %1486 = vmatpush1.xpose.msra.mxu0 0.0
        %1487 = vmatprep.subr.mxu0 0.0
        %1488 = vmatpush1.xpose.msra.mxu0 0.0
        %1489 = vmatprep.subr.mxu0 0.0
        %1490 = vmatpush1.xpose.msra.mxu0 0.0
        %1491 = vmatprep.subr.mxu0 0.0
        %1492 = vmatpush1.xpose.msra.mxu0 0.0
        %1493 = vmatprep.subr.mxu0 0.0
        %1494 = vmatpush1.xpose.msra.mxu0 0.0
        %1495 = vmatprep.subr.mxu0 0.0
        %1496 = vmatpush1.xpose.msra.mxu0 0.0
        %1497 = vmatprep.mubr.f32.mxu0 0.0
        %1498 = vmatmul.mubr.f32.gmra.mrb[0].mxu0 %v1428
        %v1499 = vpop.f32.mrb[0].mxu0
        %v1500 = vadd.f32 %v1196, %v1499
        %v1501 = vpop.f32.mrb[0].mxu0
        %1502 = vdwg.mxu0
        %v1503 = vsel %vm1198, %v1272, -inf
        %1504 = vmax.xlane.f32.xlu0 %v1503
        %v1505 = vpop.xlane.xlu0 %1504
        %v1506 = vsel %vm1198, %v1348, -inf
        %1507 = vmax.xlane.f32.xlu0 %v1506
        %v1508 = vpop.xlane.xlu0 %1507
        %v1509 = vsel %vm1198, %v1424, -inf
        %1510 = vmax.xlane.f32.xlu0 %v1509
        %v1511 = vpop.xlane.xlu0 %1510
        %v1512 = vsel %vm1198, %v1500, -inf
        %1513 = vmax.xlane.f32.xlu0 %v1512
        %v1514 = vpop.xlane.xlu0 %1513
        %v1515 = vsub.f32 -inf, %v1505
        %v1516 = vsub.f32 -inf, %v1508
        %v1517 = vsub.f32 -inf, %v1511
        %v1518 = vsub.f32 -inf, %v1514
        %v1519 = vmul.f32 %v1515, 1.442695
        %v1520 = vpow.pop %v1519
        %v1521 = vmul.f32 %v1516, 1.442695
        %v1522 = vpow.pop %v1521
        %v1523 = vmul.f32 %v1517, 1.442695
        %v1524 = vpow.pop %v1523
        %v1525 = vmul.f32 %v1518, 1.442695
        %v1526 = vpow.pop %v1525
        %v1527 = vsub.f32 %v1272, %v1505
        %v1528 = vsub.f32 %v1348, %v1508
        %v1529 = vsub.f32 %v1424, %v1511
        %v1530 = vsub.f32 %v1500, %v1514
        %v1531 = vmul.f32 %v1527, 1.442695
        %v1532 = vpow.pop %v1531
        %v1533 = vmul.f32 %v1528, 1.442695
        %v1534 = vpow.pop %v1533
        %v1535 = vmul.f32 %v1529, 1.442695
        %v1536 = vpow.pop %v1535
        %v1537 = vmul.f32 %v1530, 1.442695
        %v1538 = vpow.pop %v1537
        %v1539 = vmul.f32 %v1520, 0.0
        %v1540 = vmul.f32 %v1522, 0.0
        %v1541 = vmul.f32 %v1524, 0.0
        %v1542 = vmul.f32 %v1526, 0.0
        %v1543 = vsel %vm1198, %v1532, 0.0
        %1544 = vadd.xlane.f32.xlu0 %v1543
        %v1545 = vpop.xlane.xlu0 %1544
        %v1546 = vsel %vm1198, %v1534, 0.0
        %1547 = vadd.xlane.f32.xlu0 %v1546
        %v1548 = vpop.xlane.xlu0 %1547
        %v1549 = vsel %vm1198, %v1536, 0.0
        %1550 = vadd.xlane.f32.xlu0 %v1549
        %v1551 = vpop.xlane.xlu0 %1550
        %v1552 = vsel %vm1198, %v1538, 0.0
        %1553 = vadd.xlane.f32.xlu0 %v1552
        %v1554 = vpop.xlane.xlu0 %1553
        %v1555 = vadd.f32 %v1539, %v1545
        %v1556 = vadd.f32 %v1540, %v1548
        %v1557 = vadd.f32 %v1541, %v1551
        %v1558 = vadd.f32 %v1542, %v1554
        %v1560 = vsel %vm1198, %v1532, 0
        %1562 = vmatprep.subr.mxu0 0.0
        %1563 = vmatpush1.msra.mxu0 %v1185
        %1564 = vmatprep.subr.mxu0 0.0
        %1565 = vmatpush1.msra.mxu0 0.0
        %1566 = vmatprep.subr.mxu0 0.0
        %1567 = vmatpush1.msra.mxu0 0.0
        %1568 = vmatprep.subr.mxu0 0.0
        %1569 = vmatpush1.msra.mxu0 0.0
        %1570 = vmatprep.subr.mxu0 0.0
        %1571 = vmatpush1.msra.mxu0 0.0
        %1572 = vmatprep.subr.mxu0 0.0
        %1573 = vmatpush1.msra.mxu0 0.0
        %1574 = vmatprep.subr.mxu0 0.0
        %1575 = vmatpush1.msra.mxu0 0.0
        %1576 = vmatprep.subr.mxu0 0.0
        %1577 = vmatpush1.msra.mxu0 0.0
        %1578 = vmatprep.subr.mxu0 0.0
        %1579 = vmatpush1.msra.mxu0 0.0
        %1580 = vmatprep.subr.mxu0 0.0
        %1581 = vmatpush1.msra.mxu0 0.0
        %1582 = vmatprep.subr.mxu0 0.0
        %1583 = vmatpush1.msra.mxu0 0.0
        %1584 = vmatprep.subr.mxu0 0.0
        %1585 = vmatpush1.msra.mxu0 0.0
        %1586 = vmatprep.subr.mxu0 0.0
        %1587 = vmatpush1.msra.mxu0 0.0
        %1588 = vmatprep.subr.mxu0 0.0
        %1589 = vmatpush1.msra.mxu0 0.0
        %1590 = vmatprep.subr.mxu0 0.0
        %1591 = vmatpush1.msra.mxu0 0.0
        %1592 = vmatprep.subr.mxu0 0.0
        %1593 = vmatpush1.msra.mxu0 0.0
        %1594 = vmatprep.subr.mxu0 0.0
        %1595 = vmatpush1.msra.mxu0 0.0
        %1596 = vmatprep.subr.mxu0 0.0
        %1597 = vmatpush1.msra.mxu0 0.0
        %1598 = vmatprep.subr.mxu0 0.0
        %1599 = vmatpush1.msra.mxu0 0.0
        %1600 = vmatprep.subr.mxu0 0.0
        %1601 = vmatpush1.msra.mxu0 0.0
        %1602 = vmatprep.subr.mxu0 0.0
        %1603 = vmatpush1.msra.mxu0 0.0
        %1604 = vmatprep.subr.mxu0 0.0
        %1605 = vmatpush1.msra.mxu0 0.0
        %1606 = vmatprep.subr.mxu0 0.0
        %1607 = vmatpush1.msra.mxu0 0.0
        %1608 = vmatprep.subr.mxu0 0.0
        %1609 = vmatpush1.msra.mxu0 0.0
        %1610 = vmatprep.subr.mxu0 0.0
        %1611 = vmatpush1.msra.mxu0 0.0
        %1612 = vmatprep.subr.mxu0 0.0
        %1613 = vmatpush1.msra.mxu0 0.0
        %1614 = vmatprep.subr.mxu0 0.0
        %1615 = vmatpush1.msra.mxu0 0.0
        %1616 = vmatprep.subr.mxu0 0.0
        %1617 = vmatpush1.msra.mxu0 0.0
        %1618 = vmatprep.subr.mxu0 0.0
        %1619 = vmatpush1.msra.mxu0 0.0
        %1620 = vmatprep.subr.mxu0 0.0
        %1621 = vmatpush1.msra.mxu0 0.0
        %1622 = vmatprep.subr.mxu0 0.0
        %1623 = vmatpush1.msra.mxu0 0.0
        %1624 = vmatprep.subr.mxu0 0.0
        %1625 = vmatpush1.msra.mxu0 0.0
        %1626 = vmatprep.mubr.f32.mxu0 0.0
        %1627 = vmatmul.mubr.f32.gmra.mrb[0].mxu0 %v1560
        %v1628 = vpop.f32.mrb[0].mxu0
        %v1629 = vadd.f32 0.0, %v1628
        %v1630 = vpop.f32.mrb[0].mxu0
        %1631 = vdwg.mxu0
        %v1633 = vsel %vm1198, %v1534, 0
        %1635 = vmatprep.subr.mxu0 0.0
        %1636 = vmatpush1.msra.mxu0 %v1186
        %1637 = vmatprep.subr.mxu0 0.0
        %1638 = vmatpush1.msra.mxu0 0.0
        %1639 = vmatprep.subr.mxu0 0.0
        %1640 = vmatpush1.msra.mxu0 0.0
        %1641 = vmatprep.subr.mxu0 0.0
        %1642 = vmatpush1.msra.mxu0 0.0
        %1643 = vmatprep.subr.mxu0 0.0
        %1644 = vmatpush1.msra.mxu0 0.0
        %1645 = vmatprep.subr.mxu0 0.0
        %1646 = vmatpush1.msra.mxu0 0.0
        %1647 = vmatprep.subr.mxu0 0.0
        %1648 = vmatpush1.msra.mxu0 0.0
        %1649 = vmatprep.subr.mxu0 0.0
        %1650 = vmatpush1.msra.mxu0 0.0
        %1651 = vmatprep.subr.mxu0 0.0
        %1652 = vmatpush1.msra.mxu0 0.0
        %1653 = vmatprep.subr.mxu0 0.0
        %1654 = vmatpush1.msra.mxu0 0.0
        %1655 = vmatprep.subr.mxu0 0.0
        %1656 = vmatpush1.msra.mxu0 0.0
        %1657 = vmatprep.subr.mxu0 0.0
        %1658 = vmatpush1.msra.mxu0 0.0
        %1659 = vmatprep.subr.mxu0 0.0
        %1660 = vmatpush1.msra.mxu0 0.0
        %1661 = vmatprep.subr.mxu0 0.0
        %1662 = vmatpush1.msra.mxu0 0.0
        %1663 = vmatprep.subr.mxu0 0.0
        %1664 = vmatpush1.msra.mxu0 0.0
        %1665 = vmatprep.subr.mxu0 0.0
        %1666 = vmatpush1.msra.mxu0 0.0
        %1667 = vmatprep.subr.mxu0 0.0
        %1668 = vmatpush1.msra.mxu0 0.0
        %1669 = vmatprep.subr.mxu0 0.0
        %1670 = vmatpush1.msra.mxu0 0.0
        %1671 = vmatprep.subr.mxu0 0.0
        %1672 = vmatpush1.msra.mxu0 0.0
        %1673 = vmatprep.subr.mxu0 0.0
        %1674 = vmatpush1.msra.mxu0 0.0
        %1675 = vmatprep.subr.mxu0 0.0
        %1676 = vmatpush1.msra.mxu0 0.0
        %1677 = vmatprep.subr.mxu0 0.0
        %1678 = vmatpush1.msra.mxu0 0.0
        %1679 = vmatprep.subr.mxu0 0.0
        %1680 = vmatpush1.msra.mxu0 0.0
        %1681 = vmatprep.subr.mxu0 0.0
        %1682 = vmatpush1.msra.mxu0 0.0
        %1683 = vmatprep.subr.mxu0 0.0
        %1684 = vmatpush1.msra.mxu0 0.0
        %1685 = vmatprep.subr.mxu0 0.0
        %1686 = vmatpush1.msra.mxu0 0.0
        %1687 = vmatprep.subr.mxu0 0.0
        %1688 = vmatpush1.msra.mxu0 0.0
        %1689 = vmatprep.subr.mxu0 0.0
        %1690 = vmatpush1.msra.mxu0 0.0
        %1691 = vmatprep.subr.mxu0 0.0
        %1692 = vmatpush1.msra.mxu0 0.0
        %1693 = vmatprep.subr.mxu0 0.0
        %1694 = vmatpush1.msra.mxu0 0.0
        %1695 = vmatprep.subr.mxu0 0.0
        %1696 = vmatpush1.msra.mxu0 0.0
        %1697 = vmatprep.subr.mxu0 0.0
        %1698 = vmatpush1.msra.mxu0 0.0
        %1699 = vmatprep.mubr.f32.mxu0 0.0
        %1700 = vmatmul.mubr.f32.gmra.mrb[0].mxu0 %v1633
        %v1701 = vpop.f32.mrb[0].mxu0
        %v1702 = vadd.f32 0.0, %v1701
        %v1703 = vpop.f32.mrb[0].mxu0
        %1704 = vdwg.mxu0
        %v1706 = vsel %vm1198, %v1536, 0
        %1708 = vmatprep.subr.mxu0 0.0
        %1709 = vmatpush1.msra.mxu0 %v1187
        %1710 = vmatprep.subr.mxu0 0.0
        %1711 = vmatpush1.msra.mxu0 0.0
        %1712 = vmatprep.subr.mxu0 0.0
        %1713 = vmatpush1.msra.mxu0 0.0
        %1714 = vmatprep.subr.mxu0 0.0
        %1715 = vmatpush1.msra.mxu0 0.0
        %1716 = vmatprep.subr.mxu0 0.0
        %1717 = vmatpush1.msra.mxu0 0.0
        %1718 = vmatprep.subr.mxu0 0.0
        %1719 = vmatpush1.msra.mxu0 0.0
        %1720 = vmatprep.subr.mxu0 0.0
        %1721 = vmatpush1.msra.mxu0 0.0
        %1722 = vmatprep.subr.mxu0 0.0
        %1723 = vmatpush1.msra.mxu0 0.0
        %1724 = vmatprep.subr.mxu0 0.0
        %1725 = vmatpush1.msra.mxu0 0.0
        %1726 = vmatprep.subr.mxu0 0.0
        %1727 = vmatpush1.msra.mxu0 0.0
        %1728 = vmatprep.subr.mxu0 0.0
        %1729 = vmatpush1.msra.mxu0 0.0
        %1730 = vmatprep.subr.mxu0 0.0
        %1731 = vmatpush1.msra.mxu0 0.0
        %1732 = vmatprep.subr.mxu0 0.0
        %1733 = vmatpush1.msra.mxu0 0.0
        %1734 = vmatprep.subr.mxu0 0.0
        %1735 = vmatpush1.msra.mxu0 0.0
        %1736 = vmatprep.subr.mxu0 0.0
        %1737 = vmatpush1.msra.mxu0 0.0
        %1738 = vmatprep.subr.mxu0 0.0
        %1739 = vmatpush1.msra.mxu0 0.0
        %1740 = vmatprep.subr.mxu0 0.0
        %1741 = vmatpush1.msra.mxu0 0.0
        %1742 = vmatprep.subr.mxu0 0.0
        %1743 = vmatpush1.msra.mxu0 0.0
        %1744 = vmatprep.subr.mxu0 0.0
        %1745 = vmatpush1.msra.mxu0 0.0
        %1746 = vmatprep.subr.mxu0 0.0
        %1747 = vmatpush1.msra.mxu0 0.0
        %1748 = vmatprep.subr.mxu0 0.0
        %1749 = vmatpush1.msra.mxu0 0.0
        %1750 = vmatprep.subr.mxu0 0.0
        %1751 = vmatpush1.msra.mxu0 0.0
        %1752 = vmatprep.subr.mxu0 0.0
        %1753 = vmatpush1.msra.mxu0 0.0
        %1754 = vmatprep.subr.mxu0 0.0
        %1755 = vmatpush1.msra.mxu0 0.0
        %1756 = vmatprep.subr.mxu0 0.0
        %1757 = vmatpush1.msra.mxu0 0.0
        %1758 = vmatprep.subr.mxu0 0.0
        %1759 = vmatpush1.msra.mxu0 0.0
        %1760 = vmatprep.subr.mxu0 0.0
        %1761 = vmatpush1.msra.mxu0 0.0
        %1762 = vmatprep.subr.mxu0 0.0
        %1763 = vmatpush1.msra.mxu0 0.0
        %1764 = vmatprep.subr.mxu0 0.0
        %1765 = vmatpush1.msra.mxu0 0.0
        %1766 = vmatprep.subr.mxu0 0.0
        %1767 = vmatpush1.msra.mxu0 0.0
        %1768 = vmatprep.subr.mxu0 0.0
        %1769 = vmatpush1.msra.mxu0 0.0
        %1770 = vmatprep.subr.mxu0 0.0
        %1771 = vmatpush1.msra.mxu0 0.0
        %1772 = vmatprep.mubr.f32.mxu0 0.0
        %1773 = vmatmul.mubr.f32.gmra.mrb[0].mxu0 %v1706
        %v1774 = vpop.f32.mrb[0].mxu0
        %v1775 = vadd.f32 0.0, %v1774
        %v1776 = vpop.f32.mrb[0].mxu0
        %1777 = vdwg.mxu0
        %v1779 = vsel %vm1198, %v1538, 0
        %1781 = vmatprep.subr.mxu0 0.0
        %1782 = vmatpush1.msra.mxu0 %v1188
        %1783 = vmatprep.subr.mxu0 0.0
        %1784 = vmatpush1.msra.mxu0 0.0
        %1785 = vmatprep.subr.mxu0 0.0
        %1786 = vmatpush1.msra.mxu0 0.0
        %1787 = vmatprep.subr.mxu0 0.0
        %1788 = vmatpush1.msra.mxu0 0.0
        %1789 = vmatprep.subr.mxu0 0.0
        %1790 = vmatpush1.msra.mxu0 0.0
        %1791 = vmatprep.subr.mxu0 0.0
        %1792 = vmatpush1.msra.mxu0 0.0
        %1793 = vmatprep.subr.mxu0 0.0
        %1794 = vmatpush1.msra.mxu0 0.0
        %1795 = vmatprep.subr.mxu0 0.0
        %1796 = vmatpush1.msra.mxu0 0.0
        %1797 = vmatprep.subr.mxu0 0.0
        %1798 = vmatpush1.msra.mxu0 0.0
        %1799 = vmatprep.subr.mxu0 0.0
        %1800 = vmatpush1.msra.mxu0 0.0
        %1801 = vmatprep.subr.mxu0 0.0
        %1802 = vmatpush1.msra.mxu0 0.0
        %1803 = vmatprep.subr.mxu0 0.0
        %1804 = vmatpush1.msra.mxu0 0.0
        %1805 = vmatprep.subr.mxu0 0.0
        %1806 = vmatpush1.msra.mxu0 0.0
        %1807 = vmatprep.subr.mxu0 0.0
        %1808 = vmatpush1.msra.mxu0 0.0
        %1809 = vmatprep.subr.mxu0 0.0
        %1810 = vmatpush1.msra.mxu0 0.0
        %1811 = vmatprep.subr.mxu0 0.0
        %1812 = vmatpush1.msra.mxu0 0.0
        %1813 = vmatprep.subr.mxu0 0.0
        %1814 = vmatpush1.msra.mxu0 0.0
        %1815 = vmatprep.subr.mxu0 0.0
        %1816 = vmatpush1.msra.mxu0 0.0
        %1817 = vmatprep.subr.mxu0 0.0
        %1818 = vmatpush1.msra.mxu0 0.0
        %1819 = vmatprep.subr.mxu0 0.0
        %1820 = vmatpush1.msra.mxu0 0.0
        %1821 = vmatprep.subr.mxu0 0.0
        %1822 = vmatpush1.msra.mxu0 0.0
        %1823 = vmatprep.subr.mxu0 0.0
        %1824 = vmatpush1.msra.mxu0 0.0
        %1825 = vmatprep.subr.mxu0 0.0
        %1826 = vmatpush1.msra.mxu0 0.0
        %1827 = vmatprep.subr.mxu0 0.0
        %1828 = vmatpush1.msra.mxu0 0.0
        %1829 = vmatprep.subr.mxu0 0.0
        %1830 = vmatpush1.msra.mxu0 0.0
        %1831 = vmatprep.subr.mxu0 0.0
        %1832 = vmatpush1.msra.mxu0 0.0
        %1833 = vmatprep.subr.mxu0 0.0
        %1834 = vmatpush1.msra.mxu0 0.0
        %1835 = vmatprep.subr.mxu0 0.0
        %1836 = vmatpush1.msra.mxu0 0.0
        %1837 = vmatprep.subr.mxu0 0.0
        %1838 = vmatpush1.msra.mxu0 0.0
        %1839 = vmatprep.subr.mxu0 0.0
        %1840 = vmatpush1.msra.mxu0 0.0
        %1841 = vmatprep.subr.mxu0 0.0
        %1842 = vmatpush1.msra.mxu0 0.0
        %1843 = vmatprep.subr.mxu0 0.0
        %1844 = vmatpush1.msra.mxu0 0.0
        %1845 = vmatprep.mubr.f32.mxu0 0.0
        %1846 = vmatmul.mubr.f32.gmra.mrb[0].mxu0 %v1779
        %v1847 = vpop.f32.mrb[0].mxu0
        %v1848 = vadd.f32 0.0, %v1847
        %v1849 = vpop.f32.mrb[0].mxu0
        %1850 = vdwg.mxu0
        %v1851 = vadd.f32 %v1539, %v1629
        %v1852 = vadd.f32 %v1540, %v1702
        %v1853 = vadd.f32 %v1541, %v1775
        %v1854 = vadd.f32 %v1542, %v1848
        %v1855 = vrcp.pop %v1555
        %v1856 = vrcp.pop %v1556
        %v1857 = vrcp.pop %v1557
        %v1858 = vrcp.pop %v1558
        %v1859 = vmul.f32 %v1851, %v1855
        %v1860 = vmul.f32 %v1852, %v1856
        %v1861 = vmul.f32 %v1853, %v1857
        %v1862 = vmul.f32 %v1854, %v1858
        %v1863 = vcombine.low %v1859, %v1861
        %v1864 = vcombine.high %v1859, %v1861
        %v1866 = vunpack.c.l.s4 1983009808
        %v1867 = vunpack.c.0.s8 %v1866
        %v1868 = vlaneseq
        %v1869 = vshrl.u32 %v1868, 7
        %v1870 = vsub.s32 %v1867, %v1869
        %v1871 = vrot.slane %v1863, %v1870
        %v1873 = vunpack.c.l.s4 1983009808
        %v1874 = vunpack.c.0.s8 %v1873
        %v1875 = vlaneseq
        %v1876 = vshrl.u32 %v1875, 7
        %v1877 = vsub.s32 %v1874, %v1876
        %v1878 = vrot.slane %v1864, %v1877
        %v1879 = vcombine.low %v1860, %v1862
        %v1880 = vcombine.high %v1860, %v1862
        %v1882 = vunpack.c.l.s4 1983009808
        %v1883 = vunpack.c.0.s8 %v1882
        %v1884 = vlaneseq
        %v1885 = vshrl.u32 %v1884, 7
        %v1886 = vsub.s32 %v1883, %v1885
        %v1887 = vrot.slane %v1879, %v1886
        %v1889 = vunpack.c.l.s4 1983009808
        %v1890 = vunpack.c.0.s8 %v1889
        %v1891 = vlaneseq
        %v1892 = vshrl.u32 %v1891, 7
        %v1893 = vsub.s32 %v1890, %v1892
        %v1894 = vrot.slane %v1880, %v1893
        %v1895 = vcombine.low %v1871, %v1887
        %v1896 = vcombine.high %v1871, %v1887
        %v1898 = vunpack.c.l.s4 1934713408
        %v1899 = vunpack.c.0.s8 %v1898
        %v1900 = vlaneseq
        %v1901 = vshrl.u32 %v1900, 7
        %v1902 = vsub.s32 %v1899, %v1901
        %v1903 = vrot.slane %v1895, %v1902
        %v1905 = vunpack.c.l.s4 1934713408
        %v1906 = vunpack.c.0.s8 %v1905
        %v1907 = vlaneseq
        %v1908 = vshrl.u32 %v1907, 7
        %v1909 = vsub.s32 %v1906, %v1908
        %v1910 = vrot.slane %v1896, %v1909
        %v1911 = vcombine.low %v1878, %v1894
        %v1912 = vcombine.high %v1878, %v1894
        %v1914 = vunpack.c.l.s4 1934713408
        %v1915 = vunpack.c.0.s8 %v1914
        %v1916 = vlaneseq
        %v1917 = vshrl.u32 %v1916, 7
        %v1918 = vsub.s32 %v1915, %v1917
        %v1919 = vrot.slane %v1911, %v1918
        %v1921 = vunpack.c.l.s4 1934713408
        %v1922 = vunpack.c.0.s8 %v1921
        %v1923 = vlaneseq
        %v1924 = vshrl.u32 %v1923, 7
        %v1925 = vsub.s32 %v1922, %v1924
        %v1926 = vrot.slane %v1912, %v1925
        %v1927 = vcombine.high %v1903, 0.0
        %v1928 = vcombine.high %v1910, 0.0
        %v1929 = vcombine.high %v1919, 0.0
        %v1930 = vcombine.high %v1926, 0.0
        %v1931 = vcombine.low %v1903, %v1910
        %v1933 = vunpack.c.l.s4 1983009808
        %v1934 = vunpack.c.0.s8 %v1933
        %v1935 = vlaneseq
        %v1936 = vshrl.u32 %v1935, 7
        %v1937 = vsub.s32 %v1934, %v1936
        %v1938 = vrot.slane %v1931, %v1937
        %v1939 = vcombine.low %v1927, %v1928
        %v1941 = vunpack.c.l.s4 1983009808
        %v1942 = vunpack.c.0.s8 %v1941
        %v1943 = vlaneseq
        %v1944 = vshrl.u32 %v1943, 7
        %v1945 = vsub.s32 %v1942, %v1944
        %v1946 = vrot.slane %v1939, %v1945
        %v1947 = vcombine.low %v1919, %v1926
        %v1949 = vunpack.c.l.s4 1983009808
        %v1950 = vunpack.c.0.s8 %v1949
        %v1951 = vlaneseq
        %v1952 = vshrl.u32 %v1951, 7
        %v1953 = vsub.s32 %v1950, %v1952
        %v1954 = vrot.slane %v1947, %v1953
        %v1955 = vcombine.low %v1929, %v1930
        %v1957 = vunpack.c.l.s4 1983009808
        %v1958 = vunpack.c.0.s8 %v1957
        %v1959 = vlaneseq
        %v1960 = vshrl.u32 %v1959, 7
        %v1961 = vsub.s32 %v1958, %v1960
        %v1962 = vrot.slane %v1955, %v1961
        %v1963 = vcombine.low %v1938, %v1946
        %v1964 = vcombine.high %v1938, %v1946
        %v1966 = vunpack.c.l.s4 1934713408
        %v1967 = vunpack.c.0.s8 %v1966
        %v1968 = vlaneseq
        %v1969 = vshrl.u32 %v1968, 7
        %v1970 = vsub.s32 %v1967, %v1969
        %v1971 = vrot.slane %v1963, %v1970
        %v1973 = vunpack.c.l.s4 1934713408
        %v1974 = vunpack.c.0.s8 %v1973
        %v1975 = vlaneseq
        %v1976 = vshrl.u32 %v1975, 7
        %v1977 = vsub.s32 %v1974, %v1976
        %v1978 = vrot.slane %v1964, %v1977
        %v1979 = vcombine.low %v1954, %v1962
        %v1980 = vcombine.high %v1954, %v1962
        %v1982 = vunpack.c.l.s4 1934713408
        %v1983 = vunpack.c.0.s8 %v1982
        %v1984 = vlaneseq
        %v1985 = vshrl.u32 %v1984, 7
        %v1986 = vsub.s32 %v1983, %v1985
        %v1987 = vrot.slane %v1979, %v1986
        %v1989 = vunpack.c.l.s4 1934713408
        %v1990 = vunpack.c.0.s8 %v1989
        %v1991 = vlaneseq
        %v1992 = vshrl.u32 %v1991, 7
        %v1993 = vsub.s32 %v1990, %v1992
        %v1994 = vrot.slane %v1980, %v1993
        %v1995 = vcombine.low %v1971, %v1987
        %v1996 = vcombine.high %v1971, %v1987
        %v1997 = vcombine.low %v1978, %v1994
        %v1998 = vcombine.high %v1978, %v1994
        %2000 = vrot.lane.b32.xlu0 %v1996, 8
        %v2001 = vpop.permute.xlu0 %2000
        %2004 = vrot.lane.b32.xlu0 %v1997, 16
        %v2005 = vpop.permute.xlu0 %2004
        %2008 = vrot.lane.b32.xlu0 %v1998, 24
        %v2009 = vpop.permute.xlu0 %2008
        %v2011 = vsel %vm1198, %v1995, %v2001
        %vm2012 = vcmask 130048
        %v2013 = vsel %vm2012, %v2011, %v2005
        %vm2014 = vcmask 195584
        %v2015 = vsel %vm2014, %v2013, %v2009
        %v2016 = vld [vmem:[%s5] sm:$0xff]
        %v2017 = vld [vmem:[%s5 + $0x8] sm:$0xff]
        %v2018 = vld [vmem:[%s5 + $0x10] sm:$0xff]
        %v2019 = vld [vmem:[%s5 + $0x18] sm:$0xff]
        %v2020 = vld [vmem:[%s6] sm:$0x1]
        %v2022 = vlaneseq
        %v2023 = vshrl.u32 %v2022, 7
        %v2024 = vsub.s32 0, %v2023
        %v2025 = vrot.slane %v2020, %v2024
        %v2028 = vsel %vm597, %v2015, 0
        %2030 = vmatprep.subr.mxu0 0.0
        %2031 = vmatpush1.msra.mxu0 %v2016
        %2032 = vmatprep.subr.mxu0 0.0
        %2033 = vmatpush1.msra.mxu0 %v2017
        %2034 = vmatprep.subr.mxu0 0.0
        %2035 = vmatpush1.msra.mxu0 %v2018
        %2036 = vmatprep.subr.mxu0 0.0
        %2037 = vmatpush1.msra.mxu0 %v2019
        %2038 = vmatprep.subr.mxu0 0.0
        %2039 = vmatpush1.msra.mxu0 0.0
        %2040 = vmatprep.subr.mxu0 0.0
        %2041 = vmatpush1.msra.mxu0 0.0
        %2042 = vmatprep.subr.mxu0 0.0
        %2043 = vmatpush1.msra.mxu0 0.0
        %2044 = vmatprep.subr.mxu0 0.0
        %2045 = vmatpush1.msra.mxu0 0.0
        %2046 = vmatprep.subr.mxu0 0.0
        %2047 = vmatpush1.msra.mxu0 0.0
        %2048 = vmatprep.subr.mxu0 0.0
        %2049 = vmatpush1.msra.mxu0 0.0
        %2050 = vmatprep.subr.mxu0 0.0
        %2051 = vmatpush1.msra.mxu0 0.0
        %2052 = vmatprep.subr.mxu0 0.0
        %2053 = vmatpush1.msra.mxu0 0.0
        %2054 = vmatprep.subr.mxu0 0.0
        %2055 = vmatpush1.msra.mxu0 0.0
        %2056 = vmatprep.subr.mxu0 0.0
        %2057 = vmatpush1.msra.mxu0 0.0
        %2058 = vmatprep.subr.mxu0 0.0
        %2059 = vmatpush1.msra.mxu0 0.0
        %2060 = vmatprep.subr.mxu0 0.0
        %2061 = vmatpush1.msra.mxu0 0.0
        %2062 = vmatprep.subr.mxu0 0.0
        %2063 = vmatpush1.msra.mxu0 0.0
        %2064 = vmatprep.subr.mxu0 0.0
        %2065 = vmatpush1.msra.mxu0 0.0
        %2066 = vmatprep.subr.mxu0 0.0
        %2067 = vmatpush1.msra.mxu0 0.0
        %2068 = vmatprep.subr.mxu0 0.0
        %2069 = vmatpush1.msra.mxu0 0.0
        %2070 = vmatprep.subr.mxu0 0.0
        %2071 = vmatpush1.msra.mxu0 0.0
        %2072 = vmatprep.subr.mxu0 0.0
        %2073 = vmatpush1.msra.mxu0 0.0
        %2074 = vmatprep.subr.mxu0 0.0
        %2075 = vmatpush1.msra.mxu0 0.0
        %2076 = vmatprep.subr.mxu0 0.0
        %2077 = vmatpush1.msra.mxu0 0.0
        %2078 = vmatprep.subr.mxu0 0.0
        %2079 = vmatpush1.msra.mxu0 0.0
        %2080 = vmatprep.subr.mxu0 0.0
        %2081 = vmatpush1.msra.mxu0 0.0
        %2082 = vmatprep.subr.mxu0 0.0
        %2083 = vmatpush1.msra.mxu0 0.0
        %2084 = vmatprep.subr.mxu0 0.0
        %2085 = vmatpush1.msra.mxu0 0.0
        %2086 = vmatprep.subr.mxu0 0.0
        %2087 = vmatpush1.msra.mxu0 0.0
        %2088 = vmatprep.subr.mxu0 0.0
        %2089 = vmatpush1.msra.mxu0 0.0
        %2090 = vmatprep.subr.mxu0 0.0
        %2091 = vmatpush1.msra.mxu0 0.0
        %2092 = vmatprep.subr.mxu0 0.0
        %2093 = vmatpush1.msra.mxu0 0.0
        %2094 = vmatprep.mubr.f32.mxu0 0.0
        %2095 = vmatmul.mubr.f32.gmra.mrb[0].mxu0 %v2028
        %v2096 = vpop.f32.mrb[0].mxu0
        %v2097 = vadd.f32 %v2025, %v2096
        %v2098 = vpop.f32.mrb[0].mxu0
        %2099 = vdwg.mxu0
        %v2100 = vadd.f32 %v592, %v2097
        %v2101 = vld [vmem:[%s7] sm:$0x1]
        %v2102 = vld [vmem:[%s8] sm:$0x1]
        %v2103 = vsel %vm597, %v2100, 0.0
        %2104 = vadd.xlane.f32.xlu0 %v2103
        %v2105 = vpop.xlane.xlu0 %2104
        %v2106 = vrcp.pop 32.0
        %v2107 = vmul.f32 %v2105, %v2106
        %v2108 = vsub.f32 %v2100, %v2107
        %v2109 = vmul.f32 %v2108, %v2108
        %v2110 = vsel %vm597, %v2109, 0.0
        %2111 = vadd.xlane.f32.xlu0 %v2110
        %v2112 = vpop.xlane.xlu0 %2111
        %v2113 = vmul.f32 %v2112, %v2106
        %v2114 = vadd.f32 %v2113, 1e-05
        %v2115 = vrsqrt.pop %v2114
        %v2116 = vmul.f32 %v2108, %v2115
        %v2118 = vlaneseq
        %v2119 = vshrl.u32 %v2118, 7
        %v2120 = vsub.s32 0, %v2119
        %v2121 = vrot.slane %v2101, %v2120
        %v2123 = vmul.f32 %v2116, %v2121
        %v2125 = vlaneseq
        %v2126 = vshrl.u32 %v2125, 7
        %v2127 = vsub.s32 0, %v2126
        %v2128 = vrot.slane %v2102, %v2127
        %v2130 = vadd.f32 %v2123, %v2128
        %v2131 = vld [vmem:[#allocation7] sm:$0xff]
        %v2132 = vld [vmem:[#allocation7 + $0x8] sm:$0xff]
        %v2133 = vld [vmem:[#allocation7 + $0x10] sm:$0xff]
        %v2134 = vld [vmem:[#allocation7 + $0x18] sm:$0xff]
        %v2135 = vld [vmem:[%s10] sm:$0x1]
        %v2137 = vlaneseq
        %v2138 = vshrl.u32 %v2137, 7
        %v2139 = vsub.s32 0, %v2138
        %v2140 = vrot.slane %v2135, %v2139
        %v2143 = vsel %vm597, %v2130, 0
        %2145 = vmatprep.subr.mxu0 0.0
        %2146 = vmatpush1.msra.mxu0 %v2131
        %2147 = vmatprep.subr.mxu0 0.0
        %2148 = vmatpush1.msra.mxu0 %v2132
        %2149 = vmatprep.subr.mxu0 0.0
        %2150 = vmatpush1.msra.mxu0 %v2133
        %2151 = vmatprep.subr.mxu0 0.0
        %2152 = vmatpush1.msra.mxu0 %v2134
        %2153 = vmatprep.subr.mxu0 0.0
        %2154 = vmatpush1.msra.mxu0 0.0
        %2155 = vmatprep.subr.mxu0 0.0
        %2156 = vmatpush1.msra.mxu0 0.0
        %2157 = vmatprep.subr.mxu0 0.0
        %2158 = vmatpush1.msra.mxu0 0.0
        %2159 = vmatprep.subr.mxu0 0.0
        %2160 = vmatpush1.msra.mxu0 0.0
        %2161 = vmatprep.subr.mxu0 0.0
        %2162 = vmatpush1.msra.mxu0 0.0
        %2163 = vmatprep.subr.mxu0 0.0
        %2164 = vmatpush1.msra.mxu0 0.0
        %2165 = vmatprep.subr.mxu0 0.0
        %2166 = vmatpush1.msra.mxu0 0.0
        %2167 = vmatprep.subr.mxu0 0.0
        %2168 = vmatpush1.msra.mxu0 0.0
        %2169 = vmatprep.subr.mxu0 0.0
        %2170 = vmatpush1.msra.mxu0 0.0
        %2171 = vmatprep.subr.mxu0 0.0
        %2172 = vmatpush1.msra.mxu0 0.0
        %2173 = vmatprep.subr.mxu0 0.0
        %2174 = vmatpush1.msra.mxu0 0.0
        %2175 = vmatprep.subr.mxu0 0.0
        %2176 = vmatpush1.msra.mxu0 0.0
        %2177 = vmatprep.subr.mxu0 0.0
        %2178 = vmatpush1.msra.mxu0 0.0
        %2179 = vmatprep.subr.mxu0 0.0
        %2180 = vmatpush1.msra.mxu0 0.0
        %2181 = vmatprep.subr.mxu0 0.0
        %2182 = vmatpush1.msra.mxu0 0.0
        %2183 = vmatprep.subr.mxu0 0.0
        %2184 = vmatpush1.msra.mxu0 0.0
        %2185 = vmatprep.subr.mxu0 0.0
        %2186 = vmatpush1.msra.mxu0 0.0
        %2187 = vmatprep.subr.mxu0 0.0
        %2188 = vmatpush1.msra.mxu0 0.0
        %2189 = vmatprep.subr.mxu0 0.0
        %2190 = vmatpush1.msra.mxu0 0.0
        %2191 = vmatprep.subr.mxu0 0.0
        %2192 = vmatpush1.msra.mxu0 0.0
        %2193 = vmatprep.subr.mxu0 0.0
        %2194 = vmatpush1.msra.mxu0 0.0
        %2195 = vmatprep.subr.mxu0 0.0
        %2196 = vmatpush1.msra.mxu0 0.0
        %2197 = vmatprep.subr.mxu0 0.0
        %2198 = vmatpush1.msra.mxu0 0.0
        %2199 = vmatprep.subr.mxu0 0.0
        %2200 = vmatpush1.msra.mxu0 0.0
        %2201 = vmatprep.subr.mxu0 0.0
        %2202 = vmatpush1.msra.mxu0 0.0
        %2203 = vmatprep.subr.mxu0 0.0
        %2204 = vmatpush1.msra.mxu0 0.0
        %2205 = vmatprep.subr.mxu0 0.0
        %2206 = vmatpush1.msra.mxu0 0.0
        %2207 = vmatprep.subr.mxu0 0.0
        %2208 = vmatpush1.msra.mxu0 0.0
        %2209 = vmatprep.mubr.f32.mxu0 0.0
        %2210 = vmatmul.mubr.f32.gmra.mrb[0].mxu0 %v2143
        %v2211 = vpop.f32.mrb[0].mxu0
        %v2212 = vadd.f32 %v2140, %v2211
        %v2213 = vpop.f32.mrb[0].mxu0
        %2214 = vdwg.mxu0
        %v2215 = vmax.f32 %v2212, 0.0
        %v2216 = vld [vmem:[%s11] sm:$0xff]
        %v2217 = vld [vmem:[%s11 + $0x8] sm:$0xff]
        %v2218 = vld [vmem:[%s11 + $0x10] sm:$0xff]
        %v2219 = vld [vmem:[%s11 + $0x18] sm:$0xff]
        %v2220 = vld [vmem:[%s11 + $0x20] sm:$0xff]
        %v2221 = vld [vmem:[%s11 + $0x28] sm:$0xff]
        %v2222 = vld [vmem:[%s11 + $0x30] sm:$0xff]
        %v2223 = vld [vmem:[%s11 + $0x38] sm:$0xff]
        %v2224 = vld [vmem:[%s12] sm:$0x1]
        %v2226 = vlaneseq
        %v2227 = vshrl.u32 %v2226, 7
        %v2228 = vsub.s32 0, %v2227
        %v2229 = vrot.slane %v2224, %v2228
        %vm2231 = vcmask 523264
        %v2233 = vsel %vm2231, %v2215, 0
        %2235 = vmatprep.subr.mxu0 0.0
        %2236 = vmatpush1.msra.mxu0 %v2216
        %2237 = vmatprep.subr.mxu0 0.0
        %2238 = vmatpush1.msra.mxu0 %v2217
        %2239 = vmatprep.subr.mxu0 0.0
        %2240 = vmatpush1.msra.mxu0 %v2218
        %2241 = vmatprep.subr.mxu0 0.0
        %2242 = vmatpush1.msra.mxu0 %v2219
        %2243 = vmatprep.subr.mxu0 0.0
        %2244 = vmatpush1.msra.mxu0 %v2220
        %2245 = vmatprep.subr.mxu0 0.0
        %2246 = vmatpush1.msra.mxu0 %v2221
        %2247 = vmatprep.subr.mxu0 0.0
        %2248 = vmatpush1.msra.mxu0 %v2222
        %2249 = vmatprep.subr.mxu0 0.0
        %2250 = vmatpush1.msra.mxu0 %v2223
        %2251 = vmatprep.subr.mxu0 0.0
        %2252 = vmatpush1.msra.mxu0 0.0
        %2253 = vmatprep.subr.mxu0 0.0
        %2254 = vmatpush1.msra.mxu0 0.0
        %2255 = vmatprep.subr.mxu0 0.0
        %2256 = vmatpush1.msra.mxu0 0.0
        %2257 = vmatprep.subr.mxu0 0.0
        %2258 = vmatpush1.msra.mxu0 0.0
        %2259 = vmatprep.subr.mxu0 0.0
        %2260 = vmatpush1.msra.mxu0 0.0
        %2261 = vmatprep.subr.mxu0 0.0
        %2262 = vmatpush1.msra.mxu0 0.0
        %2263 = vmatprep.subr.mxu0 0.0
        %2264 = vmatpush1.msra.mxu0 0.0
        %2265 = vmatprep.subr.mxu0 0.0
        %2266 = vmatpush1.msra.mxu0 0.0
        %2267 = vmatprep.subr.mxu0 0.0
        %2268 = vmatpush1.msra.mxu0 0.0
        %2269 = vmatprep.subr.mxu0 0.0
        %2270 = vmatpush1.msra.mxu0 0.0
        %2271 = vmatprep.subr.mxu0 0.0
        %2272 = vmatpush1.msra.mxu0 0.0
        %2273 = vmatprep.subr.mxu0 0.0
        %2274 = vmatpush1.msra.mxu0 0.0
        %2275 = vmatprep.subr.mxu0 0.0
        %2276 = vmatpush1.msra.mxu0 0.0
        %2277 = vmatprep.subr.mxu0 0.0
        %2278 = vmatpush1.msra.mxu0 0.0
        %2279 = vmatprep.subr.mxu0 0.0
        %2280 = vmatpush1.msra.mxu0 0.0
        %2281 = vmatprep.subr.mxu0 0.0
        %2282 = vmatpush1.msra.mxu0 0.0
        %2283 = vmatprep.subr.mxu0 0.0
        %2284 = vmatpush1.msra.mxu0 0.0
        %2285 = vmatprep.subr.mxu0 0.0
        %2286 = vmatpush1.msra.mxu0 0.0
        %2287 = vmatprep.subr.mxu0 0.0
        %2288 = vmatpush1.msra.mxu0 0.0
        %2289 = vmatprep.subr.mxu0 0.0
        %2290 = vmatpush1.msra.mxu0 0.0
        %2291 = vmatprep.subr.mxu0 0.0
        %2292 = vmatpush1.msra.mxu0 0.0
        %2293 = vmatprep.subr.mxu0 0.0
        %2294 = vmatpush1.msra.mxu0 0.0
        %2295 = vmatprep.subr.mxu0 0.0
        %2296 = vmatpush1.msra.mxu0 0.0
        %2297 = vmatprep.subr.mxu0 0.0
        %2298 = vmatpush1.msra.mxu0 0.0
        %2299 = vmatprep.mubr.f32.mxu0 0.0
        %2300 = vmatmul.mubr.f32.gmra.mrb[0].mxu0 %v2233
        %v2301 = vpop.f32.mrb[0].mxu0
        %v2302 = vadd.f32 %v2229, %v2301
        %v2303 = vpop.f32.mrb[0].mxu0
        %2304 = vdwg.mxu0
        %v2305 = vadd.f32 %v2130, %v2302
        %v2306 = vld [vmem:[%s13] sm:$0x1]
        %v2307 = vld [vmem:[%s14] sm:$0x1]
        %v2308 = vsel %vm597, %v2305, 0.0
        %2309 = vadd.xlane.f32.xlu0 %v2308
        %v2310 = vpop.xlane.xlu0 %2309
        %v2311 = vmul.f32 %v2310, %v2106
        %v2312 = vsub.f32 %v2305, %v2311
        %v2313 = vmul.f32 %v2312, %v2312
        %v2314 = vsel %vm597, %v2313, 0.0
        %2315 = vadd.xlane.f32.xlu0 %v2314
        %v2316 = vpop.xlane.xlu0 %2315
        %v2317 = vmul.f32 %v2316, %v2106
        %v2318 = vadd.f32 %v2317, 1e-05
        %v2319 = vrsqrt.pop %v2318
        %v2320 = vmul.f32 %v2312, %v2319
        %v2322 = vlaneseq
        %v2323 = vshrl.u32 %v2322, 7
        %v2324 = vsub.s32 0, %v2323
        %v2325 = vrot.slane %v2306, %v2324
        %v2327 = vmul.f32 %v2320, %v2325
        %v2329 = vlaneseq
        %v2330 = vshrl.u32 %v2329, 7
        %v2331 = vsub.s32 0, %v2330
        %v2332 = vrot.slane %v2307, %v2331
        %v2334 = vadd.f32 %v2327, %v2332
        %2335 = vst.msk [vmem:[%s588] sm:$0xff] %vm597, %v2334
        %s2336 = sand.u32 %s389, 1
        %s2337 = scalar_lea.sflag [#allocation4], %s2336
        %s2338 = sand.u32 %s389, 1
        %s2339 = smul.addr %s2338, 8
        %s2340 = scalar_lea.vmem [#allocation8], %s2339
        // Predicated region
        $region93: #{tpu_custom_call.1} parent=79 // pred_check
          %p2341 = pneg %p399
        $region94: #{tpu_custom_call.1} parent=79 // pred_check_branch
          %2343 = sbr.rel (%p2341) target = $region96
        $region95: #{tpu_custom_call.1} parent=79 // pred_region
          %s2345 = ssub.s32 128, 128
          %2346 = vsyncadd %s2337, %s2345
          %s2347 = sadd.s32 %s40, %s39
          %s2348 = smul.addr %s2347, 128
          %s2349 = scalar_lea.hbm %s15, %s2348
          %s2351 = sshll.u32 %s2340, 4
          %s2352 = int_to_ptr.vmem [resolvable:$true] %s2351
          %2354 = dma.vmem_to_hbm [thread:$0]  %s2352, 128, %s2349, %s2337
        $region96: #{tpu_custom_call.1} parent=79 // pred_fallthru
          _
      $region80: #{tpu_custom_call.1} parent=5 // pred_fallthru
        _
      %p2355 = scmp.le.s32.totalorder 2, %s30
      // Predicated region
      $region97: #{tpu_custom_call.1} parent=5 // pred_check
        %p2356 = pneg %p2355
      $region98: #{tpu_custom_call.1} parent=5 // pred_check_branch
        %2358 = sbr.rel (%p2356) target = $region100
      $region99: #{tpu_custom_call.1} parent=5 // pred_region
        %s2359 = ssub.s32 %s30, 2
        // Predicated region
        $region101: #{tpu_custom_call.1} parent=99 // pred_check
          %p2360 = pneg %p405
        $region102: #{tpu_custom_call.1} parent=99 // pred_check_branch
          %2362 = sbr.rel (%p2360) target = $region104
        $region103: #{tpu_custom_call.1} parent=99 // pred_region
          %s2363 = sand.u32 %s390, 1
          %s2364 = scalar_lea.sflag [#allocation4], %s2363
          %s2365 = sand.u32 %s390, 1
          %s2366 = smul.addr %s2365, 8
          %s2367 = scalar_lea.vmem [#allocation8], %s2366
          %2368 = dma.done %s2364, 128
        $region104: #{tpu_custom_call.1} parent=99 // pred_fallthru
          _
      $region100: #{tpu_custom_call.1} parent=5 // pred_fallthru
        _
    $region6: #{tpu_custom_call.1} parent=1 // loop_footer
      %s34 = sadd.s32 1, %s30
    $region7: #{tpu_custom_call.1} parent=1 // loop_footer_branch
      %29 = sbr.rel target = $region3
    $region8: #{tpu_custom_call.1} parent=1 // loop_exit
      _
    %2369 = vsyncpa [#allocation3], 1
    %s2370 = scalar_lea.sflag [#allocation3], 1
    %2371 = vsyncpa %s2370, 1
    %2372 = vsyncpa [#allocation6], 1
    %s2373 = scalar_lea.sflag [#allocation6], 1
    %2374 = vsyncpa %s2373, 1
    %2375 = vsyncpa [#allocation4], 1
    %s2376 = scalar_lea.sflag [#allocation4], 1
    %2377 = vsyncpa %s2376, 1

// kernel: tpu_custom_call.1
$region0: #{tpu_custom_call.1}
  #allocation0 [shape = 'u32[]', space=smem, size = 0x4, offset = 0x4, fixed_abs, tag = 'smem constant byte address 0x4 - core index']
  #allocation1 [shape = 'u32[144,128]{1,0:T(1,128)}', space=vmem, size = 0x12000, scoped, tag = 'internal scratch']
  %s0 = inlined_call_operand.hbm [shape: f32[2,8,32], index: 0, kind: input, shape index: {}]
  %s1 = inlined_call_operand.hbm [shape: f32[2,8,32], index: 1, kind: input, shape index: {}]
  %s2 = inlined_call_operand.vmem [shape: f32[2,1,8], index: 2, kind: input, shape index: {}]
  %s3 = inlined_call_operand.vmem [shape: f32[32,32], index: 3, kind: input, shape index: {}]
  %s4 = inlined_call_operand.vmem [shape: f32[32,64], index: 4, kind: input, shape index: {}]
  %s5 = inlined_call_operand.vmem [shape: f32[32,32], index: 5, kind: input, shape index: {}]
  %s6 = inlined_call_operand.vmem [shape: f32[1,32], index: 6, kind: input, shape index: {}]
  %s7 = inlined_call_operand.vmem [shape: f32[1,32], index: 7, kind: input, shape index: {}]
  %s8 = inlined_call_operand.vmem [shape: f32[1,32], index: 8, kind: input, shape index: {}]
  %s9 = inlined_call_operand.hbm [shape: f32[32,64], index: 9, kind: input, shape index: {}]
  %s10 = inlined_call_operand.vmem [shape: f32[1,64], index: 10, kind: input, shape index: {}]
  %s11 = inlined_call_operand.vmem [shape: f32[64,32], index: 11, kind: input, shape index: {}]
  %s12 = inlined_call_operand.vmem [shape: f32[1,32], index: 12, kind: input, shape index: {}]
  %s13 = inlined_call_operand.vmem [shape: f32[1,32], index: 13, kind: input, shape index: {}]
  %s14 = inlined_call_operand.vmem [shape: f32[1,32], index: 14, kind: input, shape index: {}]
  %s15 = inlined_call_operand.hbm [shape: f32[2,8,32], index: 15, kind: output, shape index: {}]
  %s16 = sld [smem:[#allocation0]]
  $region105: #{tpu_custom_call.1} parent=0
    _
  %s18 = ssub.s32 1, %s16
  %s19 = scalar_select 0, %s18, %s16
  $region1: #{tpu_custom_call.1} parent=0
    #allocation2 [shape = 'u8[8192]{0}', space=vmem, size = 0x2000, scoped, tag = 'input window, operand 0']
    #allocation3 [shape = 's32[2]{0}', space=sflag, size = 0x8, scoped, tag = 'scoped memory for tpu_custom_call.1']
    #allocation4 [shape = 's32[2]{0}', space=sflag, size = 0x8, scoped, tag = 'scoped memory for tpu_custom_call.1']
    #allocation5 [shape = 'u8[8192]{0}', space=vmem, size = 0x2000, scoped, tag = 'input window, operand 1']
    #allocation6 [shape = 's32[2]{0}', space=sflag, size = 0x8, scoped, tag = 'scoped memory for tpu_custom_call.1']
    #allocation7 [shape = 'u8[16384]{0}', space=vmem, size = 0x4000, scoped, tag = 'input window, operand 9, single buffered']
    #allocation8 [shape = 'u8[8192]{0}', space=vmem, size = 0x2000, scoped, tag = 'output window, operand 0']
    %20 = vsyncpa [#allocation3], 0
    %s21 = scalar_lea.sflag [#allocation3], 1
    %22 = vsyncpa %s21, 0
    %23 = vsyncpa [#allocation6], 0
    %s24 = scalar_lea.sflag [#allocation6], 1
    %25 = vsyncpa %s24, 0
    %26 = vsyncpa [#allocation4], 0
    %s27 = scalar_lea.sflag [#allocation4], 1
    %28 = vsyncpa %s27, 0
    loop: start=0, step=1, limit=4
    $region2: #{tpu_custom_call.1} parent=1 // loop_pre_header
      _
    $region3: #{tpu_custom_call.1} parent=1 // loop_header
      %s30 = sphi 0, %s34
      %p31 = scmp.ge.s32.totalorder %s30, 4
      %s37 = sphi 0, %s49
      %s38 = sphi 0, %s45
      %s39 = sphi 0, %s37
      %s40 = sphi 0, %s38
      %s41 = sphi 0, %s39
      %s42 = sphi 0, %s40
      %s54 = sphi 0, %s56
      %s57 = sphi 0, %s54
      %s58 = sphi 0, %s57
      %s74 = sphi 0, %s58
      %s80 = sphi 0, %s82
      %s83 = sphi 0, %s80
      %s84 = sphi 0, %s83
      %s100 = sphi 0, %s84
      %s106 = sphi 0, %s108
      %s109 = sphi 0, %s106
      %s110 = sphi 0, %s109
      %s126 = sphi 0, %s110
      %s130 = sphi 0, %s130
      %s132 = sphi 0, %s130
      %s133 = sphi 0, %s132
      %s147 = sphi 0, %s133
      %s151 = sphi 0, %s151
      %s153 = sphi 0, %s151
      %s154 = sphi 0, %s153
      %s168 = sphi 0, %s154
      %s172 = sphi 0, %s172
      %s174 = sphi 0, %s172
      %s175 = sphi 0, %s174
      %s189 = sphi 0, %s175
      %s193 = sphi 0, %s193
      %s195 = sphi 0, %s193
      %s196 = sphi 0, %s195
      %s210 = sphi 0, %s196
      %s214 = sphi 0, %s214
      %s216 = sphi 0, %s214
      %s217 = sphi 0, %s216
      %s231 = sphi 0, %s217
      %s235 = sphi 0, %s235
      %s237 = sphi 0, %s235
      %s238 = sphi 0, %s237
      %s252 = sphi 0, %s238
      %s256 = sphi 0, %s256
      %s258 = sphi 0, %s256
      %s259 = sphi 0, %s258
      %s273 = sphi 0, %s259
      %s277 = sphi 0, %s277
      %s279 = sphi 0, %s277
      %s280 = sphi 0, %s279
      %s294 = sphi 0, %s280
      %s298 = sphi 0, %s298
      %s300 = sphi 0, %s298
      %s301 = sphi 0, %s300
      %s315 = sphi 0, %s301
      %s319 = sphi 0, %s319
      %s321 = sphi 0, %s319
      %s322 = sphi 0, %s321
      %s336 = sphi 0, %s322
      %s340 = sphi 0, %s340
      %s342 = sphi 0, %s340
      %s343 = sphi 0, %s342
      %s357 = sphi 0, %s343
      %s361 = sphi 0, %s361
      %s363 = sphi 0, %s361
      %s364 = sphi 0, %s363
      %s378 = sphi 0, %s364
      %s386 = sphi 0, %s388
      %s389 = sphi 0, %s386
      %s390 = sphi 0, %s389
      %s406 = sphi 0, %s390
    $region4: #{tpu_custom_call.1} parent=1 // loop_header_branch
      %33 = sbr.rel (%p31) target = $region8
    $region5: #{tpu_custom_call.1} parent=1 // loop_body
      %s35 = ssub.s32 %s30, 1
      %s36 = ssub.s32 %s30, 2
      %s43 = sadd.s32 1, %s38
      %p44 = scmp.ge.s32.totalorder %s43, 1
      %s45 = scalar_select %p44, 0, %s43
      %s46 = sadd.s32 1, %s37
      %s47 = scalar_select %p44, %s46, %s37
      %p48 = scmp.ge.s32.totalorder %s47, 2
      %s49 = scalar_select %p48, 0, %s47
      %s50 = ssub.s32 %s37, %s49
      %s51 = ssub.s32 %s38, %s45
      %s52 = sor.u32 %s50, %s51
      %p53 = scmp.eq.s32.totalorder %s52, 0
      %s55 = sadd.s32 %s54, 1
      %s56 = scalar_select %p53, %s54, %s55
      %p59 = pneg %p53
      %p60 = scmp.eq.s32.totalorder %s30, 1
      %p61 = por %p59, %p60
      %p62 = scmp.ne.s32.totalorder %s54, %s57
      %p63 = scmp.eq.s32.totalorder %s30, 0
      %p64 = por %p62, %p63
      %p65 = scmp.ne.s32.totalorder %s54, %s57
      %p66 = scmp.eq.s32.totalorder %s35, 1
      %p67 = por %p65, %p66
      %p68 = scmp.ne.s32.totalorder %s57, %s58
      %p69 = scmp.eq.s32.totalorder %s35, 0
      %p70 = por %p68, %p69
      %p71 = scmp.ne.s32.totalorder %s57, %s58
      %p72 = scmp.eq.s32.totalorder %s36, 1
      %p73 = por %p71, %p72
      %p75 = scmp.ne.s32.totalorder %s58, %s74
      %p76 = scmp.eq.s32.totalorder %s36, 0
      %p77 = por %p75, %p76
      %s78 = ssub.s32 %s37, %s49
      %p79 = scmp.eq.s32.totalorder %s78, 0
      %s81 = sadd.s32 %s80, 1
      %s82 = scalar_select %p79, %s80, %s81
      %p85 = pneg %p79
      %p86 = scmp.eq.s32.totalorder %s30, 1
      %p87 = por %p85, %p86
      %p88 = scmp.ne.s32.totalorder %s80, %s83
      %p89 = scmp.eq.s32.totalorder %s30, 0
      %p90 = por %p88, %p89
      %p91 = scmp.ne.s32.totalorder %s80, %s83
      %p92 = scmp.eq.s32.totalorder %s35, 1
      %p93 = por %p91, %p92
      %p94 = scmp.ne.s32.totalorder %s83, %s84
      %p95 = scmp.eq.s32.totalorder %s35, 0
      %p96 = por %p94, %p95
      %p97 = scmp.ne.s32.totalorder %s83, %s84
      %p98 = scmp.eq.s32.totalorder %s36, 1
      %p99 = por %p97, %p98
      %p101 = scmp.ne.s32.totalorder %s84, %s100
      %p102 = scmp.eq.s32.totalorder %s36, 0
      %p103 = por %p101, %p102
      %s104 = ssub.s32 %s37, %s49
      %p105 = scmp.eq.s32.totalorder %s104, 0
      %s107 = sadd.s32 %s106, 1
      %s108 = scalar_select %p105, %s106, %s107
      %p111 = pneg %p105
      %p112 = scmp.eq.s32.totalorder %s30, 1
      %p113 = por %p111, %p112
      %p114 = scmp.ne.s32.totalorder %s106, %s109
      %p115 = scmp.eq.s32.totalorder %s30, 0
      %p116 = por %p114, %p115
      %p117 = scmp.ne.s32.totalorder %s106, %s109
      %p118 = scmp.eq.s32.totalorder %s35, 1
      %p119 = por %p117, %p118
      %p120 = scmp.ne.s32.totalorder %s109, %s110
      %p121 = scmp.eq.s32.totalorder %s35, 0
      %p122 = por %p120, %p121
      %p123 = scmp.ne.s32.totalorder %s109, %s110
      %p124 = scmp.eq.s32.totalorder %s36, 1
      %p125 = por %p123, %p124
      %p127 = scmp.ne.s32.totalorder %s110, %s126
      %p128 = scmp.eq.s32.totalorder %s36, 0
      %p129 = por %p127, %p128
      %s131 = sadd.s32 %s130, 1
      %p134 = scmp.eq.s32.totalorder %s30, 1
      %p135 = scmp.ne.s32.totalorder %s130, %s132
      %p136 = scmp.eq.s32.totalorder %s30, 0
      %p137 = por %p135, %p136
      %p138 = scmp.ne.s32.totalorder %s130, %s132
      %p139 = scmp.eq.s32.totalorder %s35, 1
      %p140 = por %p138, %p139
      %p141 = scmp.ne.s32.totalorder %s132, %s133
      %p142 = scmp.eq.s32.totalorder %s35, 0
      %p143 = por %p141, %p142
      %p144 = scmp.ne.s32.totalorder %s132, %s133
      %p145 = scmp.eq.s32.totalorder %s36, 1
      %p146 = por %p144, %p145
      %p148 = scmp.ne.s32.totalorder %s133, %s147
      %p149 = scmp.eq.s32.totalorder %s36, 0
      %p150 = por %p148, %p149
      %s152 = sadd.s32 %s151, 1
      %p155 = scmp.eq.s32.totalorder %s30, 1
      %p156 = scmp.ne.s32.totalorder %s151, %s153
      %p157 = scmp.eq.s32.totalorder %s30, 0
      %p158 = por %p156, %p157
      %p159 = scmp.ne.s32.totalorder %s151, %s153
      %p160 = scmp.eq.s32.totalorder %s35, 1
      %p161 = por %p159, %p160
      %p162 = scmp.ne.s32.totalorder %s153, %s154
      %p163 = scmp.eq.s32.totalorder %s35, 0
      %p164 = por %p162, %p163
      %p165 = scmp.ne.s32.totalorder %s153, %s154
      %p166 = scmp.eq.s32.totalorder %s36, 1
      %p167 = por %p165, %p166
      %p169 = scmp.ne.s32.totalorder %s154, %s168
      %p170 = scmp.eq.s32.totalorder %s36, 0
      %p171 = por %p169, %p170
      %s173 = sadd.s32 %s172, 1
      %p176 = scmp.eq.s32.totalorder %s30, 1
      %p177 = scmp.ne.s32.totalorder %s172, %s174
      %p178 = scmp.eq.s32.totalorder %s30, 0
      %p179 = por %p177, %p178
      %p180 = scmp.ne.s32.totalorder %s172, %s174
      %p181 = scmp.eq.s32.totalorder %s35, 1
      %p182 = por %p180, %p181
      %p183 = scmp.ne.s32.totalorder %s174, %s175
      %p184 = scmp.eq.s32.totalorder %s35, 0
      %p185 = por %p183, %p184
      %p186 = scmp.ne.s32.totalorder %s174, %s175
      %p187 = scmp.eq.s32.totalorder %s36, 1
      %p188 = por %p186, %p187
      %p190 = scmp.ne.s32.totalorder %s175, %s189
      %p191 = scmp.eq.s32.totalorder %s36, 0
      %p192 = por %p190, %p191
      %s194 = sadd.s32 %s193, 1
      %p197 = scmp.eq.s32.totalorder %s30, 1
      %p198 = scmp.ne.s32.totalorder %s193, %s195
      %p199 = scmp.eq.s32.totalorder %s30, 0
      %p200 = por %p198, %p199
      %p201 = scmp.ne.s32.totalorder %s193, %s195
      %p202 = scmp.eq.s32.totalorder %s35, 1
      %p203 = por %p201, %p202
      %p204 = scmp.ne.s32.totalorder %s195, %s196
      %p205 = scmp.eq.s32.totalorder %s35, 0
      %p206 = por %p204, %p205
      %p207 = scmp.ne.s32.totalorder %s195, %s196
      %p208 = scmp.eq.s32.totalorder %s36, 1
      %p209 = por %p207, %p208
      %p211 = scmp.ne.s32.totalorder %s196, %s210
      %p212 = scmp.eq.s32.totalorder %s36, 0
      %p213 = por %p211, %p212
      %s215 = sadd.s32 %s214, 1
      %p218 = scmp.eq.s32.totalorder %s30, 1
      %p219 = scmp.ne.s32.totalorder %s214, %s216
      %p220 = scmp.eq.s32.totalorder %s30, 0
      %p221 = por %p219, %p220
      %p222 = scmp.ne.s32.totalorder %s214, %s216
      %p223 = scmp.eq.s32.totalorder %s35, 1
      %p224 = por %p222, %p223
      %p225 = scmp.ne.s32.totalorder %s216, %s217
      %p226 = scmp.eq.s32.totalorder %s35, 0
      %p227 = por %p225, %p226
      %p228 = scmp.ne.s32.totalorder %s216, %s217
      %p229 = scmp.eq.s32.totalorder %s36, 1
      %p230 = por %p228, %p229
      %p232 = scmp.ne.s32.totalorder %s217, %s231
      %p233 = scmp.eq.s32.totalorder %s36, 0
      %p234 = por %p232, %p233
      %s236 = sadd.s32 %s235, 1
      %p239 = scmp.eq.s32.totalorder %s30, 1
      %p240 = scmp.ne.s32.totalorder %s235, %s237
      %p241 = scmp.eq.s32.totalorder %s30, 0
      %p242 = por %p240, %p241
      %p243 = scmp.ne.s32.totalorder %s235, %s237
      %p244 = scmp.eq.s32.totalorder %s35, 1
      %p245 = por %p243, %p244
      %p246 = scmp.ne.s32.totalorder %s237, %s238
      %p247 = scmp.eq.s32.totalorder %s35, 0
      %p248 = por %p246, %p247
      %p249 = scmp.ne.s32.totalorder %s237, %s238
      %p250 = scmp.eq.s32.totalorder %s36, 1
      %p251 = por %p249, %p250
      %p253 = scmp.ne.s32.totalorder %s238, %s252
      %p254 = scmp.eq.s32.totalorder %s36, 0
      %p255 = por %p253, %p254
      %s257 = sadd.s32 %s256, 1
      %p260 = scmp.eq.s32.totalorder %s30, 1
      %p261 = scmp.ne.s32.totalorder %s256, %s258
      %p262 = scmp.eq.s32.totalorder %s30, 0
      %p263 = por %p261, %p262
      %p264 = scmp.ne.s32.totalorder %s256, %s258
      %p265 = scmp.eq.s32.totalorder %s35, 1
      %p266 = por %p264, %p265
      %p267 = scmp.ne.s32.totalorder %s258, %s259
      %p268 = scmp.eq.s32.totalorder %s35, 0
      %p269 = por %p267, %p268
      %p270 = scmp.ne.s32.totalorder %s258, %s259
      %p271 = scmp.eq.s32.totalorder %s36, 1
      %p272 = por %p270, %p271
      %p274 = scmp.ne.s32.totalorder %s259, %s273
      %p275 = scmp.eq.s32.totalorder %s36, 0
      %p276 = por %p274, %p275
      %s278 = sadd.s32 %s277, 1
      %p281 = scmp.eq.s32.totalorder %s30, 1
      %p282 = scmp.ne.s32.totalorder %s277, %s279
      %p283 = scmp.eq.s32.totalorder %s30, 0
      %p284 = por %p282, %p283
      %p285 = scmp.ne.s32.totalorder %s277, %s279
      %p286 = scmp.eq.s32.totalorder %s35, 1
      %p287 = por %p285, %p286
      %p288 = scmp.ne.s32.totalorder %s279, %s280
      %p289 = scmp.eq.s32.totalorder %s35, 0
      %p290 = por %p288, %p289
      %p291 = scmp.ne.s32.totalorder %s279, %s280
      %p292 = scmp.eq.s32.totalorder %s36, 1
      %p293 = por %p291, %p292
      %p295 = scmp.ne.s32.totalorder %s280, %s294
      %p296 = scmp.eq.s32.totalorder %s36, 0
      %p297 = por %p295, %p296
      %s299 = sadd.s32 %s298, 1
      %p302 = scmp.eq.s32.totalorder %s30, 1
      %p303 = scmp.ne.s32.totalorder %s298, %s300
      %p304 = scmp.eq.s32.totalorder %s30, 0
      %p305 = por %p303, %p304
      %p306 = scmp.ne.s32.totalorder %s298, %s300
      %p307 = scmp.eq.s32.totalorder %s35, 1
      %p308 = por %p306, %p307
      %p309 = scmp.ne.s32.totalorder %s300, %s301
      %p310 = scmp.eq.s32.totalorder %s35, 0
      %p311 = por %p309, %p310
      %p312 = scmp.ne.s32.totalorder %s300, %s301
      %p313 = scmp.eq.s32.totalorder %s36, 1
      %p314 = por %p312, %p313
      %p316 = scmp.ne.s32.totalorder %s301, %s315
      %p317 = scmp.eq.s32.totalorder %s36, 0
      %p318 = por %p316, %p317
      %s320 = sadd.s32 %s319, 1
      %p323 = scmp.eq.s32.totalorder %s30, 1
      %p324 = scmp.ne.s32.totalorder %s319, %s321
      %p325 = scmp.eq.s32.totalorder %s30, 0
      %p326 = por %p324, %p325
      %p327 = scmp.ne.s32.totalorder %s319, %s321
      %p328 = scmp.eq.s32.totalorder %s35, 1
      %p329 = por %p327, %p328
      %p330 = scmp.ne.s32.totalorder %s321, %s322
      %p331 = scmp.eq.s32.totalorder %s35, 0
      %p332 = por %p330, %p331
      %p333 = scmp.ne.s32.totalorder %s321, %s322
      %p334 = scmp.eq.s32.totalorder %s36, 1
      %p335 = por %p333, %p334
      %p337 = scmp.ne.s32.totalorder %s322, %s336
      %p338 = scmp.eq.s32.totalorder %s36, 0
      %p339 = por %p337, %p338
      %s341 = sadd.s32 %s340, 1
      %p344 = scmp.eq.s32.totalorder %s30, 1
      %p345 = scmp.ne.s32.totalorder %s340, %s342
      %p346 = scmp.eq.s32.totalorder %s30, 0
      %p347 = por %p345, %p346
      %p348 = scmp.ne.s32.totalorder %s340, %s342
      %p349 = scmp.eq.s32.totalorder %s35, 1
      %p350 = por %p348, %p349
      %p351 = scmp.ne.s32.totalorder %s342, %s343
      %p352 = scmp.eq.s32.totalorder %s35, 0
      %p353 = por %p351, %p352
      %p354 = scmp.ne.s32.totalorder %s342, %s343
      %p355 = scmp.eq.s32.totalorder %s36, 1
      %p356 = por %p354, %p355
      %p358 = scmp.ne.s32.totalorder %s343, %s357
      %p359 = scmp.eq.s32.totalorder %s36, 0
      %p360 = por %p358, %p359
      %s362 = sadd.s32 %s361, 1
      %p365 = scmp.eq.s32.totalorder %s30, 1
      %p366 = scmp.ne.s32.totalorder %s361, %s363
      %p367 = scmp.eq.s32.totalorder %s30, 0
      %p368 = por %p366, %p367
      %p369 = scmp.ne.s32.totalorder %s361, %s363
      %p370 = scmp.eq.s32.totalorder %s35, 1
      %p371 = por %p369, %p370
      %p372 = scmp.ne.s32.totalorder %s363, %s364
      %p373 = scmp.eq.s32.totalorder %s35, 0
      %p374 = por %p372, %p373
      %p375 = scmp.ne.s32.totalorder %s363, %s364
      %p376 = scmp.eq.s32.totalorder %s36, 1
      %p377 = por %p375, %p376
      %p379 = scmp.ne.s32.totalorder %s364, %s378
      %p380 = scmp.eq.s32.totalorder %s36, 0
      %p381 = por %p379, %p380
      %s382 = ssub.s32 %s37, %s49
      %s383 = ssub.s32 %s38, %s45
      %s384 = sor.u32 %s382, %s383
      %p385 = scmp.eq.s32.totalorder %s384, 0
      %s387 = sadd.s32 %s386, 1
      %s388 = scalar_select %p385, %s386, %s387
      %p391 = pneg %p385
      %p392 = scmp.eq.s32.totalorder %s30, 1
      %p393 = por %p391, %p392
      %p394 = scmp.ne.s32.totalorder %s386, %s389
      %p395 = scmp.eq.s32.totalorder %s30, 0
      %p396 = por %p394, %p395
      %p397 = scmp.ne.s32.totalorder %s386, %s389
      %p398 = scmp.eq.s32.totalorder %s35, 1
      %p399 = por %p397, %p398
      %p400 = scmp.ne.s32.totalorder %s389, %s390
      %p401 = scmp.eq.s32.totalorder %s35, 0
      %p402 = por %p400, %p401
      %p403 = scmp.ne.s32.totalorder %s389, %s390
      %p404 = scmp.eq.s32.totalorder %s36, 1
      %p405 = por %p403, %p404
      %p407 = scmp.ne.s32.totalorder %s390, %s406
      %p408 = scmp.eq.s32.totalorder %s36, 0
      %p409 = por %p407, %p408
      %p410 = scmp.le.s32.totalorder 1, %s30
      %p411 = scmp.lt.s32.totalorder %s30, 3
      %p412 = pnand %p410, %p411
      %p413 = pneg %p412
      // Predicated region
      $region9: #{tpu_custom_call.1} parent=5 // pred_check
        _
      $region10: #{tpu_custom_call.1} parent=5 // pred_check_branch
        %415 = sbr.rel (%p412) target = $region12
      $region11: #{tpu_custom_call.1} parent=5 // pred_region
        %s416 = ssub.s32 %s30, 1
        // Predicated region
        $region13: #{tpu_custom_call.1} parent=11 // pred_check
          %p417 = pneg %p143
        $region14: #{tpu_custom_call.1} parent=11 // pred_check_branch
          %419 = sbr.rel (%p417) target = $region16
        $region15: #{tpu_custom_call.1} parent=11 // pred_region
          _
        $region16: #{tpu_custom_call.1} parent=11 // pred_fallthru
          _
        // Predicated region
        $region17: #{tpu_custom_call.1} parent=11 // pred_check
          %p420 = pneg %p164
        $region18: #{tpu_custom_call.1} parent=11 // pred_check_branch
          %422 = sbr.rel (%p420) target = $region20
        $region19: #{tpu_custom_call.1} parent=11 // pred_region
          _
        $region20: #{tpu_custom_call.1} parent=11 // pred_fallthru
          _
        // Predicated region
        $region21: #{tpu_custom_call.1} parent=11 // pred_check
          %p423 = pneg %p185
        $region22: #{tpu_custom_call.1} parent=11 // pred_check_branch
          %425 = sbr.rel (%p423) target = $region24
        $region23: #{tpu_custom_call.1} parent=11 // pred_region
          _
        $region24: #{tpu_custom_call.1} parent=11 // pred_fallthru
          _
        // Predicated region
        $region25: #{tpu_custom_call.1} parent=11 // pred_check
          %p426 = pneg %p206
        $region26: #{tpu_custom_call.1} parent=11 // pred_check_branch
          %428 = sbr.rel (%p426) target = $region28
        $region27: #{tpu_custom_call.1} parent=11 // pred_region
          _
        $region28: #{tpu_custom_call.1} parent=11 // pred_fallthru
          _
        // Predicated region
        $region29: #{tpu_custom_call.1} parent=11 // pred_check
          %p429 = pneg %p227
        $region30: #{tpu_custom_call.1} parent=11 // pred_check_branch
          %431 = sbr.rel (%p429) target = $region32
        $region31: #{tpu_custom_call.1} parent=11 // pred_region
          _
        $region32: #{tpu_custom_call.1} parent=11 // pred_fallthru
          _
        // Predicated region
        $region33: #{tpu_custom_call.1} parent=11 // pred_check
          %p432 = pneg %p248
        $region34: #{tpu_custom_call.1} parent=11 // pred_check_branch
          %434 = sbr.rel (%p432) target = $region36
        $region35: #{tpu_custom_call.1} parent=11 // pred_region
          _
        $region36: #{tpu_custom_call.1} parent=11 // pred_fallthru
          _
        // Predicated region
        $region37: #{tpu_custom_call.1} parent=11 // pred_check
          %p435 = pneg %p269
        $region38: #{tpu_custom_call.1} parent=11 // pred_check_branch
          %437 = sbr.rel (%p435) target = $region40
        $region39: #{tpu_custom_call.1} parent=11 // pred_region
          %s439 = ssub.s32 512, 512
          %440 = vsyncadd [#allocation6], %s439
          %s441 = sshll.u32 [#allocation7], 4
          %s442 = int_to_ptr.vmem [resolvable:$true] %s441
          %447 = dma.hbm_to_vmem [thread:$0]  %s9, 512, %s442, [#allocation6], 128, 128, 8
        $region40: #{tpu_custom_call.1} parent=11 // pred_fallthru
          _
        // Predicated region
        $region41: #{tpu_custom_call.1} parent=11 // pred_check
          %p448 = pneg %p290
        $region42: #{tpu_custom_call.1} parent=11 // pred_check_branch
          %450 = sbr.rel (%p448) target = $region44
        $region43: #{tpu_custom_call.1} parent=11 // pred_region
          _
        $region44: #{tpu_custom_call.1} parent=11 // pred_fallthru
          _
        // Predicated region
        $region45: #{tpu_custom_call.1} parent=11 // pred_check
          %p451 = pneg %p311
        $region46: #{tpu_custom_call.1} parent=11 // pred_check_branch
          %453 = sbr.rel (%p451) target = $region48
        $region47: #{tpu_custom_call.1} parent=11 // pred_region
          _
        $region48: #{tpu_custom_call.1} parent=11 // pred_fallthru
          _
        // Predicated region
        $region49: #{tpu_custom_call.1} parent=11 // pred_check
          %p454 = pneg %p332
        $region50: #{tpu_custom_call.1} parent=11 // pred_check_branch
          %456 = sbr.rel (%p454) target = $region52
        $region51: #{tpu_custom_call.1} parent=11 // pred_region
          _
        $region52: #{tpu_custom_call.1} parent=11 // pred_fallthru
          _
        // Predicated region
        $region53: #{tpu_custom_call.1} parent=11 // pred_check
          %p457 = pneg %p353
        $region54: #{tpu_custom_call.1} parent=11 // pred_check_branch
          %459 = sbr.rel (%p457) target = $region56
        $region55: #{tpu_custom_call.1} parent=11 // pred_region
          _
        $region56: #{tpu_custom_call.1} parent=11 // pred_fallthru
          _
        // Predicated region
        $region57: #{tpu_custom_call.1} parent=11 // pred_check
          %p460 = pneg %p374
        $region58: #{tpu_custom_call.1} parent=11 // pred_check_branch
          %462 = sbr.rel (%p460) target = $region60
        $region59: #{tpu_custom_call.1} parent=11 // pred_region
          _
        $region60: #{tpu_custom_call.1} parent=11 // pred_fallthru
          _
      $region12: #{tpu_custom_call.1} parent=5 // pred_fallthru
        _
      %p463 = scmp.lt.s32.totalorder %s30, 2
      // Predicated region
      $region61: #{tpu_custom_call.1} parent=5 // pred_check
        %p464 = pneg %p463
      $region62: #{tpu_custom_call.1} parent=5 // pred_check_branch
        %466 = sbr.rel (%p464) target = $region64
      $region63: #{tpu_custom_call.1} parent=5 // pred_region
        // Predicated region
        $region65: #{tpu_custom_call.1} parent=63 // pred_check
          %p467 = pneg %p64
        $region66: #{tpu_custom_call.1} parent=63 // pred_check_branch
          %469 = sbr.rel (%p467) target = $region68
        $region67: #{tpu_custom_call.1} parent=63 // pred_region
          %s470 = sand.u32 %s54, 1
          %s471 = scalar_lea.sflag [#allocation3], %s470
          %s472 = sand.u32 %s54, 1
          %s473 = smul.addr %s472, 8
          %s474 = scalar_lea.vmem [#allocation2], %s473
          %s476 = ssub.s32 128, 128
          %477 = vsyncadd %s471, %s476
          %s478 = sadd.s32 %s38, %s37
          %s479 = smul.addr %s478, 128
          %s480 = scalar_lea.hbm %s0, %s479
          %s482 = sshll.u32 %s474, 4
          %s483 = int_to_ptr.vmem [resolvable:$true] %s482
          %485 = dma.hbm_to_vmem [thread:$0]  %s480, 128, %s483, %s471
        $region68: #{tpu_custom_call.1} parent=63 // pred_fallthru
          _
        // Predicated region
        $region69: #{tpu_custom_call.1} parent=63 // pred_check
          %p486 = pneg %p90
        $region70: #{tpu_custom_call.1} parent=63 // pred_check_branch
          %488 = sbr.rel (%p486) target = $region72
        $region71: #{tpu_custom_call.1} parent=63 // pred_region
          %s489 = sand.u32 %s30, 1
          %s490 = scalar_lea.sflag [#allocation6], %s489
          %s491 = sand.u32 %s80, 1
          %s492 = smul.addr %s491, 8
          %s493 = scalar_lea.vmem [#allocation5], %s492
          %s495 = ssub.s32 128, 128
          %496 = vsyncadd %s490, %s495
          %s497 = smul.addr %s37, 128
          %s498 = scalar_lea.hbm %s1, %s497
          %s500 = sshll.u32 %s493, 4
          %s501 = int_to_ptr.vmem [resolvable:$true] %s500
          %503 = dma.hbm_to_vmem [thread:$0]  %s498, 128, %s501, %s490
        $region72: #{tpu_custom_call.1} parent=63 // pred_fallthru
          _
        // Predicated region
        $region73: #{tpu_custom_call.1} parent=63 // pred_check
          %p504 = pneg %p116
        $region74: #{tpu_custom_call.1} parent=63 // pred_check_branch
          %506 = sbr.rel (%p504) target = $region76
        $region75: #{tpu_custom_call.1} parent=63 // pred_region
          %p507 = scmp.lt.s32.totalorder %s37, 1
          %s508 = scalar_select %p507, %s37, 1
          %s509 = scalar_lea.vmem %s2, %s508
        $region76: #{tpu_custom_call.1} parent=63 // pred_fallthru
          _
      $region64: #{tpu_custom_call.1} parent=5 // pred_fallthru
        _
      %p510 = scmp.le.s32.totalorder 1, %s30
      %p511 = scmp.lt.s32.totalorder %s30, 3
      %p512 = pnand %p510, %p511
      %p513 = pneg %p512
      // Predicated region
      $region77: #{tpu_custom_call.1} parent=5 // pred_check
        _
      $region78: #{tpu_custom_call.1} parent=5 // pred_check_branch
        %515 = sbr.rel (%p512) target = $region80
      $region79: #{tpu_custom_call.1} parent=5 // pred_region
        %s516 = ssub.s32 %s30, 1
        %s517 = sand.u32 %s57, 1
        %s518 = scalar_lea.sflag [#allocation3], %s517
        %s519 = sand.u32 %s57, 1
        %s520 = smul.addr %s519, 8
        %s521 = scalar_lea.vmem [#allocation2], %s520
        // Predicated region
        $region81: #{tpu_custom_call.1} parent=79 // pred_check
          %p522 = pneg %p70
        $region82: #{tpu_custom_call.1} parent=79 // pred_check_branch
          %524 = sbr.rel (%p522) target = $region84
        $region83: #{tpu_custom_call.1} parent=79 // pred_region
          %525 = dma.done %s518, 128
        $region84: #{tpu_custom_call.1} parent=79 // pred_fallthru
          _
        %s526 = sand.u32 %s35, 1
        %s527 = scalar_lea.sflag [#allocation6], %s526
        %s528 = sand.u32 %s83, 1
        %s529 = smul.addr %s528, 8
        %s530 = scalar_lea.vmem [#allocation5], %s529
        // Predicated region
        $region85: #{tpu_custom_call.1} parent=79 // pred_check
          %p531 = pneg %p96
        $region86: #{tpu_custom_call.1} parent=79 // pred_check_branch
          %533 = sbr.rel (%p531) target = $region88
        $region87: #{tpu_custom_call.1} parent=79 // pred_region
          %534 = dma.done %s527, 128
        $region88: #{tpu_custom_call.1} parent=79 // pred_fallthru
          _
        // Predicated region
        $region89: #{tpu_custom_call.1} parent=79 // pred_check
          %p535 = pneg %p269
        $region90: #{tpu_custom_call.1} parent=79 // pred_check_branch
          %537 = sbr.rel (%p535) target = $region92
        $region91: #{tpu_custom_call.1} parent=79 // pred_region
          %538 = dma.done [#allocation6], 512
        $region92: #{tpu_custom_call.1} parent=79 // pred_fallthru
          _
        %s539 = sand.u32 %s57, 1
        %s540 = scalar_lea.sflag [#allocation3], %s539
        %s541 = sand.u32 %s57, 1
        %s542 = smul.addr %s541, 8
        %s543 = scalar_lea.vmem [#allocation2], %s542
        %p544 = pneg %p70
        %p545 = pneg %p67
        %s546 = sand.u32 %s35, 1
        %s547 = scalar_lea.sflag [#allocation6], %s546
        %s548 = sand.u32 %s83, 1
        %s549 = smul.addr %s548, 8
        %s550 = scalar_lea.vmem [#allocation5], %s549
        %p551 = pneg %p96
        %p552 = pneg %p93
        %p553 = scmp.lt.s32.totalorder %s39, 1
        %s554 = scalar_select %p553, %s39, 1
        %s555 = scalar_lea.vmem %s2, %s554
        %p556 = pneg %p122
        %p557 = pneg %p119
        %p558 = pneg %p143
        %p559 = pneg %p140
        %p560 = pneg %p164
        %p561 = pneg %p161
        %p562 = pneg %p185
        %p563 = pneg %p182
        %p564 = pneg %p206
        %p565 = pneg %p203
        %p566 = pneg %p227
        %p567 = pneg %p224
        %p568 = pneg %p248
        %p569 = pneg %p245
        %p570 = pneg %p269
        %p571 = pneg %p266
        %p572 = pneg %p290
        %p573 = pneg %p287
        %p574 = pneg %p311
        %p575 = pneg %p308
        %p576 = pneg %p332
        %p577 = pneg %p329
        %p578 = pneg %p353
        %p579 = pneg %p350
        %p580 = pneg %p374
        %p581 = pneg %p371
        %p582 = pneg %p402
        %p583 = pneg %p399
        %s584 = sand.u32 %s389, 1
        %s585 = scalar_lea.sflag [#allocation4], %s584
        %s586 = sand.u32 %s389, 1
        %s587 = smul.addr %s586, 8
        %s588 = scalar_lea.vmem [#allocation8], %s587
        %p589 = scmp.lt.s32.totalorder %s39, 1
        %s590 = scalar_select %p589, %s39, 1
        %s591 = scalar_lea.vmem %s2, %s590
        %v592 = vld [vmem:[%s521] sm:$0xff]
        %v593 = vld [vmem:[%s3] sm:$0xff]
        %v594 = vld [vmem:[%s3 + $0x8] sm:$0xff]
        %v595 = vld [vmem:[%s3 + $0x10] sm:$0xff]
        %v596 = vld [vmem:[%s3 + $0x18] sm:$0xff]
        %vm597 = vcmask 261120
        %v599 = vsel %vm597, %v592, 0
        %601 = vmatprep.subr.mxu0 0.0
        %602 = vmatpush1.msra.mxu0 %v593
        %603 = vmatprep.subr.mxu0 0.0
        %604 = vmatpush1.msra.mxu0 %v594
        %605 = vmatprep.subr.mxu0 0.0
        %606 = vmatpush1.msra.mxu0 %v595
        %607 = vmatprep.subr.mxu0 0.0
        %608 = vmatpush1.msra.mxu0 %v596
        %609 = vmatprep.subr.mxu0 0.0
        %610 = vmatpush1.msra.mxu0 0.0
        %611 = vmatprep.subr.mxu0 0.0
        %612 = vmatpush1.msra.mxu0 0.0
        %613 = vmatprep.subr.mxu0 0.0
        %614 = vmatpush1.msra.mxu0 0.0
        %615 = vmatprep.subr.mxu0 0.0
        %616 = vmatpush1.msra.mxu0 0.0
        %617 = vmatprep.subr.mxu0 0.0
        %618 = vmatpush1.msra.mxu0 0.0
        %619 = vmatprep.subr.mxu0 0.0
        %620 = vmatpush1.msra.mxu0 0.0
        %621 = vmatprep.subr.mxu0 0.0
        %622 = vmatpush1.msra.mxu0 0.0
        %623 = vmatprep.subr.mxu0 0.0
        %624 = vmatpush1.msra.mxu0 0.0
        %625 = vmatprep.subr.mxu0 0.0
        %626 = vmatpush1.msra.mxu0 0.0
        %627 = vmatprep.subr.mxu0 0.0
        %628 = vmatpush1.msra.mxu0 0.0
        %629 = vmatprep.subr.mxu0 0.0
        %630 = vmatpush1.msra.mxu0 0.0
        %631 = vmatprep.subr.mxu0 0.0
        %632 = vmatpush1.msra.mxu0 0.0
        %633 = vmatprep.subr.mxu0 0.0
        %634 = vmatpush1.msra.mxu0 0.0
        %635 = vmatprep.subr.mxu0 0.0
        %636 = vmatpush1.msra.mxu0 0.0
        %637 = vmatprep.subr.mxu0 0.0
        %638 = vmatpush1.msra.mxu0 0.0
        %639 = vmatprep.subr.mxu0 0.0
        %640 = vmatpush1.msra.mxu0 0.0
        %641 = vmatprep.subr.mxu0 0.0
        %642 = vmatpush1.msra.mxu0 0.0
        %643 = vmatprep.subr.mxu0 0.0
        %644 = vmatpush1.msra.mxu0 0.0
        %645 = vmatprep.subr.mxu0 0.0
        %646 = vmatpush1.msra.mxu0 0.0
        %647 = vmatprep.subr.mxu0 0.0
        %648 = vmatpush1.msra.mxu0 0.0
        %649 = vmatprep.subr.mxu0 0.0
        %650 = vmatpush1.msra.mxu0 0.0
        %651 = vmatprep.subr.mxu0 0.0
        %652 = vmatpush1.msra.mxu0 0.0
        %653 = vmatprep.subr.mxu0 0.0
        %654 = vmatpush1.msra.mxu0 0.0
        %655 = vmatprep.subr.mxu0 0.0
        %656 = vmatpush1.msra.mxu0 0.0
        %657 = vmatprep.subr.mxu0 0.0
        %658 = vmatpush1.msra.mxu0 0.0
        %659 = vmatprep.subr.mxu0 0.0
        %660 = vmatpush1.msra.mxu0 0.0
        %661 = vmatprep.subr.mxu0 0.0
        %662 = vmatpush1.msra.mxu0 0.0
        %663 = vmatprep.subr.mxu0 0.0
        %664 = vmatpush1.msra.mxu0 0.0
        %665 = vmatprep.mubr.f32.mxu0 0.0
        %666 = vmatmul.mubr.f32.gmra.mrb[0].mxu0 %v599
        %v667 = vpop.f32.mrb[0].mxu0
        %v668 = vadd.f32 0.0, %v667
        %v669 = vpop.f32.mrb[0].mxu0
        %670 = vdwg.mxu0
        %672 = vrot.lane.b32.xlu0 %v668, 120
        %v673 = vpop.permute.xlu0 %672
        %675 = vrot.lane.b32.xlu0 %v668, 112
        %v676 = vpop.permute.xlu0 %675
        %678 = vrot.lane.b32.xlu0 %v668, 104
        %v679 = vpop.permute.xlu0 %678
        %v681 = vcombine.low %v668, %v676
        %v682 = vcombine.high %v668, %v676
        %v684 = vunpack.c.l.s4 1983009808
        %v685 = vunpack.c.0.s8 %v684
        %v686 = vlaneseq
        %v687 = vshrl.u32 %v686, 7
        %v688 = vsub.s32 %v685, %v687
        %v689 = vrot.slane %v681, %v688
        %v691 = vunpack.c.l.s4 1983009808
        %v692 = vunpack.c.0.s8 %v691
        %v693 = vlaneseq
        %v694 = vshrl.u32 %v693, 7
        %v695 = vsub.s32 %v692, %v694
        %v696 = vrot.slane %v682, %v695
        %v697 = vcombine.low %v673, %v679
        %v698 = vcombine.high %v673, %v679
        %v700 = vunpack.c.l.s4 1983009808
        %v701 = vunpack.c.0.s8 %v700
        %v702 = vlaneseq
        %v703 = vshrl.u32 %v702, 7
        %v704 = vsub.s32 %v701, %v703
        %v705 = vrot.slane %v697, %v704
        %v707 = vunpack.c.l.s4 1983009808
        %v708 = vunpack.c.0.s8 %v707
        %v709 = vlaneseq
        %v710 = vshrl.u32 %v709, 7
        %v711 = vsub.s32 %v708, %v710
        %v712 = vrot.slane %v698, %v711
        %v713 = vcombine.low %v689, %v705
        %v714 = vcombine.high %v689, %v705
        %v716 = vunpack.c.l.s4 1934713408
        %v717 = vunpack.c.0.s8 %v716
        %v718 = vlaneseq
        %v719 = vshrl.u32 %v718, 7
        %v720 = vsub.s32 %v717, %v719
        %v721 = vrot.slane %v713, %v720
        %v723 = vunpack.c.l.s4 1934713408
        %v724 = vunpack.c.0.s8 %v723
        %v725 = vlaneseq
        %v726 = vshrl.u32 %v725, 7
        %v727 = vsub.s32 %v724, %v726
        %v728 = vrot.slane %v714, %v727
        %v729 = vcombine.low %v696, %v712
        %v730 = vcombine.high %v696, %v712
        %v732 = vunpack.c.l.s4 1934713408
        %v733 = vunpack.c.0.s8 %v732
        %v734 = vlaneseq
        %v735 = vshrl.u32 %v734, 7
        %v736 = vsub.s32 %v733, %v735
        %v737 = vrot.slane %v729, %v736
        %v739 = vunpack.c.l.s4 1934713408
        %v740 = vunpack.c.0.s8 %v739
        %v741 = vlaneseq
        %v742 = vshrl.u32 %v741, 7
        %v743 = vsub.s32 %v740, %v742
        %v744 = vrot.slane %v730, %v743
        %v745 = vcombine.high %v721, 0.0
        %v746 = vcombine.high %v728, 0.0
        %v747 = vcombine.high %v737, 0.0
        %v748 = vcombine.high %v744, 0.0
        %v749 = vcombine.low %v721, %v728
        %v751 = vunpack.c.l.s4 1983009808
        %v752 = vunpack.c.0.s8 %v751
        %v753 = vlaneseq
        %v754 = vshrl.u32 %v753, 7
        %v755 = vsub.s32 %v752, %v754
        %v756 = vrot.slane %v749, %v755
        %v757 = vcombine.low %v745, %v746
        %v759 = vunpack.c.l.s4 1983009808
        %v760 = vunpack.c.0.s8 %v759
        %v761 = vlaneseq
        %v762 = vshrl.u32 %v761, 7
        %v763 = vsub.s32 %v760, %v762
        %v764 = vrot.slane %v757, %v763
        %v765 = vcombine.low %v737, %v744
        %v767 = vunpack.c.l.s4 1983009808
        %v768 = vunpack.c.0.s8 %v767
        %v769 = vlaneseq
        %v770 = vshrl.u32 %v769, 7
        %v771 = vsub.s32 %v768, %v770
        %v772 = vrot.slane %v765, %v771
        %v773 = vcombine.low %v747, %v748
        %v775 = vunpack.c.l.s4 1983009808
        %v776 = vunpack.c.0.s8 %v775
        %v777 = vlaneseq
        %v778 = vshrl.u32 %v777, 7
        %v779 = vsub.s32 %v776, %v778
        %v780 = vrot.slane %v773, %v779
        %v781 = vcombine.low %v756, %v764
        %v782 = vcombine.high %v756, %v764
        %v784 = vunpack.c.l.s4 1934713408
        %v785 = vunpack.c.0.s8 %v784
        %v786 = vlaneseq
        %v787 = vshrl.u32 %v786, 7
        %v788 = vsub.s32 %v785, %v787
        %v789 = vrot.slane %v781, %v788
        %v791 = vunpack.c.l.s4 1934713408
        %v792 = vunpack.c.0.s8 %v791
        %v793 = vlaneseq
        %v794 = vshrl.u32 %v793, 7
        %v795 = vsub.s32 %v792, %v794
        %v796 = vrot.slane %v782, %v795
        %v797 = vcombine.low %v772, %v780
        %v798 = vcombine.high %v772, %v780
        %v800 = vunpack.c.l.s4 1934713408
        %v801 = vunpack.c.0.s8 %v800
        %v802 = vlaneseq
        %v803 = vshrl.u32 %v802, 7
        %v804 = vsub.s32 %v801, %v803
        %v805 = vrot.slane %v797, %v804
        %v807 = vunpack.c.l.s4 1934713408
        %v808 = vunpack.c.0.s8 %v807
        %v809 = vlaneseq
        %v810 = vshrl.u32 %v809, 7
        %v811 = vsub.s32 %v808, %v810
        %v812 = vrot.slane %v798, %v811
        %v813 = vcombine.low %v789, %v805
        %v814 = vcombine.high %v789, %v805
        %v815 = vcombine.low %v796, %v812
        %v816 = vcombine.high %v796, %v812
        %v817 = vld [vmem:[%s530] sm:$0xff]
        %v818 = vld [vmem:[%s4] sm:$0xff]
        %v819 = vld [vmem:[%s4 + $0x8] sm:$0xff]
        %v820 = vld [vmem:[%s4 + $0x10] sm:$0xff]
        %v821 = vld [vmem:[%s4 + $0x18] sm:$0xff]
        %v823 = vsel %vm597, %v817, 0
        %825 = vmatprep.subr.mxu0 0.0
        %826 = vmatpush1.msra.mxu0 %v818
        %827 = vmatprep.subr.mxu0 0.0
        %828 = vmatpush1.msra.mxu0 %v819
        %829 = vmatprep.subr.mxu0 0.0
        %830 = vmatpush1.msra.mxu0 %v820
        %831 = vmatprep.subr.mxu0 0.0
        %832 = vmatpush1.msra.mxu0 %v821
        %833 = vmatprep.subr.mxu0 0.0
        %834 = vmatpush1.msra.mxu0 0.0
        %835 = vmatprep.subr.mxu0 0.0
        %836 = vmatpush1.msra.mxu0 0.0
        %837 = vmatprep.subr.mxu0 0.0
        %838 = vmatpush1.msra.mxu0 0.0
        %839 = vmatprep.subr.mxu0 0.0
        %840 = vmatpush1.msra.mxu0 0.0
        %841 = vmatprep.subr.mxu0 0.0
        %842 = vmatpush1.msra.mxu0 0.0
        %843 = vmatprep.subr.mxu0 0.0
        %844 = vmatpush1.msra.mxu0 0.0
        %845 = vmatprep.subr.mxu0 0.0
        %846 = vmatpush1.msra.mxu0 0.0
        %847 = vmatprep.subr.mxu0 0.0
        %848 = vmatpush1.msra.mxu0 0.0
        %849 = vmatprep.subr.mxu0 0.0
        %850 = vmatpush1.msra.mxu0 0.0
        %851 = vmatprep.subr.mxu0 0.0
        %852 = vmatpush1.msra.mxu0 0.0
        %853 = vmatprep.subr.mxu0 0.0
        %854 = vmatpush1.msra.mxu0 0.0
        %855 = vmatprep.subr.mxu0 0.0
        %856 = vmatpush1.msra.mxu0 0.0
        %857 = vmatprep.subr.mxu0 0.0
        %858 = vmatpush1.msra.mxu0 0.0
        %859 = vmatprep.subr.mxu0 0.0
        %860 = vmatpush1.msra.mxu0 0.0
        %861 = vmatprep.subr.mxu0 0.0
        %862 = vmatpush1.msra.mxu0 0.0
        %863 = vmatprep.subr.mxu0 0.0
        %864 = vmatpush1.msra.mxu0 0.0
        %865 = vmatprep.subr.mxu0 0.0
        %866 = vmatpush1.msra.mxu0 0.0
        %867 = vmatprep.subr.mxu0 0.0
        %868 = vmatpush1.msra.mxu0 0.0
        %869 = vmatprep.subr.mxu0 0.0
        %870 = vmatpush1.msra.mxu0 0.0
        %871 = vmatprep.subr.mxu0 0.0
        %872 = vmatpush1.msra.mxu0 0.0
        %873 = vmatprep.subr.mxu0 0.0
        %874 = vmatpush1.msra.mxu0 0.0
        %875 = vmatprep.subr.mxu0 0.0
        %876 = vmatpush1.msra.mxu0 0.0
        %877 = vmatprep.subr.mxu0 0.0
        %878 = vmatpush1.msra.mxu0 0.0
        %879 = vmatprep.subr.mxu0 0.0
        %880 = vmatpush1.msra.mxu0 0.0
        %881 = vmatprep.subr.mxu0 0.0
        %882 = vmatpush1.msra.mxu0 0.0
        %883 = vmatprep.subr.mxu0 0.0
        %884 = vmatpush1.msra.mxu0 0.0
        %885 = vmatprep.subr.mxu0 0.0
        %886 = vmatpush1.msra.mxu0 0.0
        %887 = vmatprep.subr.mxu0 0.0
        %888 = vmatpush1.msra.mxu0 0.0
        %889 = vmatprep.mubr.f32.mxu0 0.0
        %890 = vmatmul.mubr.f32.gmra.mrb[0].mxu0 %v823
        %v891 = vpop.f32.mrb[0].mxu0
        %v892 = vadd.f32 0.0, %v891
        %v893 = vpop.f32.mrb[0].mxu0
        %894 = vdwg.mxu0
        %896 = vrot.lane.b32.xlu0 %v892, 120
        %v897 = vpop.permute.xlu0 %896
        %899 = vrot.lane.b32.xlu0 %v892, 112
        %v900 = vpop.permute.xlu0 %899
        %902 = vrot.lane.b32.xlu0 %v892, 104
        %v903 = vpop.permute.xlu0 %902
        %v905 = vcombine.low %v892, %v900
        %v906 = vcombine.high %v892, %v900
        %v908 = vunpack.c.l.s4 1983009808
        %v909 = vunpack.c.0.s8 %v908
        %v910 = vlaneseq
        %v911 = vshrl.u32 %v910, 7
        %v912 = vsub.s32 %v909, %v911
        %v913 = vrot.slane %v905, %v912
        %v915 = vunpack.c.l.s4 1983009808
        %v916 = vunpack.c.0.s8 %v915
        %v917 = vlaneseq
        %v918 = vshrl.u32 %v917, 7
        %v919 = vsub.s32 %v916, %v918
        %v920 = vrot.slane %v906, %v919
        %v921 = vcombine.low %v897, %v903
        %v922 = vcombine.high %v897, %v903
        %v924 = vunpack.c.l.s4 1983009808
        %v925 = vunpack.c.0.s8 %v924
        %v926 = vlaneseq
        %v927 = vshrl.u32 %v926, 7
        %v928 = vsub.s32 %v925, %v927
        %v929 = vrot.slane %v921, %v928
        %v931 = vunpack.c.l.s4 1983009808
        %v932 = vunpack.c.0.s8 %v931
        %v933 = vlaneseq
        %v934 = vshrl.u32 %v933, 7
        %v935 = vsub.s32 %v932, %v934
        %v936 = vrot.slane %v922, %v935
        %v937 = vcombine.low %v913, %v929
        %v938 = vcombine.high %v913, %v929
        %v940 = vunpack.c.l.s4 1934713408
        %v941 = vunpack.c.0.s8 %v940
        %v942 = vlaneseq
        %v943 = vshrl.u32 %v942, 7
        %v944 = vsub.s32 %v941, %v943
        %v945 = vrot.slane %v937, %v944
        %v947 = vunpack.c.l.s4 1934713408
        %v948 = vunpack.c.0.s8 %v947
        %v949 = vlaneseq
        %v950 = vshrl.u32 %v949, 7
        %v951 = vsub.s32 %v948, %v950
        %v952 = vrot.slane %v938, %v951
        %v953 = vcombine.low %v920, %v936
        %v954 = vcombine.high %v920, %v936
        %v956 = vunpack.c.l.s4 1934713408
        %v957 = vunpack.c.0.s8 %v956
        %v958 = vlaneseq
        %v959 = vshrl.u32 %v958, 7
        %v960 = vsub.s32 %v957, %v959
        %v961 = vrot.slane %v953, %v960
        %v963 = vunpack.c.l.s4 1934713408
        %v964 = vunpack.c.0.s8 %v963
        %v965 = vlaneseq
        %v966 = vshrl.u32 %v965, 7
        %v967 = vsub.s32 %v964, %v966
        %v968 = vrot.slane %v954, %v967
        %v969 = vcombine.high %v945, 0.0
        %v970 = vcombine.high %v952, 0.0
        %v971 = vcombine.high %v961, 0.0
        %v972 = vcombine.high %v968, 0.0
        %v973 = vcombine.low %v945, %v952
        %v975 = vunpack.c.l.s4 1983009808
        %v976 = vunpack.c.0.s8 %v975
        %v977 = vlaneseq
        %v978 = vshrl.u32 %v977, 7
        %v979 = vsub.s32 %v976, %v978
        %v980 = vrot.slane %v973, %v979
        %v981 = vcombine.low %v969, %v970
        %v983 = vunpack.c.l.s4 1983009808
        %v984 = vunpack.c.0.s8 %v983
        %v985 = vlaneseq
        %v986 = vshrl.u32 %v985, 7
        %v987 = vsub.s32 %v984, %v986
        %v988 = vrot.slane %v981, %v987
        %v989 = vcombine.low %v961, %v968
        %v991 = vunpack.c.l.s4 1983009808
        %v992 = vunpack.c.0.s8 %v991
        %v993 = vlaneseq
        %v994 = vshrl.u32 %v993, 7
        %v995 = vsub.s32 %v992, %v994
        %v996 = vrot.slane %v989, %v995
        %v997 = vcombine.low %v971, %v972
        %v999 = vunpack.c.l.s4 1983009808
        %v1000 = vunpack.c.0.s8 %v999
        %v1001 = vlaneseq
        %v1002 = vshrl.u32 %v1001, 7
        %v1003 = vsub.s32 %v1000, %v1002
        %v1004 = vrot.slane %v997, %v1003
        %v1005 = vcombine.low %v980, %v988
        %v1006 = vcombine.high %v980, %v988
        %v1008 = vunpack.c.l.s4 1934713408
        %v1009 = vunpack.c.0.s8 %v1008
        %v1010 = vlaneseq
        %v1011 = vshrl.u32 %v1010, 7
        %v1012 = vsub.s32 %v1009, %v1011
        %v1013 = vrot.slane %v1005, %v1012
        %v1015 = vunpack.c.l.s4 1934713408
        %v1016 = vunpack.c.0.s8 %v1015
        %v1017 = vlaneseq
        %v1018 = vshrl.u32 %v1017, 7
        %v1019 = vsub.s32 %v1016, %v1018
        %v1020 = vrot.slane %v1006, %v1019
        %v1021 = vcombine.low %v996, %v1004
        %v1022 = vcombine.high %v996, %v1004
        %v1024 = vunpack.c.l.s4 1934713408
        %v1025 = vunpack.c.0.s8 %v1024
        %v1026 = vlaneseq
        %v1027 = vshrl.u32 %v1026, 7
        %v1028 = vsub.s32 %v1025, %v1027
        %v1029 = vrot.slane %v1021, %v1028
        %v1031 = vunpack.c.l.s4 1934713408
        %v1032 = vunpack.c.0.s8 %v1031
        %v1033 = vlaneseq
        %v1034 = vshrl.u32 %v1033, 7
        %v1035 = vsub.s32 %v1032, %v1034
        %v1036 = vrot.slane %v1022, %v1035
        %v1037 = vcombine.low %v1013, %v1029
        %v1038 = vcombine.high %v1013, %v1029
        %v1039 = vcombine.low %v1020, %v1036
        %v1040 = vcombine.high %v1020, %v1036
        %1041 = vrot.lane.b32.xlu0 %v892, 96
        %v1042 = vpop.permute.xlu0 %1041
        %1043 = vrot.lane.b32.xlu0 %v897, 96
        %v1044 = vpop.permute.xlu0 %1043
        %1045 = vrot.lane.b32.xlu0 %v900, 96
        %v1046 = vpop.permute.xlu0 %1045
        %1047 = vrot.lane.b32.xlu0 %v903, 96
        %v1048 = vpop.permute.xlu0 %1047
        %v1053 = vcombine.low %v1042, %v1046
        %v1054 = vcombine.high %v1042, %v1046
        %v1056 = vunpack.c.l.s4 1983009808
        %v1057 = vunpack.c.0.s8 %v1056
        %v1058 = vlaneseq
        %v1059 = vshrl.u32 %v1058, 7
        %v1060 = vsub.s32 %v1057, %v1059
        %v1061 = vrot.slane %v1053, %v1060
        %v1063 = vunpack.c.l.s4 1983009808
        %v1064 = vunpack.c.0.s8 %v1063
        %v1065 = vlaneseq
        %v1066 = vshrl.u32 %v1065, 7
        %v1067 = vsub.s32 %v1064, %v1066
        %v1068 = vrot.slane %v1054, %v1067
        %v1069 = vcombine.low %v1044, %v1048
        %v1070 = vcombine.high %v1044, %v1048
        %v1072 = vunpack.c.l.s4 1983009808
        %v1073 = vunpack.c.0.s8 %v1072
        %v1074 = vlaneseq
        %v1075 = vshrl.u32 %v1074, 7
        %v1076 = vsub.s32 %v1073, %v1075
        %v1077 = vrot.slane %v1069, %v1076
        %v1079 = vunpack.c.l.s4 1983009808
        %v1080 = vunpack.c.0.s8 %v1079
        %v1081 = vlaneseq
        %v1082 = vshrl.u32 %v1081, 7
        %v1083 = vsub.s32 %v1080, %v1082
        %v1084 = vrot.slane %v1070, %v1083
        %v1085 = vcombine.low %v1061, %v1077
        %v1086 = vcombine.high %v1061, %v1077
        %v1088 = vunpack.c.l.s4 1934713408
        %v1089 = vunpack.c.0.s8 %v1088
        %v1090 = vlaneseq
        %v1091 = vshrl.u32 %v1090, 7
        %v1092 = vsub.s32 %v1089, %v1091
        %v1093 = vrot.slane %v1085, %v1092
        %v1095 = vunpack.c.l.s4 1934713408
        %v1096 = vunpack.c.0.s8 %v1095
        %v1097 = vlaneseq
        %v1098 = vshrl.u32 %v1097, 7
        %v1099 = vsub.s32 %v1096, %v1098
        %v1100 = vrot.slane %v1086, %v1099
        %v1101 = vcombine.low %v1068, %v1084
        %v1102 = vcombine.high %v1068, %v1084
        %v1104 = vunpack.c.l.s4 1934713408
        %v1105 = vunpack.c.0.s8 %v1104
        %v1106 = vlaneseq
        %v1107 = vshrl.u32 %v1106, 7
        %v1108 = vsub.s32 %v1105, %v1107
        %v1109 = vrot.slane %v1101, %v1108
        %v1111 = vunpack.c.l.s4 1934713408
        %v1112 = vunpack.c.0.s8 %v1111
        %v1113 = vlaneseq
        %v1114 = vshrl.u32 %v1113, 7
        %v1115 = vsub.s32 %v1112, %v1114
        %v1116 = vrot.slane %v1102, %v1115
        %v1117 = vcombine.high %v1093, 0.0
        %v1118 = vcombine.high %v1100, 0.0
        %v1119 = vcombine.high %v1109, 0.0
        %v1120 = vcombine.high %v1116, 0.0
        %v1121 = vcombine.low %v1093, %v1100
        %v1123 = vunpack.c.l.s4 1983009808
        %v1124 = vunpack.c.0.s8 %v1123
        %v1125 = vlaneseq
        %v1126 = vshrl.u32 %v1125, 7
        %v1127 = vsub.s32 %v1124, %v1126
        %v1128 = vrot.slane %v1121, %v1127
        %v1129 = vcombine.low %v1117, %v1118
        %v1131 = vunpack.c.l.s4 1983009808
        %v1132 = vunpack.c.0.s8 %v1131
        %v1133 = vlaneseq
        %v1134 = vshrl.u32 %v1133, 7
        %v1135 = vsub.s32 %v1132, %v1134
        %v1136 = vrot.slane %v1129, %v1135
        %v1137 = vcombine.low %v1109, %v1116
        %v1139 = vunpack.c.l.s4 1983009808
        %v1140 = vunpack.c.0.s8 %v1139
        %v1141 = vlaneseq
        %v1142 = vshrl.u32 %v1141, 7
        %v1143 = vsub.s32 %v1140, %v1142
        %v1144 = vrot.slane %v1137, %v1143
        %v1145 = vcombine.low %v1119, %v1120
        %v1147 = vunpack.c.l.s4 1983009808
        %v1148 = vunpack.c.0.s8 %v1147
        %v1149 = vlaneseq
        %v1150 = vshrl.u32 %v1149, 7
        %v1151 = vsub.s32 %v1148, %v1150
        %v1152 = vrot.slane %v1145, %v1151
        %v1153 = vcombine.low %v1128, %v1136
        %v1154 = vcombine.high %v1128, %v1136
        %v1156 = vunpack.c.l.s4 1934713408
        %v1157 = vunpack.c.0.s8 %v1156
        %v1158 = vlaneseq
        %v1159 = vshrl.u32 %v1158, 7
        %v1160 = vsub.s32 %v1157, %v1159
        %v1161 = vrot.slane %v1153, %v1160
        %v1163 = vunpack.c.l.s4 1934713408
        %v1164 = vunpack.c.0.s8 %v1163
        %v1165 = vlaneseq
        %v1166 = vshrl.u32 %v1165, 7
        %v1167 = vsub.s32 %v1164, %v1166
        %v1168 = vrot.slane %v1154, %v1167
        %v1169 = vcombine.low %v1144, %v1152
        %v1170 = vcombine.high %v1144, %v1152
        %v1172 = vunpack.c.l.s4 1934713408
        %v1173 = vunpack.c.0.s8 %v1172
        %v1174 = vlaneseq
        %v1175 = vshrl.u32 %v1174, 7
        %v1176 = vsub.s32 %v1173, %v1175
        %v1177 = vrot.slane %v1169, %v1176
        %v1179 = vunpack.c.l.s4 1934713408
        %v1180 = vunpack.c.0.s8 %v1179
        %v1181 = vlaneseq
        %v1182 = vshrl.u32 %v1181, 7
        %v1183 = vsub.s32 %v1180, %v1182
        %v1184 = vrot.slane %v1170, %v1183
        %v1185 = vcombine.low %v1161, %v1177
        %v1186 = vcombine.high %v1161, %v1177
        %v1187 = vcombine.low %v1168, %v1184
        %v1188 = vcombine.high %v1168, %v1184
        %v1189 = vld [vmem:[%s591] sm:$0x1]
        %vm1190 = vcmp.eq.f32.partialorder %v1189, 0.0
        %v1191 = vsel %vm1190, -10000.0, 0.0
        %v1193 = vlaneseq
        %v1194 = vshrl.u32 %v1193, 7
        %v1195 = vsub.s32 0, %v1194
        %v1196 = vrot.slane %v1191, %v1195
        %vm1198 = vcmask 64512
        %v1200 = vsel %vm1198, %v813, 0
        %v1203 = vsel %vm1198, %v1037, 0
        %1205 = vmatprep.subr.mxu0 0.0
        %1206 = vmatpush1.xpose.msra.mxu0 %v1203
        %1207 = vmatprep.subr.mxu0 0.0
        %1208 = vmatpush1.xpose.msra.mxu0 0.0
        %1209 = vmatprep.subr.mxu0 0.0
        %1210 = vmatpush1.xpose.msra.mxu0 0.0
        %1211 = vmatprep.subr.mxu0 0.0
        %1212 = vmatpush1.xpose.msra.mxu0 0.0
        %1213 = vmatprep.subr.mxu0 0.0
        %1214 = vmatpush1.xpose.msra.mxu0 0.0
        %1215 = vmatprep.subr.mxu0 0.0
        %1216 = vmatpush1.xpose.msra.mxu0 0.0
        %1217 = vmatprep.subr.mxu0 0.0
        %1218 = vmatpush1.xpose.msra.mxu0 0.0
        %1219 = vmatprep.subr.mxu0 0.0
        %1220 = vmatpush1.xpose.msra.mxu0 0.0
        %1221 = vmatprep.subr.mxu0 0.0
        %1222 = vmatpush1.xpose.msra.mxu0 0.0
        %1223 = vmatprep.subr.mxu0 0.0
        %1224 = vmatpush1.xpose.msra.mxu0 0.0
        %1225 = vmatprep.subr.mxu0 0.0
        %1226 = vmatpush1.xpose.msra.mxu0 0.0
        %1227 = vmatprep.subr.mxu0 0.0
        %1228 = vmatpush1.xpose.msra.mxu0 0.0
        %1229 = vmatprep.subr.mxu0 0.0
        %1230 = vmatpush1.xpose.msra.mxu0 0.0
        %1231 = vmatprep.subr.mxu0 0.0
        %1232 = vmatpush1.xpose.msra.mxu0 0.0
        %1233 = vmatprep.subr.mxu0 0.0
        %1234 = vmatpush1.xpose.msra.mxu0 0.0
        %1235 = vmatprep.subr.mxu0 0.0
        %1236 = vmatpush1.xpose.msra.mxu0 0.0
        %1237 = vmatprep.subr.mxu0 0.0
        %1238 = vmatpush1.xpose.msra.mxu0 0.0
        %1239 = vmatprep.subr.mxu0 0.0
        %1240 = vmatpush1.xpose.msra.mxu0 0.0
        %1241 = vmatprep.subr.mxu0 0.0
        %1242 = vmatpush1.xpose.msra.mxu0 0.0
        %1243 = vmatprep.subr.mxu0 0.0
        %1244 = vmatpush1.xpose.msra.mxu0 0.0
        %1245 = vmatprep.subr.mxu0 0.0
        %1246 = vmatpush1.xpose.msra.mxu0 0.0
        %1247 = vmatprep.subr.mxu0 0.0
        %1248 = vmatpush1.xpose.msra.mxu0 0.0
        %1249 = vmatprep.subr.mxu0 0.0
        %1250 = vmatpush1.xpose.msra.mxu0 0.0
        %1251 = vmatprep.subr.mxu0 0.0
        %1252 = vmatpush1.xpose.msra.mxu0 0.0
        %1253 = vmatprep.subr.mxu0 0.0
        %1254 = vmatpush1.xpose.msra.mxu0 0.0
        %1255 = vmatprep.subr.mxu0 0.0
        %1256 = vmatpush1.xpose.msra.mxu0 0.0
        %1257 = vmatprep.subr.mxu0 0.0
        %1258 = vmatpush1.xpose.msra.mxu0 0.0
        %1259 = vmatprep.subr.mxu0 0.0
        %1260 = vmatpush1.xpose.msra.mxu0 0.0
        %1261 = vmatprep.subr.mxu0 0.0
        %1262 = vmatpush1.xpose.msra.mxu0 0.0
        %1263 = vmatprep.subr.mxu0 0.0
        %1264 = vmatpush1.xpose.msra.mxu0 0.0
        %1265 = vmatprep.subr.mxu0 0.0
        %1266 = vmatpush1.xpose.msra.mxu0 0.0
        %1267 = vmatprep.subr.mxu0 0.0
        %1268 = vmatpush1.xpose.msra.mxu0 0.0
        %1269 = vmatprep.mubr.f32.mxu0 0.0
        %1270 = vmatmul.mubr.f32.gmra.mrb[0].mxu0 %v1200
        %v1271 = vpop.f32.mrb[0].mxu0
        %v1272 = vadd.f32 %v1196, %v1271
        %v1273 = vpop.f32.mrb[0].mxu0
        %1274 = vdwg.mxu0
        %v1276 = vsel %vm1198, %v814, 0
        %v1279 = vsel %vm1198, %v1038, 0
        %1281 = vmatprep.subr.mxu0 0.0
        %1282 = vmatpush1.xpose.msra.mxu0 %v1279
        %1283 = vmatprep.subr.mxu0 0.0
        %1284 = vmatpush1.xpose.msra.mxu0 0.0
        %1285 = vmatprep.subr.mxu0 0.0
        %1286 = vmatpush1.xpose.msra.mxu0 0.0
        %1287 = vmatprep.subr.mxu0 0.0
        %1288 = vmatpush1.xpose.msra.mxu0 0.0
        %1289 = vmatprep.subr.mxu0 0.0
        %1290 = vmatpush1.xpose.msra.mxu0 0.0
        %1291 = vmatprep.subr.mxu0 0.0
        %1292 = vmatpush1.xpose.msra.mxu0 0.0
        %1293 = vmatprep.subr.mxu0 0.0
        %1294 = vmatpush1.xpose.msra.mxu0 0.0
        %1295 = vmatprep.subr.mxu0 0.0
        %1296 = vmatpush1.xpose.msra.mxu0 0.0
        %1297 = vmatprep.subr.mxu0 0.0
        %1298 = vmatpush1.xpose.msra.mxu0 0.0
        %1299 = vmatprep.subr.mxu0 0.0
        %1300 = vmatpush1.xpose.msra.mxu0 0.0
        %1301 = vmatprep.subr.mxu0 0.0
        %1302 = vmatpush1.xpose.msra.mxu0 0.0
        %1303 = vmatprep.subr.mxu0 0.0
        %1304 = vmatpush1.xpose.msra.mxu0 0.0
        %1305 = vmatprep.subr.mxu0 0.0
        %1306 = vmatpush1.xpose.msra.mxu0 0.0
        %1307 = vmatprep.subr.mxu0 0.0
        %1308 = vmatpush1.xpose.msra.mxu0 0.0
        %1309 = vmatprep.subr.mxu0 0.0
        %1310 = vmatpush1.xpose.msra.mxu0 0.0
        %1311 = vmatprep.subr.mxu0 0.0
        %1312 = vmatpush1.xpose.msra.mxu0 0.0
        %1313 = vmatprep.subr.mxu0 0.0
        %1314 = vmatpush1.xpose.msra.mxu0 0.0
        %1315 = vmatprep.subr.mxu0 0.0
        %1316 = vmatpush1.xpose.msra.mxu0 0.0
        %1317 = vmatprep.subr.mxu0 0.0
        %1318 = vmatpush1.xpose.msra.mxu0 0.0
        %1319 = vmatprep.subr.mxu0 0.0
        %1320 = vmatpush1.xpose.msra.mxu0 0.0
        %1321 = vmatprep.subr.mxu0 0.0
        %1322 = vmatpush1.xpose.msra.mxu0 0.0
        %1323 = vmatprep.subr.mxu0 0.0
        %1324 = vmatpush1.xpose.msra.mxu0 0.0
        %1325 = vmatprep.subr.mxu0 0.0
        %1326 = vmatpush1.xpose.msra.mxu0 0.0
        %1327 = vmatprep.subr.mxu0 0.0
        %1328 = vmatpush1.xpose.msra.mxu0 0.0
        %1329 = vmatprep.subr.mxu0 0.0
        %1330 = vmatpush1.xpose.msra.mxu0 0.0
        %1331 = vmatprep.subr.mxu0 0.0
        %1332 = vmatpush1.xpose.msra.mxu0 0.0
        %1333 = vmatprep.subr.mxu0 0.0
        %1334 = vmatpush1.xpose.msra.mxu0 0.0
        %1335 = vmatprep.subr.mxu0 0.0
        %1336 = vmatpush1.xpose.msra.mxu0 0.0
        %1337 = vmatprep.subr.mxu0 0.0
        %1338 = vmatpush1.xpose.msra.mxu0 0.0
        %1339 = vmatprep.subr.mxu0 0.0
        %1340 = vmatpush1.xpose.msra.mxu0 0.0
        %1341 = vmatprep.subr.mxu0 0.0
        %1342 = vmatpush1.xpose.msra.mxu0 0.0
        %1343 = vmatprep.subr.mxu0 0.0
        %1344 = vmatpush1.xpose.msra.mxu0 0.0
        %1345 = vmatprep.mubr.f32.mxu0 0.0
        %1346 = vmatmul.mubr.f32.gmra.mrb[0].mxu0 %v1276
        %v1347 = vpop.f32.mrb[0].mxu0
        %v1348 = vadd.f32 %v1196, %v1347
        %v1349 = vpop.f32.mrb[0].mxu0
        %1350 = vdwg.mxu0
        %v1352 = vsel %vm1198, %v815, 0
        %v1355 = vsel %vm1198, %v1039, 0
        %1357 = vmatprep.subr.mxu0 0.0
        %1358 = vmatpush1.xpose.msra.mxu0 %v1355
        %1359 = vmatprep.subr.mxu0 0.0
        %1360 = vmatpush1.xpose.msra.mxu0 0.0
        %1361 = vmatprep.subr.mxu0 0.0
        %1362 = vmatpush1.xpose.msra.mxu0 0.0
        %1363 = vmatprep.subr.mxu0 0.0
        %1364 = vmatpush1.xpose.msra.mxu0 0.0
        %1365 = vmatprep.subr.mxu0 0.0
        %1366 = vmatpush1.xpose.msra.mxu0 0.0
        %1367 = vmatprep.subr.mxu0 0.0
        %1368 = vmatpush1.xpose.msra.mxu0 0.0
        %1369 = vmatprep.subr.mxu0 0.0
        %1370 = vmatpush1.xpose.msra.mxu0 0.0
        %1371 = vmatprep.subr.mxu0 0.0
        %1372 = vmatpush1.xpose.msra.mxu0 0.0
        %1373 = vmatprep.subr.mxu0 0.0
        %1374 = vmatpush1.xpose.msra.mxu0 0.0
        %1375 = vmatprep.subr.mxu0 0.0
        %1376 = vmatpush1.xpose.msra.mxu0 0.0
        %1377 = vmatprep.subr.mxu0 0.0
        %1378 = vmatpush1.xpose.msra.mxu0 0.0
        %1379 = vmatprep.subr.mxu0 0.0
        %1380 = vmatpush1.xpose.msra.mxu0 0.0
        %1381 = vmatprep.subr.mxu0 0.0
        %1382 = vmatpush1.xpose.msra.mxu0 0.0
        %1383 = vmatprep.subr.mxu0 0.0
        %1384 = vmatpush1.xpose.msra.mxu0 0.0
        %1385 = vmatprep.subr.mxu0 0.0
        %1386 = vmatpush1.xpose.msra.mxu0 0.0
        %1387 = vmatprep.subr.mxu0 0.0
        %1388 = vmatpush1.xpose.msra.mxu0 0.0
        %1389 = vmatprep.subr.mxu0 0.0
        %1390 = vmatpush1.xpose.msra.mxu0 0.0
        %1391 = vmatprep.subr.mxu0 0.0
        %1392 = vmatpush1.xpose.msra.mxu0 0.0
        %1393 = vmatprep.subr.mxu0 0.0
        %1394 = vmatpush1.xpose.msra.mxu0 0.0
        %1395 = vmatprep.subr.mxu0 0.0
        %1396 = vmatpush1.xpose.msra.mxu0 0.0
        %1397 = vmatprep.subr.mxu0 0.0
        %1398 = vmatpush1.xpose.msra.mxu0 0.0
        %1399 = vmatprep.subr.mxu0 0.0
        %1400 = vmatpush1.xpose.msra.mxu0 0.0
        %1401 = vmatprep.subr.mxu0 0.0
        %1402 = vmatpush1.xpose.msra.mxu0 0.0
        %1403 = vmatprep.subr.mxu0 0.0
        %1404 = vmatpush1.xpose.msra.mxu0 0.0
        %1405 = vmatprep.subr.mxu0 0.0
        %1406 = vmatpush1.xpose.msra.mxu0 0.0
        %1407 = vmatprep.subr.mxu0 0.0
        %1408 = vmatpush1.xpose.msra.mxu0 0.0
        %1409 = vmatprep.subr.mxu0 0.0
        %1410 = vmatpush1.xpose.msra.mxu0 0.0
        %1411 = vmatprep.subr.mxu0 0.0
        %1412 = vmatpush1.xpose.msra.mxu0 0.0
        %1413 = vmatprep.subr.mxu0 0.0
        %1414 = vmatpush1.xpose.msra.mxu0 0.0
        %1415 = vmatprep.subr.mxu0 0.0
        %1416 = vmatpush1.xpose.msra.mxu0 0.0
        %1417 = vmatprep.subr.mxu0 0.0
        %1418 = vmatpush1.xpose.msra.mxu0 0.0
        %1419 = vmatprep.subr.mxu0 0.0
        %1420 = vmatpush1.xpose.msra.mxu0 0.0
        %1421 = vmatprep.mubr.f32.mxu0 0.0
        %1422 = vmatmul.mubr.f32.gmra.mrb[0].mxu0 %v1352
        %v1423 = vpop.f32.mrb[0].mxu0
        %v1424 = vadd.f32 %v1196, %v1423
        %v1425 = vpop.f32.mrb[0].mxu0
        %1426 = vdwg.mxu0
        %v1428 = vsel %vm1198, %v816, 0
        %v1431 = vsel %vm1198, %v1040, 0
        %1433 = vmatprep.subr.mxu0 0.0
        %1434 = vmatpush1.xpose.msra.mxu0 %v1431
        %1435 = vmatprep.subr.mxu0 0.0
        %1436 = vmatpush1.xpose.msra.mxu0 0.0
        %1437 = vmatprep.subr.mxu0 0.0
        %1438 = vmatpush1.xpose.msra.mxu0 0.0
        %1439 = vmatprep.subr.mxu0 0.0
        %1440 = vmatpush1.xpose.msra.mxu0 0.0
        %1441 = vmatprep.subr.mxu0 0.0
        %1442 = vmatpush1.xpose.msra.mxu0 0.0
        %1443 = vmatprep.subr.mxu0 0.0
        %1444 = vmatpush1.xpose.msra.mxu0 0.0
        %1445 = vmatprep.subr.mxu0 0.0
        %1446 = vmatpush1.xpose.msra.mxu0 0.0
        %1447 = vmatprep.subr.mxu0 0.0
        %1448 = vmatpush1.xpose.msra.mxu0 0.0
        %1449 = vmatprep.subr.mxu0 0.0
        %1450 = vmatpush1.xpose.msra.mxu0 0.0
        %1451 = vmatprep.subr.mxu0 0.0
        %1452 = vmatpush1.xpose.msra.mxu0 0.0
        %1453 = vmatprep.subr.mxu0 0.0
        %1454 = vmatpush1.xpose.msra.mxu0 0.0
        %1455 = vmatprep.subr.mxu0 0.0
        %1456 = vmatpush1.xpose.msra.mxu0 0.0
        %1457 = vmatprep.subr.mxu0 0.0
        %1458 = vmatpush1.xpose.msra.mxu0 0.0
        %1459 = vmatprep.subr.mxu0 0.0
        %1460 = vmatpush1.xpose.msra.mxu0 0.0
        %1461 = vmatprep.subr.mxu0 0.0
        %1462 = vmatpush1.xpose.msra.mxu0 0.0
        %1463 = vmatprep.subr.mxu0 0.0
        %1464 = vmatpush1.xpose.msra.mxu0 0.0
        %1465 = vmatprep.subr.mxu0 0.0
        %1466 = vmatpush1.xpose.msra.mxu0 0.0
        %1467 = vmatprep.subr.mxu0 0.0
        %1468 = vmatpush1.xpose.msra.mxu0 0.0
        %1469 = vmatprep.subr.mxu0 0.0
        %1470 = vmatpush1.xpose.msra.mxu0 0.0
        %1471 = vmatprep.subr.mxu0 0.0
        %1472 = vmatpush1.xpose.msra.mxu0 0.0
        %1473 = vmatprep.subr.mxu0 0.0
        %1474 = vmatpush1.xpose.msra.mxu0 0.0
        %1475 = vmatprep.subr.mxu0 0.0
        %1476 = vmatpush1.xpose.msra.mxu0 0.0
        %1477 = vmatprep.subr.mxu0 0.0
        %1478 = vmatpush1.xpose.msra.mxu0 0.0
        %1479 = vmatprep.subr.mxu0 0.0
        %1480 = vmatpush1.xpose.msra.mxu0 0.0
        %1481 = vmatprep.subr.mxu0 0.0
        %1482 = vmatpush1.xpose.msra.mxu0 0.0
        %1483 = vmatprep.subr.mxu0 0.0
        %1484 = vmatpush1.xpose.msra.mxu0 0.0
        %1485 = vmatprep.subr.mxu0 0.0
        %1486 = vmatpush1.xpose.msra.mxu0 0.0
        %1487 = vmatprep.subr.mxu0 0.0
        %1488 = vmatpush1.xpose.msra.mxu0 0.0
        %1489 = vmatprep.subr.mxu0 0.0
        %1490 = vmatpush1.xpose.msra.mxu0 0.0
        %1491 = vmatprep.subr.mxu0 0.0
        %1492 = vmatpush1.xpose.msra.mxu0 0.0
        %1493 = vmatprep.subr.mxu0 0.0
        %1494 = vmatpush1.xpose.msra.mxu0 0.0
        %1495 = vmatprep.subr.mxu0 0.0
        %1496 = vmatpush1.xpose.msra.mxu0 0.0
        %1497 = vmatprep.mubr.f32.mxu0 0.0
        %1498 = vmatmul.mubr.f32.gmra.mrb[0].mxu0 %v1428
        %v1499 = vpop.f32.mrb[0].mxu0
        %v1500 = vadd.f32 %v1196, %v1499
        %v1501 = vpop.f32.mrb[0].mxu0
        %1502 = vdwg.mxu0
        %v1503 = vsel %vm1198, %v1272, -inf
        %1504 = vmax.xlane.f32.xlu0 %v1503
        %v1505 = vpop.xlane.xlu0 %1504
        %v1506 = vsel %vm1198, %v1348, -inf
        %1507 = vmax.xlane.f32.xlu0 %v1506
        %v1508 = vpop.xlane.xlu0 %1507
        %v1509 = vsel %vm1198, %v1424, -inf
        %1510 = vmax.xlane.f32.xlu0 %v1509
        %v1511 = vpop.xlane.xlu0 %1510
        %v1512 = vsel %vm1198, %v1500, -inf
        %1513 = vmax.xlane.f32.xlu0 %v1512
        %v1514 = vpop.xlane.xlu0 %1513
        %v1515 = vsub.f32 -inf, %v1505
        %v1516 = vsub.f32 -inf, %v1508
        %v1517 = vsub.f32 -inf, %v1511
        %v1518 = vsub.f32 -inf, %v1514
        %v1519 = vmul.f32 %v1515, 1.442695
        %v1520 = vpow.pop %v1519
        %v1521 = vmul.f32 %v1516, 1.442695
        %v1522 = vpow.pop %v1521
        %v1523 = vmul.f32 %v1517, 1.442695
        %v1524 = vpow.pop %v1523
        %v1525 = vmul.f32 %v1518, 1.442695
        %v1526 = vpow.pop %v1525
        %v1527 = vsub.f32 %v1272, %v1505
        %v1528 = vsub.f32 %v1348, %v1508
        %v1529 = vsub.f32 %v1424, %v1511
        %v1530 = vsub.f32 %v1500, %v1514
        %v1531 = vmul.f32 %v1527, 1.442695
        %v1532 = vpow.pop %v1531
        %v1533 = vmul.f32 %v1528, 1.442695
        %v1534 = vpow.pop %v1533
        %v1535 = vmul.f32 %v1529, 1.442695
        %v1536 = vpow.pop %v1535
        %v1537 = vmul.f32 %v1530, 1.442695
        %v1538 = vpow.pop %v1537
        %v1539 = vmul.f32 %v1520, 0.0
        %v1540 = vmul.f32 %v1522, 0.0
        %v1541 = vmul.f32 %v1524, 0.0
        %v1542 = vmul.f32 %v1526, 0.0
        %v1543 = vsel %vm1198, %v1532, 0.0
        %1544 = vadd.xlane.f32.xlu0 %v1543
        %v1545 = vpop.xlane.xlu0 %1544
        %v1546 = vsel %vm1198, %v1534, 0.0
        %1547 = vadd.xlane.f32.xlu0 %v1546
        %v1548 = vpop.xlane.xlu0 %1547
        %v1549 = vsel %vm1198, %v1536, 0.0
        %1550 = vadd.xlane.f32.xlu0 %v1549
        %v1551 = vpop.xlane.xlu0 %1550
        %v1552 = vsel %vm1198, %v1538, 0.0
        %1553 = vadd.xlane.f32.xlu0 %v1552
        %v1554 = vpop.xlane.xlu0 %1553
        %v1555 = vadd.f32 %v1539, %v1545
        %v1556 = vadd.f32 %v1540, %v1548
        %v1557 = vadd.f32 %v1541, %v1551
        %v1558 = vadd.f32 %v1542, %v1554
        %v1560 = vsel %vm1198, %v1532, 0
        %1562 = vmatprep.subr.mxu0 0.0
        %1563 = vmatpush1.msra.mxu0 %v1185
        %1564 = vmatprep.subr.mxu0 0.0
        %1565 = vmatpush1.msra.mxu0 0.0
        %1566 = vmatprep.subr.mxu0 0.0
        %1567 = vmatpush1.msra.mxu0 0.0
        %1568 = vmatprep.subr.mxu0 0.0
        %1569 = vmatpush1.msra.mxu0 0.0
        %1570 = vmatprep.subr.mxu0 0.0
        %1571 = vmatpush1.msra.mxu0 0.0
        %1572 = vmatprep.subr.mxu0 0.0
        %1573 = vmatpush1.msra.mxu0 0.0
        %1574 = vmatprep.subr.mxu0 0.0
        %1575 = vmatpush1.msra.mxu0 0.0
        %1576 = vmatprep.subr.mxu0 0.0
        %1577 = vmatpush1.msra.mxu0 0.0
        %1578 = vmatprep.subr.mxu0 0.0
        %1579 = vmatpush1.msra.mxu0 0.0
        %1580 = vmatprep.subr.mxu0 0.0
        %1581 = vmatpush1.msra.mxu0 0.0
        %1582 = vmatprep.subr.mxu0 0.0
        %1583 = vmatpush1.msra.mxu0 0.0
        %1584 = vmatprep.subr.mxu0 0.0
        %1585 = vmatpush1.msra.mxu0 0.0
        %1586 = vmatprep.subr.mxu0 0.0
        %1587 = vmatpush1.msra.mxu0 0.0
        %1588 = vmatprep.subr.mxu0 0.0
        %1589 = vmatpush1.msra.mxu0 0.0
        %1590 = vmatprep.subr.mxu0 0.0
        %1591 = vmatpush1.msra.mxu0 0.0
        %1592 = vmatprep.subr.mxu0 0.0
        %1593 = vmatpush1.msra.mxu0 0.0
        %1594 = vmatprep.subr.mxu0 0.0
        %1595 = vmatpush1.msra.mxu0 0.0
        %1596 = vmatprep.subr.mxu0 0.0
        %1597 = vmatpush1.msra.mxu0 0.0
        %1598 = vmatprep.subr.mxu0 0.0
        %1599 = vmatpush1.msra.mxu0 0.0
        %1600 = vmatprep.subr.mxu0 0.0
        %1601 = vmatpush1.msra.mxu0 0.0
        %1602 = vmatprep.subr.mxu0 0.0
        %1603 = vmatpush1.msra.mxu0 0.0
        %1604 = vmatprep.subr.mxu0 0.0
        %1605 = vmatpush1.msra.mxu0 0.0
        %1606 = vmatprep.subr.mxu0 0.0
        %1607 = vmatpush1.msra.mxu0 0.0
        %1608 = vmatprep.subr.mxu0 0.0
        %1609 = vmatpush1.msra.mxu0 0.0
        %1610 = vmatprep.subr.mxu0 0.0
        %1611 = vmatpush1.msra.mxu0 0.0
        %1612 = vmatprep.subr.mxu0 0.0
        %1613 = vmatpush1.msra.mxu0 0.0
        %1614 = vmatprep.subr.mxu0 0.0
        %1615 = vmatpush1.msra.mxu0 0.0
        %1616 = vmatprep.subr.mxu0 0.0
        %1617 = vmatpush1.msra.mxu0 0.0
        %1618 = vmatprep.subr.mxu0 0.0
        %1619 = vmatpush1.msra.mxu0 0.0
        %1620 = vmatprep.subr.mxu0 0.0
        %1621 = vmatpush1.msra.mxu0 0.0
        %1622 = vmatprep.subr.mxu0 0.0
        %1623 = vmatpush1.msra.mxu0 0.0
        %1624 = vmatprep.subr.mxu0 0.0
        %1625 = vmatpush1.msra.mxu0 0.0
        %1626 = vmatprep.mubr.f32.mxu0 0.0
        %1627 = vmatmul.mubr.f32.gmra.mrb[0].mxu0 %v1560
        %v1628 = vpop.f32.mrb[0].mxu0
        %v1629 = vadd.f32 0.0, %v1628
        %v1630 = vpop.f32.mrb[0].mxu0
        %1631 = vdwg.mxu0
        %v1633 = vsel %vm1198, %v1534, 0
        %1635 = vmatprep.subr.mxu0 0.0
        %1636 = vmatpush1.msra.mxu0 %v1186
        %1637 = vmatprep.subr.mxu0 0.0
        %1638 = vmatpush1.msra.mxu0 0.0
        %1639 = vmatprep.subr.mxu0 0.0
        %1640 = vmatpush1.msra.mxu0 0.0
        %1641 = vmatprep.subr.mxu0 0.0
        %1642 = vmatpush1.msra.mxu0 0.0
        %1643 = vmatprep.subr.mxu0 0.0
        %1644 = vmatpush1.msra.mxu0 0.0
        %1645 = vmatprep.subr.mxu0 0.0
        %1646 = vmatpush1.msra.mxu0 0.0
        %1647 = vmatprep.subr.mxu0 0.0
        %1648 = vmatpush1.msra.mxu0 0.0
        %1649 = vmatprep.subr.mxu0 0.0
        %1650 = vmatpush1.msra.mxu0 0.0
        %1651 = vmatprep.subr.mxu0 0.0
        %1652 = vmatpush1.msra.mxu0 0.0
        %1653 = vmatprep.subr.mxu0 0.0
        %1654 = vmatpush1.msra.mxu0 0.0
        %1655 = vmatprep.subr.mxu0 0.0
        %1656 = vmatpush1.msra.mxu0 0.0
        %1657 = vmatprep.subr.mxu0 0.0
        %1658 = vmatpush1.msra.mxu0 0.0
        %1659 = vmatprep.subr.mxu0 0.0
        %1660 = vmatpush1.msra.mxu0 0.0
        %1661 = vmatprep.subr.mxu0 0.0
        %1662 = vmatpush1.msra.mxu0 0.0
        %1663 = vmatprep.subr.mxu0 0.0
        %1664 = vmatpush1.msra.mxu0 0.0
        %1665 = vmatprep.subr.mxu0 0.0
        %1666 = vmatpush1.msra.mxu0 0.0
        %1667 = vmatprep.subr.mxu0 0.0
        %1668 = vmatpush1.msra.mxu0 0.0
        %1669 = vmatprep.subr.mxu0 0.0
        %1670 = vmatpush1.msra.mxu0 0.0
        %1671 = vmatprep.subr.mxu0 0.0
        %1672 = vmatpush1.msra.mxu0 0.0
        %1673 = vmatprep.subr.mxu0 0.0
        %1674 = vmatpush1.msra.mxu0 0.0
        %1675 = vmatprep.subr.mxu0 0.0
        %1676 = vmatpush1.msra.mxu0 0.0
        %1677 = vmatprep.subr.mxu0 0.0
        %1678 = vmatpush1.msra.mxu0 0.0
        %1679 = vmatprep.subr.mxu0 0.0
        %1680 = vmatpush1.msra.mxu0 0.0
        %1681 = vmatprep.subr.mxu0 0.0
        %1682 = vmatpush1.msra.mxu0 0.0
        %1683 = vmatprep.subr.mxu0 0.0
        %1684 = vmatpush1.msra.mxu0 0.0
        %1685 = vmatprep.subr.mxu0 0.0
        %1686 = vmatpush1.msra.mxu0 0.0
        %1687 = vmatprep.subr.mxu0 0.0
        %1688 = vmatpush1.msra.mxu0 0.0
        %1689 = vmatprep.subr.mxu0 0.0
        %1690 = vmatpush1.msra.mxu0 0.0
        %1691 = vmatprep.subr.mxu0 0.0
        %1692 = vmatpush1.msra.mxu0 0.0
        %1693 = vmatprep.subr.mxu0 0.0
        %1694 = vmatpush1.msra.mxu0 0.0
        %1695 = vmatprep.subr.mxu0 0.0
        %1696 = vmatpush1.msra.mxu0 0.0
        %1697 = vmatprep.subr.mxu0 0.0
        %1698 = vmatpush1.msra.mxu0 0.0
        %1699 = vmatprep.mubr.f32.mxu0 0.0
        %1700 = vmatmul.mubr.f32.gmra.mrb[0].mxu0 %v1633
        %v1701 = vpop.f32.mrb[0].mxu0
        %v1702 = vadd.f32 0.0, %v1701
        %v1703 = vpop.f32.mrb[0].mxu0
        %1704 = vdwg.mxu0
        %v1706 = vsel %vm1198, %v1536, 0
        %1708 = vmatprep.subr.mxu0 0.0
        %1709 = vmatpush1.msra.mxu0 %v1187
        %1710 = vmatprep.subr.mxu0 0.0
        %1711 = vmatpush1.msra.mxu0 0.0
        %1712 = vmatprep.subr.mxu0 0.0
        %1713 = vmatpush1.msra.mxu0 0.0
        %1714 = vmatprep.subr.mxu0 0.0
        %1715 = vmatpush1.msra.mxu0 0.0
        %1716 = vmatprep.subr.mxu0 0.0
        %1717 = vmatpush1.msra.mxu0 0.0
        %1718 = vmatprep.subr.mxu0 0.0
        %1719 = vmatpush1.msra.mxu0 0.0
        %1720 = vmatprep.subr.mxu0 0.0
        %1721 = vmatpush1.msra.mxu0 0.0
        %1722 = vmatprep.subr.mxu0 0.0
        %1723 = vmatpush1.msra.mxu0 0.0
        %1724 = vmatprep.subr.mxu0 0.0
        %1725 = vmatpush1.msra.mxu0 0.0
        %1726 = vmatprep.subr.mxu0 0.0
        %1727 = vmatpush1.msra.mxu0 0.0
        %1728 = vmatprep.subr.mxu0 0.0
        %1729 = vmatpush1.msra.mxu0 0.0
        %1730 = vmatprep.subr.mxu0 0.0
        %1731 = vmatpush1.msra.mxu0 0.0
        %1732 = vmatprep.subr.mxu0 0.0
        %1733 = vmatpush1.msra.mxu0 0.0
        %1734 = vmatprep.subr.mxu0 0.0
        %1735 = vmatpush1.msra.mxu0 0.0
        %1736 = vmatprep.subr.mxu0 0.0
        %1737 = vmatpush1.msra.mxu0 0.0
        %1738 = vmatprep.subr.mxu0 0.0
        %1739 = vmatpush1.msra.mxu0 0.0
        %1740 = vmatprep.subr.mxu0 0.0
        %1741 = vmatpush1.msra.mxu0 0.0
        %1742 = vmatprep.subr.mxu0 0.0
        %1743 = vmatpush1.msra.mxu0 0.0
        %1744 = vmatprep.subr.mxu0 0.0
        %1745 = vmatpush1.msra.mxu0 0.0
        %1746 = vmatprep.subr.mxu0 0.0
        %1747 = vmatpush1.msra.mxu0 0.0
        %1748 = vmatprep.subr.mxu0 0.0
        %1749 = vmatpush1.msra.mxu0 0.0
        %1750 = vmatprep.subr.mxu0 0.0
        %1751 = vmatpush1.msra.mxu0 0.0
        %1752 = vmatprep.subr.mxu0 0.0
        %1753 = vmatpush1.msra.mxu0 0.0
        %1754 = vmatprep.subr.mxu0 0.0
        %1755 = vmatpush1.msra.mxu0 0.0
        %1756 = vmatprep.subr.mxu0 0.0
        %1757 = vmatpush1.msra.mxu0 0.0
        %1758 = vmatprep.subr.mxu0 0.0
        %1759 = vmatpush1.msra.mxu0 0.0
        %1760 = vmatprep.subr.mxu0 0.0
        %1761 = vmatpush1.msra.mxu0 0.0
        %1762 = vmatprep.subr.mxu0 0.0
        %1763 = vmatpush1.msra.mxu0 0.0
        %1764 = vmatprep.subr.mxu0 0.0
        %1765 = vmatpush1.msra.mxu0 0.0
        %1766 = vmatprep.subr.mxu0 0.0
        %1767 = vmatpush1.msra.mxu0 0.0
        %1768 = vmatprep.subr.mxu0 0.0
        %1769 = vmatpush1.msra.mxu0 0.0
        %1770 = vmatprep.subr.mxu0 0.0
        %1771 = vmatpush1.msra.mxu0 0.0
        %1772 = vmatprep.mubr.f32.mxu0 0.0
        %1773 = vmatmul.mubr.f32.gmra.mrb[0].mxu0 %v1706
        %v1774 = vpop.f32.mrb[0].mxu0
        %v1775 = vadd.f32 0.0, %v1774
        %v1776 = vpop.f32.mrb[0].mxu0
        %1777 = vdwg.mxu0
        %v1779 = vsel %vm1198, %v1538, 0
        %1781 = vmatprep.subr.mxu0 0.0
        %1782 = vmatpush1.msra.mxu0 %v1188
        %1783 = vmatprep.subr.mxu0 0.0
        %1784 = vmatpush1.msra.mxu0 0.0
        %1785 = vmatprep.subr.mxu0 0.0
        %1786 = vmatpush1.msra.mxu0 0.0
        %1787 = vmatprep.subr.mxu0 0.0
        %1788 = vmatpush1.msra.mxu0 0.0
        %1789 = vmatprep.subr.mxu0 0.0
        %1790 = vmatpush1.msra.mxu0 0.0
        %1791 = vmatprep.subr.mxu0 0.0
        %1792 = vmatpush1.msra.mxu0 0.0
        %1793 = vmatprep.subr.mxu0 0.0
        %1794 = vmatpush1.msra.mxu0 0.0
        %1795 = vmatprep.subr.mxu0 0.0
        %1796 = vmatpush1.msra.mxu0 0.0
        %1797 = vmatprep.subr.mxu0 0.0
        %1798 = vmatpush1.msra.mxu0 0.0
        %1799 = vmatprep.subr.mxu0 0.0
        %1800 = vmatpush1.msra.mxu0 0.0
        %1801 = vmatprep.subr.mxu0 0.0
        %1802 = vmatpush1.msra.mxu0 0.0
        %1803 = vmatprep.subr.mxu0 0.0
        %1804 = vmatpush1.msra.mxu0 0.0
        %1805 = vmatprep.subr.mxu0 0.0
        %1806 = vmatpush1.msra.mxu0 0.0
        %1807 = vmatprep.subr.mxu0 0.0
        %1808 = vmatpush1.msra.mxu0 0.0
        %1809 = vmatprep.subr.mxu0 0.0
        %1810 = vmatpush1.msra.mxu0 0.0
        %1811 = vmatprep.subr.mxu0 0.0
        %1812 = vmatpush1.msra.mxu0 0.0
        %1813 = vmatprep.subr.mxu0 0.0
        %1814 = vmatpush1.msra.mxu0 0.0
        %1815 = vmatprep.subr.mxu0 0.0
        %1816 = vmatpush1.msra.mxu0 0.0
        %1817 = vmatprep.subr.mxu0 0.0
        %1818 = vmatpush1.msra.mxu0 0.0
        %1819 = vmatprep.subr.mxu0 0.0
        %1820 = vmatpush1.msra.mxu0 0.0
        %1821 = vmatprep.subr.mxu0 0.0
        %1822 = vmatpush1.msra.mxu0 0.0
        %1823 = vmatprep.subr.mxu0 0.0
        %1824 = vmatpush1.msra.mxu0 0.0
        %1825 = vmatprep.subr.mxu0 0.0
        %1826 = vmatpush1.msra.mxu0 0.0
        %1827 = vmatprep.subr.mxu0 0.0
        %1828 = vmatpush1.msra.mxu0 0.0
        %1829 = vmatprep.subr.mxu0 0.0
        %1830 = vmatpush1.msra.mxu0 0.0
        %1831 = vmatprep.subr.mxu0 0.0
        %1832 = vmatpush1.msra.mxu0 0.0
        %1833 = vmatprep.subr.mxu0 0.0
        %1834 = vmatpush1.msra.mxu0 0.0
        %1835 = vmatprep.subr.mxu0 0.0
        %1836 = vmatpush1.msra.mxu0 0.0
        %1837 = vmatprep.subr.mxu0 0.0
        %1838 = vmatpush1.msra.mxu0 0.0
        %1839 = vmatprep.subr.mxu0 0.0
        %1840 = vmatpush1.msra.mxu0 0.0
        %1841 = vmatprep.subr.mxu0 0.0
        %1842 = vmatpush1.msra.mxu0 0.0
        %1843 = vmatprep.subr.mxu0 0.0
        %1844 = vmatpush1.msra.mxu0 0.0
        %1845 = vmatprep.mubr.f32.mxu0 0.0
        %1846 = vmatmul.mubr.f32.gmra.mrb[0].mxu0 %v1779
        %v1847 = vpop.f32.mrb[0].mxu0
        %v1848 = vadd.f32 0.0, %v1847
        %v1849 = vpop.f32.mrb[0].mxu0
        %1850 = vdwg.mxu0
        %v1851 = vadd.f32 %v1539, %v1629
        %v1852 = vadd.f32 %v1540, %v1702
        %v1853 = vadd.f32 %v1541, %v1775
        %v1854 = vadd.f32 %v1542, %v1848
        %v1855 = vrcp.pop %v1555
        %v1856 = vrcp.pop %v1556
        %v1857 = vrcp.pop %v1557
        %v1858 = vrcp.pop %v1558
        %v1859 = vmul.f32 %v1851, %v1855
        %v1860 = vmul.f32 %v1852, %v1856
        %v1861 = vmul.f32 %v1853, %v1857
        %v1862 = vmul.f32 %v1854, %v1858
        %v1863 = vcombine.low %v1859, %v1861
        %v1864 = vcombine.high %v1859, %v1861
        %v1866 = vunpack.c.l.s4 1983009808
        %v1867 = vunpack.c.0.s8 %v1866
        %v1868 = vlaneseq
        %v1869 = vshrl.u32 %v1868, 7
        %v1870 = vsub.s32 %v1867, %v1869
        %v1871 = vrot.slane %v1863, %v1870
        %v1873 = vunpack.c.l.s4 1983009808
        %v1874 = vunpack.c.0.s8 %v1873
        %v1875 = vlaneseq
        %v1876 = vshrl.u32 %v1875, 7
        %v1877 = vsub.s32 %v1874, %v1876
        %v1878 = vrot.slane %v1864, %v1877
        %v1879 = vcombine.low %v1860, %v1862
        %v1880 = vcombine.high %v1860, %v1862
        %v1882 = vunpack.c.l.s4 1983009808
        %v1883 = vunpack.c.0.s8 %v1882
        %v1884 = vlaneseq
        %v1885 = vshrl.u32 %v1884, 7
        %v1886 = vsub.s32 %v1883, %v1885
        %v1887 = vrot.slane %v1879, %v1886
        %v1889 = vunpack.c.l.s4 1983009808
        %v1890 = vunpack.c.0.s8 %v1889
        %v1891 = vlaneseq
        %v1892 = vshrl.u32 %v1891, 7
        %v1893 = vsub.s32 %v1890, %v1892
        %v1894 = vrot.slane %v1880, %v1893
        %v1895 = vcombine.low %v1871, %v1887
        %v1896 = vcombine.high %v1871, %v1887
        %v1898 = vunpack.c.l.s4 1934713408
        %v1899 = vunpack.c.0.s8 %v1898
        %v1900 = vlaneseq
        %v1901 = vshrl.u32 %v1900, 7
        %v1902 = vsub.s32 %v1899, %v1901
        %v1903 = vrot.slane %v1895, %v1902
        %v1905 = vunpack.c.l.s4 1934713408
        %v1906 = vunpack.c.0.s8 %v1905
        %v1907 = vlaneseq
        %v1908 = vshrl.u32 %v1907, 7
        %v1909 = vsub.s32 %v1906, %v1908
        %v1910 = vrot.slane %v1896, %v1909
        %v1911 = vcombine.low %v1878, %v1894
        %v1912 = vcombine.high %v1878, %v1894
        %v1914 = vunpack.c.l.s4 1934713408
        %v1915 = vunpack.c.0.s8 %v1914
        %v1916 = vlaneseq
        %v1917 = vshrl.u32 %v1916, 7
        %v1918 = vsub.s32 %v1915, %v1917
        %v1919 = vrot.slane %v1911, %v1918
        %v1921 = vunpack.c.l.s4 1934713408
        %v1922 = vunpack.c.0.s8 %v1921
        %v1923 = vlaneseq
        %v1924 = vshrl.u32 %v1923, 7
        %v1925 = vsub.s32 %v1922, %v1924
        %v1926 = vrot.slane %v1912, %v1925
        %v1927 = vcombine.high %v1903, 0.0
        %v1928 = vcombine.high %v1910, 0.0
        %v1929 = vcombine.high %v1919, 0.0
        %v1930 = vcombine.high %v1926, 0.0
        %v1931 = vcombine.low %v1903, %v1910
        %v1933 = vunpack.c.l.s4 1983009808
        %v1934 = vunpack.c.0.s8 %v1933
        %v1935 = vlaneseq
        %v1936 = vshrl.u32 %v1935, 7
        %v1937 = vsub.s32 %v1934, %v1936
        %v1938 = vrot.slane %v1931, %v1937
        %v1939 = vcombine.low %v1927, %v1928
        %v1941 = vunpack.c.l.s4 1983009808
        %v1942 = vunpack.c.0.s8 %v1941
        %v1943 = vlaneseq
        %v1944 = vshrl.u32 %v1943, 7
        %v1945 = vsub.s32 %v1942, %v1944
        %v1946 = vrot.slane %v1939, %v1945
        %v1947 = vcombine.low %v1919, %v1926
        %v1949 = vunpack.c.l.s4 1983009808
        %v1950 = vunpack.c.0.s8 %v1949
        %v1951 = vlaneseq
        %v1952 = vshrl.u32 %v1951, 7
        %v1953 = vsub.s32 %v1950, %v1952
        %v1954 = vrot.slane %v1947, %v1953
        %v1955 = vcombine.low %v1929, %v1930
        %v1957 = vunpack.c.l.s4 1983009808
        %v1958 = vunpack.c.0.s8 %v1957
        %v1959 = vlaneseq
        %v1960 = vshrl.u32 %v1959, 7
        %v1961 = vsub.s32 %v1958, %v1960
        %v1962 = vrot.slane %v1955, %v1961
        %v1963 = vcombine.low %v1938, %v1946
        %v1964 = vcombine.high %v1938, %v1946
        %v1966 = vunpack.c.l.s4 1934713408
        %v1967 = vunpack.c.0.s8 %v1966
        %v1968 = vlaneseq
        %v1969 = vshrl.u32 %v1968, 7
        %v1970 = vsub.s32 %v1967, %v1969
        %v1971 = vrot.slane %v1963, %v1970
        %v1973 = vunpack.c.l.s4 1934713408
        %v1974 = vunpack.c.0.s8 %v1973
        %v1975 = vlaneseq
        %v1976 = vshrl.u32 %v1975, 7
        %v1977 = vsub.s32 %v1974, %v1976
        %v1978 = vrot.slane %v1964, %v1977
        %v1979 = vcombine.low %v1954, %v1962
        %v1980 = vcombine.high %v1954, %v1962
        %v1982 = vunpack.c.l.s4 1934713408
        %v1983 = vunpack.c.0.s8 %v1982
        %v1984 = vlaneseq
        %v1985 = vshrl.u32 %v1984, 7
        %v1986 = vsub.s32 %v1983, %v1985
        %v1987 = vrot.slane %v1979, %v1986
        %v1989 = vunpack.c.l.s4 1934713408
        %v1990 = vunpack.c.0.s8 %v1989
        %v1991 = vlaneseq
        %v1992 = vshrl.u32 %v1991, 7
        %v1993 = vsub.s32 %v1990, %v1992
        %v1994 = vrot.slane %v1980, %v1993
        %v1995 = vcombine.low %v1971, %v1987
        %v1996 = vcombine.high %v1971, %v1987
        %v1997 = vcombine.low %v1978, %v1994
        %v1998 = vcombine.high %v1978, %v1994
        %2000 = vrot.lane.b32.xlu0 %v1996, 8
        %v2001 = vpop.permute.xlu0 %2000
        %2004 = vrot.lane.b32.xlu0 %v1997, 16
        %v2005 = vpop.permute.xlu0 %2004
        %2008 = vrot.lane.b32.xlu0 %v1998, 24
        %v2009 = vpop.permute.xlu0 %2008
        %v2011 = vsel %vm1198, %v1995, %v2001
        %vm2012 = vcmask 130048
        %v2013 = vsel %vm2012, %v2011, %v2005
        %vm2014 = vcmask 195584
        %v2015 = vsel %vm2014, %v2013, %v2009
        %v2016 = vld [vmem:[%s5] sm:$0xff]
        %v2017 = vld [vmem:[%s5 + $0x8] sm:$0xff]
        %v2018 = vld [vmem:[%s5 + $0x10] sm:$0xff]
        %v2019 = vld [vmem:[%s5 + $0x18] sm:$0xff]
        %v2020 = vld [vmem:[%s6] sm:$0x1]
        %v2022 = vlaneseq
        %v2023 = vshrl.u32 %v2022, 7
        %v2024 = vsub.s32 0, %v2023
        %v2025 = vrot.slane %v2020, %v2024
        %v2028 = vsel %vm597, %v2015, 0
        %2030 = vmatprep.subr.mxu0 0.0
        %2031 = vmatpush1.msra.mxu0 %v2016
        %2032 = vmatprep.subr.mxu0 0.0
        %2033 = vmatpush1.msra.mxu0 %v2017
        %2034 = vmatprep.subr.mxu0 0.0
        %2035 = vmatpush1.msra.mxu0 %v2018
        %2036 = vmatprep.subr.mxu0 0.0
        %2037 = vmatpush1.msra.mxu0 %v2019
        %2038 = vmatprep.subr.mxu0 0.0
        %2039 = vmatpush1.msra.mxu0 0.0
        %2040 = vmatprep.subr.mxu0 0.0
        %2041 = vmatpush1.msra.mxu0 0.0
        %2042 = vmatprep.subr.mxu0 0.0
        %2043 = vmatpush1.msra.mxu0 0.0
        %2044 = vmatprep.subr.mxu0 0.0
        %2045 = vmatpush1.msra.mxu0 0.0
        %2046 = vmatprep.subr.mxu0 0.0
        %2047 = vmatpush1.msra.mxu0 0.0
        %2048 = vmatprep.subr.mxu0 0.0
        %2049 = vmatpush1.msra.mxu0 0.0
        %2050 = vmatprep.subr.mxu0 0.0
        %2051 = vmatpush1.msra.mxu0 0.0
        %2052 = vmatprep.subr.mxu0 0.0
        %2053 = vmatpush1.msra.mxu0 0.0
        %2054 = vmatprep.subr.mxu0 0.0
        %2055 = vmatpush1.msra.mxu0 0.0
        %2056 = vmatprep.subr.mxu0 0.0
        %2057 = vmatpush1.msra.mxu0 0.0
        %2058 = vmatprep.subr.mxu0 0.0
        %2059 = vmatpush1.msra.mxu0 0.0
        %2060 = vmatprep.subr.mxu0 0.0
        %2061 = vmatpush1.msra.mxu0 0.0
        %2062 = vmatprep.subr.mxu0 0.0
        %2063 = vmatpush1.msra.mxu0 0.0
        %2064 = vmatprep.subr.mxu0 0.0
        %2065 = vmatpush1.msra.mxu0 0.0
        %2066 = vmatprep.subr.mxu0 0.0
        %2067 = vmatpush1.msra.mxu0 0.0
        %2068 = vmatprep.subr.mxu0 0.0
        %2069 = vmatpush1.msra.mxu0 0.0
        %2070 = vmatprep.subr.mxu0 0.0
        %2071 = vmatpush1.msra.mxu0 0.0
        %2072 = vmatprep.subr.mxu0 0.0
        %2073 = vmatpush1.msra.mxu0 0.0
        %2074 = vmatprep.subr.mxu0 0.0
        %2075 = vmatpush1.msra.mxu0 0.0
        %2076 = vmatprep.subr.mxu0 0.0
        %2077 = vmatpush1.msra.mxu0 0.0
        %2078 = vmatprep.subr.mxu0 0.0
        %2079 = vmatpush1.msra.mxu0 0.0
        %2080 = vmatprep.subr.mxu0 0.0
        %2081 = vmatpush1.msra.mxu0 0.0
        %2082 = vmatprep.subr.mxu0 0.0
        %2083 = vmatpush1.msra.mxu0 0.0
        %2084 = vmatprep.subr.mxu0 0.0
        %2085 = vmatpush1.msra.mxu0 0.0
        %2086 = vmatprep.subr.mxu0 0.0
        %2087 = vmatpush1.msra.mxu0 0.0
        %2088 = vmatprep.subr.mxu0 0.0
        %2089 = vmatpush1.msra.mxu0 0.0
        %2090 = vmatprep.subr.mxu0 0.0
        %2091 = vmatpush1.msra.mxu0 0.0
        %2092 = vmatprep.subr.mxu0 0.0
        %2093 = vmatpush1.msra.mxu0 0.0
        %2094 = vmatprep.mubr.f32.mxu0 0.0
        %2095 = vmatmul.mubr.f32.gmra.mrb[0].mxu0 %v2028
        %v2096 = vpop.f32.mrb[0].mxu0
        %v2097 = vadd.f32 %v2025, %v2096
        %v2098 = vpop.f32.mrb[0].mxu0
        %2099 = vdwg.mxu0
        %v2100 = vadd.f32 %v592, %v2097
        %v2101 = vld [vmem:[%s7] sm:$0x1]
        %v2102 = vld [vmem:[%s8] sm:$0x1]
        %v2103 = vsel %vm597, %v2100, 0.0
        %2104 = vadd.xlane.f32.xlu0 %v2103
        %v2105 = vpop.xlane.xlu0 %2104
        %v2106 = vrcp.pop 32.0
        %v2107 = vmul.f32 %v2105, %v2106
        %v2108 = vsub.f32 %v2100, %v2107
        %v2109 = vmul.f32 %v2108, %v2108
        %v2110 = vsel %vm597, %v2109, 0.0
        %2111 = vadd.xlane.f32.xlu0 %v2110
        %v2112 = vpop.xlane.xlu0 %2111
        %v2113 = vmul.f32 %v2112, %v2106
        %v2114 = vadd.f32 %v2113, 1e-05
        %v2115 = vrsqrt.pop %v2114
        %v2116 = vmul.f32 %v2108, %v2115
        %v2118 = vlaneseq
        %v2119 = vshrl.u32 %v2118, 7
        %v2120 = vsub.s32 0, %v2119
        %v2121 = vrot.slane %v2101, %v2120
        %v2123 = vmul.f32 %v2116, %v2121
        %v2125 = vlaneseq
        %v2126 = vshrl.u32 %v2125, 7
        %v2127 = vsub.s32 0, %v2126
        %v2128 = vrot.slane %v2102, %v2127
        %v2130 = vadd.f32 %v2123, %v2128
        %v2131 = vld [vmem:[#allocation7] sm:$0xff]
        %v2132 = vld [vmem:[#allocation7 + $0x8] sm:$0xff]
        %v2133 = vld [vmem:[#allocation7 + $0x10] sm:$0xff]
        %v2134 = vld [vmem:[#allocation7 + $0x18] sm:$0xff]
        %v2135 = vld [vmem:[%s10] sm:$0x1]
        %v2137 = vlaneseq
        %v2138 = vshrl.u32 %v2137, 7
        %v2139 = vsub.s32 0, %v2138
        %v2140 = vrot.slane %v2135, %v2139
        %v2143 = vsel %vm597, %v2130, 0
        %2145 = vmatprep.subr.mxu0 0.0
        %2146 = vmatpush1.msra.mxu0 %v2131
        %2147 = vmatprep.subr.mxu0 0.0
        %2148 = vmatpush1.msra.mxu0 %v2132
        %2149 = vmatprep.subr.mxu0 0.0
        %2150 = vmatpush1.msra.mxu0 %v2133
        %2151 = vmatprep.subr.mxu0 0.0
        %2152 = vmatpush1.msra.mxu0 %v2134
        %2153 = vmatprep.subr.mxu0 0.0
        %2154 = vmatpush1.msra.mxu0 0.0
        %2155 = vmatprep.subr.mxu0 0.0
        %2156 = vmatpush1.msra.mxu0 0.0
        %2157 = vmatprep.subr.mxu0 0.0
        %2158 = vmatpush1.msra.mxu0 0.0
        %2159 = vmatprep.subr.mxu0 0.0
        %2160 = vmatpush1.msra.mxu0 0.0
        %2161 = vmatprep.subr.mxu0 0.0
        %2162 = vmatpush1.msra.mxu0 0.0
        %2163 = vmatprep.subr.mxu0 0.0
        %2164 = vmatpush1.msra.mxu0 0.0
        %2165 = vmatprep.subr.mxu0 0.0
        %2166 = vmatpush1.msra.mxu0 0.0
        %2167 = vmatprep.subr.mxu0 0.0
        %2168 = vmatpush1.msra.mxu0 0.0
        %2169 = vmatprep.subr.mxu0 0.0
        %2170 = vmatpush1.msra.mxu0 0.0
        %2171 = vmatprep.subr.mxu0 0.0
        %2172 = vmatpush1.msra.mxu0 0.0
        %2173 = vmatprep.subr.mxu0 0.0
        %2174 = vmatpush1.msra.mxu0 0.0
        %2175 = vmatprep.subr.mxu0 0.0
        %2176 = vmatpush1.msra.mxu0 0.0
        %2177 = vmatprep.subr.mxu0 0.0
        %2178 = vmatpush1.msra.mxu0 0.0
        %2179 = vmatprep.subr.mxu0 0.0
        %2180 = vmatpush1.msra.mxu0 0.0
        %2181 = vmatprep.subr.mxu0 0.0
        %2182 = vmatpush1.msra.mxu0 0.0
        %2183 = vmatprep.subr.mxu0 0.0
        %2184 = vmatpush1.msra.mxu0 0.0
        %2185 = vmatprep.subr.mxu0 0.0
        %2186 = vmatpush1.msra.mxu0 0.0
        %2187 = vmatprep.subr.mxu0 0.0
        %2188 = vmatpush1.msra.mxu0 0.0
        %2189 = vmatprep.subr.mxu0 0.0
        %2190 = vmatpush1.msra.mxu0 0.0
        %2191 = vmatprep.subr.mxu0 0.0
        %2192 = vmatpush1.msra.mxu0 0.0
        %2193 = vmatprep.subr.mxu0 0.0
        %2194 = vmatpush1.msra.mxu0 0.0
        %2195 = vmatprep.subr.mxu0 0.0
        %2196 = vmatpush1.msra.mxu0 0.0
        %2197 = vmatprep.subr.mxu0 0.0
        %2198 = vmatpush1.msra.mxu0 0.0
        %2199 = vmatprep.subr.mxu0 0.0
        %2200 = vmatpush1.msra.mxu0 0.0
        %2201 = vmatprep.subr.mxu0 0.0
        %2202 = vmatpush1.msra.mxu0 0.0
        %2203 = vmatprep.subr.mxu0 0.0
        %2204 = vmatpush1.msra.mxu0 0.0
        %2205 = vmatprep.subr.mxu0 0.0
        %2206 = vmatpush1.msra.mxu0 0.0
        %2207 = vmatprep.subr.mxu0 0.0
        %2208 = vmatpush1.msra.mxu0 0.0
        %2209 = vmatprep.mubr.f32.mxu0 0.0
        %2210 = vmatmul.mubr.f32.gmra.mrb[0].mxu0 %v2143
        %v2211 = vpop.f32.mrb[0].mxu0
        %v2212 = vadd.f32 %v2140, %v2211
        %v2213 = vpop.f32.mrb[0].mxu0
        %2214 = vdwg.mxu0
        %v2215 = vmax.f32 %v2212, 0.0
        %v2216 = vld [vmem:[%s11] sm:$0xff]
        %v2217 = vld [vmem:[%s11 + $0x8] sm:$0xff]
        %v2218 = vld [vmem:[%s11 + $0x10] sm:$0xff]
        %v2219 = vld [vmem:[%s11 + $0x18] sm:$0xff]
        %v2220 = vld [vmem:[%s11 + $0x20] sm:$0xff]
        %v2221 = vld [vmem:[%s11 + $0x28] sm:$0xff]
        %v2222 = vld [vmem:[%s11 + $0x30] sm:$0xff]
        %v2223 = vld [vmem:[%s11 + $0x38] sm:$0xff]
        %v2224 = vld [vmem:[%s12] sm:$0x1]
        %v2226 = vlaneseq
        %v2227 = vshrl.u32 %v2226, 7
        %v2228 = vsub.s32 0, %v2227
        %v2229 = vrot.slane %v2224, %v2228
        %vm2231 = vcmask 523264
        %v2233 = vsel %vm2231, %v2215, 0
        %2235 = vmatprep.subr.mxu0 0.0
        %2236 = vmatpush1.msra.mxu0 %v2216
        %2237 = vmatprep.subr.mxu0 0.0
        %2238 = vmatpush1.msra.mxu0 %v2217
        %2239 = vmatprep.subr.mxu0 0.0
        %2240 = vmatpush1.msra.mxu0 %v2218
        %2241 = vmatprep.subr.mxu0 0.0
        %2242 = vmatpush1.msra.mxu0 %v2219
        %2243 = vmatprep.subr.mxu0 0.0
        %2244 = vmatpush1.msra.mxu0 %v2220
        %2245 = vmatprep.subr.mxu0 0.0
        %2246 = vmatpush1.msra.mxu0 %v2221
        %2247 = vmatprep.subr.mxu0 0.0
        %2248 = vmatpush1.msra.mxu0 %v2222
        %2249 = vmatprep.subr.mxu0 0.0
        %2250 = vmatpush1.msra.mxu0 %v2223
        %2251 = vmatprep.subr.mxu0 0.0
        %2252 = vmatpush1.msra.mxu0 0.0
        %2253 = vmatprep.subr.mxu0 0.0
        %2254 = vmatpush1.msra.mxu0 0.0
        %2255 = vmatprep.subr.mxu0 0.0
        %2256 = vmatpush1.msra.mxu0 0.0
        %2257 = vmatprep.subr.mxu0 0.0
        %2258 = vmatpush1.msra.mxu0 0.0
        %2259 = vmatprep.subr.mxu0 0.0
        %2260 = vmatpush1.msra.mxu0 0.0
        %2261 = vmatprep.subr.mxu0 0.0
        %2262 = vmatpush1.msra.mxu0 0.0
        %2263 = vmatprep.subr.mxu0 0.0
        %2264 = vmatpush1.msra.mxu0 0.0
        %2265 = vmatprep.subr.mxu0 0.0
        %2266 = vmatpush1.msra.mxu0 0.0
        %2267 = vmatprep.subr.mxu0 0.0
        %2268 = vmatpush1.msra.mxu0 0.0
        %2269 = vmatprep.subr.mxu0 0.0
        %2270 = vmatpush1.msra.mxu0 0.0
        %2271 = vmatprep.subr.mxu0 0.0
        %2272 = vmatpush1.msra.mxu0 0.0
        %2273 = vmatprep.subr.mxu0 0.0
        %2274 = vmatpush1.msra.mxu0 0.0
        %2275 = vmatprep.subr.mxu0 0.0
        %2276 = vmatpush1.msra.mxu0 0.0
        %2277 = vmatprep.subr.mxu0 0.0
        %2278 = vmatpush1.msra.mxu0 0.0
        %2279 = vmatprep.subr.mxu0 0.0
        %2280 = vmatpush1.msra.mxu0 0.0
        %2281 = vmatprep.subr.mxu0 0.0
        %2282 = vmatpush1.msra.mxu0 0.0
        %2283 = vmatprep.subr.mxu0 0.0
        %2284 = vmatpush1.msra.mxu0 0.0
        %2285 = vmatprep.subr.mxu0 0.0
        %2286 = vmatpush1.msra.mxu0 0.0
        %2287 = vmatprep.subr.mxu0 0.0
        %2288 = vmatpush1.msra.mxu0 0.0
        %2289 = vmatprep.subr.mxu0 0.0
        %2290 = vmatpush1.msra.mxu0 0.0
        %2291 = vmatprep.subr.mxu0 0.0
        %2292 = vmatpush1.msra.mxu0 0.0
        %2293 = vmatprep.subr.mxu0 0.0
        %2294 = vmatpush1.msra.mxu0 0.0
        %2295 = vmatprep.subr.mxu0 0.0
        %2296 = vmatpush1.msra.mxu0 0.0
        %2297 = vmatprep.subr.mxu0 0.0
        %2298 = vmatpush1.msra.mxu0 0.0
        %2299 = vmatprep.mubr.f32.mxu0 0.0
        %2300 = vmatmul.mubr.f32.gmra.mrb[0].mxu0 %v2233
        %v2301 = vpop.f32.mrb[0].mxu0
        %v2302 = vadd.f32 %v2229, %v2301
        %v2303 = vpop.f32.mrb[0].mxu0
        %2304 = vdwg.mxu0
        %v2305 = vadd.f32 %v2130, %v2302
        %v2306 = vld [vmem:[%s13] sm:$0x1]
        %v2307 = vld [vmem:[%s14] sm:$0x1]
        %v2308 = vsel %vm597, %v2305, 0.0
        %2309 = vadd.xlane.f32.xlu0 %v2308
        %v2310 = vpop.xlane.xlu0 %2309
        %v2311 = vmul.f32 %v2310, %v2106
        %v2312 = vsub.f32 %v2305, %v2311
        %v2313 = vmul.f32 %v2312, %v2312
        %v2314 = vsel %vm597, %v2313, 0.0
        %2315 = vadd.xlane.f32.xlu0 %v2314
        %v2316 = vpop.xlane.xlu0 %2315
        %v2317 = vmul.f32 %v2316, %v2106
        %v2318 = vadd.f32 %v2317, 1e-05
        %v2319 = vrsqrt.pop %v2318
        %v2320 = vmul.f32 %v2312, %v2319
        %v2322 = vlaneseq
        %v2323 = vshrl.u32 %v2322, 7
        %v2324 = vsub.s32 0, %v2323
        %v2325 = vrot.slane %v2306, %v2324
        %v2327 = vmul.f32 %v2320, %v2325
        %v2329 = vlaneseq
        %v2330 = vshrl.u32 %v2329, 7
        %v2331 = vsub.s32 0, %v2330
        %v2332 = vrot.slane %v2307, %v2331
        %v2334 = vadd.f32 %v2327, %v2332
        %2335 = vst.msk [vmem:[%s588] sm:$0xff] %vm597, %v2334
        %s2336 = sand.u32 %s389, 1
        %s2337 = scalar_lea.sflag [#allocation4], %s2336
        %s2338 = sand.u32 %s389, 1
        %s2339 = smul.addr %s2338, 8
        %s2340 = scalar_lea.vmem [#allocation8], %s2339
        // Predicated region
        $region93: #{tpu_custom_call.1} parent=79 // pred_check
          %p2341 = pneg %p399
        $region94: #{tpu_custom_call.1} parent=79 // pred_check_branch
          %2343 = sbr.rel (%p2341) target = $region96
        $region95: #{tpu_custom_call.1} parent=79 // pred_region
          %s2345 = ssub.s32 128, 128
          %2346 = vsyncadd %s2337, %s2345
          %s2347 = sadd.s32 %s40, %s39
          %s2348 = smul.addr %s2347, 128
          %s2349 = scalar_lea.hbm %s15, %s2348
          %s2351 = sshll.u32 %s2340, 4
          %s2352 = int_to_ptr.vmem [resolvable:$true] %s2351
          %2354 = dma.vmem_to_hbm [thread:$0]  %s2352, 128, %s2349, %s2337
        $region96: #{tpu_custom_call.1} parent=79 // pred_fallthru
          _
      $region80: #{tpu_custom_call.1} parent=5 // pred_fallthru
        _
      %p2355 = scmp.le.s32.totalorder 2, %s30
      // Predicated region
      $region97: #{tpu_custom_call.1} parent=5 // pred_check
        %p2356 = pneg %p2355
      $region98: #{tpu_custom_call.1} parent=5 // pred_check_branch
        %2358 = sbr.rel (%p2356) target = $region100
      $region99: #{tpu_custom_call.1} parent=5 // pred_region
        %s2359 = ssub.s32 %s30, 2
        // Predicated region
        $region101: #{tpu_custom_call.1} parent=99 // pred_check
          %p2360 = pneg %p405
        $region102: #{tpu_custom_call.1} parent=99 // pred_check_branch
          %2362 = sbr.rel (%p2360) target = $region104
        $region103: #{tpu_custom_call.1} parent=99 // pred_region
          %s2363 = sand.u32 %s390, 1
          %s2364 = scalar_lea.sflag [#allocation4], %s2363
          %s2365 = sand.u32 %s390, 1
          %s2366 = smul.addr %s2365, 8
          %s2367 = scalar_lea.vmem [#allocation8], %s2366
          %2368 = dma.done %s2364, 128
        $region104: #{tpu_custom_call.1} parent=99 // pred_fallthru
          _
      $region100: #{tpu_custom_call.1} parent=5 // pred_fallthru
        _
    $region6: #{tpu_custom_call.1} parent=1 // loop_footer
      %s34 = sadd.s32 1, %s30
    $region7: #{tpu_custom_call.1} parent=1 // loop_footer_branch
      %29 = sbr.rel target = $region3
    $region8: #{tpu_custom_call.1} parent=1 // loop_exit
      _
    %2369 = vsyncpa [#allocation3], 1
    %s2370 = scalar_lea.sflag [#allocation3], 1
    %2371 = vsyncpa %s2370, 1
    %2372 = vsyncpa [#allocation6], 1
    %s2373 = scalar_lea.sflag [#allocation6], 1
    %2374 = vsyncpa %s2373, 1
    %2375 = vsyncpa [#allocation4], 1
    %s2376 = scalar_lea.sflag [#allocation4], 1
    %2377 = vsyncpa %s2376, 1

</llo_original>
